<compile_context>
chip_gen: v7x
topology: tpu7x:2x2x1
jax: 0.10.0
libtpu: 0.0.40
codegen_flags: <defaults>
</compile_context>

<pallas_src>
import functools

import jax
import jax.numpy as jnp
from jax.experimental import pallas as pl
from jax.experimental.pallas import tpu as pltpu


_ROW_TILE = 512                      # target rows per grid step (512-2048 sweet spot)
_VMEM_LIMIT = 32 * 1024 * 1024       # explicit scoped-VMEM budget, safe on v5e/v6e/v7x


def _round_up(x, m):
    return ((x + m - 1) // m) * m


def _pick_divisor_tile(n, target):
    t = min(n, target)
    while t > 1 and n % t != 0:
        t -= 1
    return max(t, 1)


# ----------------------------------------------------------------------------
# Pallas kernels
# ----------------------------------------------------------------------------
def _mm_bn_act_kernel(*refs, relu, has_residual):
    """One grid step of conv-as-GEMM.

    (TM, K) @ (K, Cout) on the MXU with f32 accumulation, folded-BN affine,
    optional fused residual add, optional ReLU, bf16 store.
    """
    if has_residual:
        x_ref, w_ref, s_ref, b_ref, r_ref, o_ref = refs
    else:
        x_ref, w_ref, s_ref, b_ref, o_ref = refs
        r_ref = None

    acc = jnp.dot(x_ref[...], w_ref[...], preferred_element_type=jnp.float32)
    out = acc * s_ref[...] + b_ref[...]
    if r_ref is not None:
        out = out + r_ref[...].astype(jnp.float32)
    if relu:
        out = jnp.maximum(out, 0.0)
    o_ref[...] = out.astype(o_ref.dtype)


def _maxpool_kernel(x_ref, o_ref, *, C):
    """2x2 / stride-2 max pool.

    x_ref: (TB, 2, W2, 2*C) -- row pair on a leading dim, column pair folded
           into the lane axis (both produced by free row-major reshapes).
    o_ref: (TB, W2, C)
    """
    x = x_ref[...]
    m = jnp.maximum(x[:, 0], x[:, 1])                    # vertical max
    o_ref[...] = jnp.maximum(m[..., :C], m[..., C:])     # horizontal max


# ----------------------------------------------------------------------------
# Pallas wrappers (glue: padding / im2col / pallas_call plumbing)
# ----------------------------------------------------------------------------
def conv_block(x, p, *, ksize, padding=0, dilation=1, stride=1, relu=True,
               residual=None):
    """conv(kxk, no bias) -> BatchNorm (folded) -> (+residual) -> optional ReLU.

    NHWC in / NHWC out, bf16 activations, f32 accumulation in-kernel.
    """
    w, scale, bias = p                       # w: (K, Cout) bf16; scale/bias: (1, Cout) f32
    N, H, W, Cin = x.shape
    Cout = w.shape[-1]
    Ho = (H + 2 * padding - dilation * (ksize - 1) - 1) // stride + 1
    Wo = (W + 2 * padding - dilation * (ksize - 1) - 1) // stride + 1
    K = ksize * ksize * Cin

    # im2col in glue (pure data movement); stride-2 outputs are formed directly.
    if ksize == 1 and stride == 1 and padding == 0:
        cols = x.reshape(N * H * W, Cin)
    else:
        xp = jnp.pad(x, ((0, 0), (padding, padding), (padding, padding), (0, 0)))
        taps = []
        for kh in range(ksize):
            for kw in range(ksize):
                h0 = kh * dilation
                w0 = kw * dilation
                taps.append(
                    xp[:, h0:h0 + stride * (Ho - 1) + 1:stride,
                          w0:w0 + stride * (Wo - 1) + 1:stride, :])
        cols = jnp.stack(taps, axis=3).reshape(N * Ho * Wo, K)

    rows = N * Ho * Wo
    tm = min(_ROW_TILE, _round_up(rows, 16))
    rows_p = _round_up(rows, tm)
    if rows_p != rows:
        cols = jnp.pad(cols, ((0, rows_p - rows), (0, 0)))

    has_residual = residual is not None
    operands = [cols, w, scale, bias]
    in_specs = [
        pl.BlockSpec((tm, K), lambda i: (i, 0)),
        pl.BlockSpec((K, Cout), lambda i: (0, 0)),
        pl.BlockSpec((1, Cout), lambda i: (0, 0)),
        pl.BlockSpec((1, Cout), lambda i: (0, 0)),
    ]
    if has_residual:
        res = residual.reshape(rows, Cout)
        if rows_p != rows:
            res = jnp.pad(res, ((0, rows_p - rows), (0, 0)))
        operands.append(res)
        in_specs.append(pl.BlockSpec((tm, Cout), lambda i: (i, 0)))

    kern = functools.partial(_mm_bn_act_kernel, relu=relu,
                             has_residual=has_residual)
    out = pl.pallas_call(
        kern,
        grid=(rows_p // tm,),
        out_shape=jax.ShapeDtypeStruct((rows_p, Cout), jnp.bfloat16),
        in_specs=in_specs,
        out_specs=pl.BlockSpec((tm, Cout), lambda i: (i, 0)),
        compiler_params=pltpu.CompilerParams(
            dimension_semantics=("parallel",),
            vmem_limit_bytes=_VMEM_LIMIT),
    )(*operands)

    return out[:rows].reshape(N, Ho, Wo, Cout)


def maxpool2x2(x):
    N, H, W, C = x.shape
    H2, W2 = H // 2, W // 2
    x = x[:, :H2 * 2, :W2 * 2, :]
    # Row-major-preserving reshape: (N,H,W,C) -> (N*H2, 2, W2, 2*C).  Free.
    xr = x.reshape(N * H2, 2, W2, 2 * C)
    tb = _pick_divisor_tile(N * H2, 256)
    out = pl.pallas_call(
        functools.partial(_maxpool_kernel, C=C),
        grid=(N * H2 // tb,),
        out_shape=jax.ShapeDtypeStruct((N * H2, W2, C), x.dtype),
        in_specs=[pl.BlockSpec((tb, 2, W2, 2 * C), lambda i: (i, 0, 0, 0))],
        out_specs=pl.BlockSpec((tb, W2, C), lambda i: (i, 0, 0)),
        compiler_params=pltpu.CompilerParams(
            dimension_semantics=("parallel",),
            vmem_limit_bytes=_VMEM_LIMIT),
    )(xr)
    return out.reshape(N, H2, W2, C)


# ----------------------------------------------------------------------------
# Model: IbpBackbone forward
# ----------------------------------------------------------------------------
def res_unit(x, p, *, resize):
    """IbpResUnit (stride=1): bottleneck body + identity, add+ReLU fused into c3."""
    if resize:
        identity = conv_block(x, p["id"], ksize=1, relu=False)
    else:
        identity = x
    y = conv_block(x, p["c1"], ksize=1, relu=True)
    y = conv_block(y, p["c2"], ksize=3, padding=1, relu=True)
    # conv3 has no activation of its own; ReLU is applied after the residual add.
    return conv_block(y, p["c3"], ksize=1, relu=True, residual=identity)


def ibp_backbone_forward(x_nchw, params):
    x = jnp.transpose(x_nchw, (0, 2, 3, 1)).astype(jnp.bfloat16)   # -> NHWC bf16
    # conv1: 7x7, stride 2, pad 3, BN + ReLU (stride-2 computed directly)
    x = conv_block(x, params["conv1"], ksize=7, padding=3, stride=2, relu=True)
    # res1: mid1 -> mid2 (resized identity)
    x = res_unit(x, params["res1"], resize=True)
    # maxpool 2x2 stride 2
    x = maxpool2x2(x)
    # res2: mid2 -> mid2
    x = res_unit(x, params["res2"], resize=False)
    # dilation branch: 6 dilated 3x3 conv blocks
    y = x
    for blk, d in zip(params["dil"], (3, 3, 4, 4, 5, 5)):
        y = conv_block(y, blk, ksize=3, padding=d, dilation=d, relu=True)
    out = jnp.concatenate([x, y], axis=-1)          # channel concat
    return jnp.transpose(out, (0, 3, 1, 2)).astype(jnp.float32)    # -> NCHW


# ----------------------------------------------------------------------------
# Deterministic parameter initialization (conv weight + folded BatchNorm)
# ----------------------------------------------------------------------------
def init_conv_bn(key, ksize, cin, cout):
    k1, k2, k3, k4, k5 = jax.random.split(key, 5)
    fan_in = ksize * ksize * cin
    w = jax.random.normal(k1, (ksize * ksize * cin, cout), jnp.float32)
    w = (w / jnp.sqrt(jnp.float32(fan_in))).astype(jnp.bfloat16)
    gamma = 1.0 + 0.1 * jax.random.normal(k2, (cout,), jnp.float32)
    beta = 0.1 * jax.random.normal(k3, (cout,), jnp.float32)
    mean = 0.1 * jax.random.normal(k4, (cout,), jnp.float32)
    var = 1.0 + 0.1 * jax.random.uniform(k5, (cout,), jnp.float32)
    scale = gamma / jnp.sqrt(var + 1e-5)
    bias = beta - mean * scale
    return (w, scale.reshape(1, cout), bias.reshape(1, cout))


def init_params(key, in_channels, out_channels):
    mid1 = out_channels // 4
    mid2 = out_channels // 2
    ks = iter(jax.random.split(key, 16))
    return {
        "conv1": init_conv_bn(next(ks), 7, in_channels, mid1),
        "res1": {
            "c1": init_conv_bn(next(ks), 1, mid1, mid2 // 2),
            "c2": init_conv_bn(next(ks), 3, mid2 // 2, mid2 // 2),
            "c3": init_conv_bn(next(ks), 1, mid2 // 2, mid2),
            "id": init_conv_bn(next(ks), 1, mid1, mid2),
        },
        "res2": {
            "c1": init_conv_bn(next(ks), 1, mid2, mid2 // 2),
            "c2": init_conv_bn(next(ks), 3, mid2 // 2, mid2 // 2),
            "c3": init_conv_bn(next(ks), 1, mid2 // 2, mid2),
        },
        "dil": [init_conv_bn(next(ks), 3, mid2, mid2) for _ in range(6)],
    }


# ----------------------------------------------------------------------------
if __name__ == "__main__":
    key = jax.random.PRNGKey(0)
    kx, kp = jax.random.split(key)

    N, Cin, H, W = 2, 4, 16, 16
    out_channels = 32            # -> mid1 = 8, mid2 = 16

    x = jax.random.normal(kx, (N, Cin, H, W), jnp.float32)    # NCHW like PyTorch
    params = init_params(kp, Cin, out_channels)

    fwd = jax.jit(ibp_backbone_forward)
    out = jax.block_until_ready(fwd(x, params))

    assert out.shape == (N, out_channels, H // 4, W // 4), out.shape
    assert bool(jnp.all(jnp.isfinite(out)))
    print("KERNEL_OK")
</pallas_src>

<mosaic_0001>
module attributes {stable_mosaic.version = 11 : i64} {
  func.func @_mm_bn_act_kernel(%arg0: i32, %arg1: memref<128x196xbf16, #tpu.memory_space<vmem>>, %arg2: memref<196x8xbf16, #tpu.memory_space<vmem>>, %arg3: memref<1x8xf32, #tpu.memory_space<vmem>>, %arg4: memref<1x8xf32, #tpu.memory_space<vmem>>, %arg5: memref<128x8xbf16, #tpu.memory_space<vmem>>) attributes {dimension_semantics = [#tpu.dimension_semantics<parallel>], iteration_bounds = array<i64: 1>, scalar_prefetch = 0 : i64, scratch_operands = 0 : i64, tpu.core_type = #tpu.core_type<tc>, window_params = [{transform_indices = @transform_0, window_bounds = array<i64: 128, 196>}, {pipeline_mode = #tpu.pipeline_mode<synchronous>, transform_indices = @transform_1, window_bounds = array<i64: 196, 8>}, {pipeline_mode = #tpu.pipeline_mode<synchronous>, transform_indices = @transform_2, window_bounds = array<i64: 1, 8>}, {pipeline_mode = #tpu.pipeline_mode<synchronous>, transform_indices = @transform_3, window_bounds = array<i64: 1, 8>}, {transform_indices = @transform_4, window_bounds = array<i64: 128, 8>}]} {
    %c0 = arith.constant 0 : index
    %c0_0 = arith.constant 0 : index
    %0 = vector.load %arg1[%c0, %c0_0] : memref<128x196xbf16, #tpu.memory_space<vmem>>, vector<128x196xbf16>
    %c0_1 = arith.constant 0 : index
    %c0_2 = arith.constant 0 : index
    %1 = vector.load %arg2[%c0_1, %c0_2] : memref<196x8xbf16, #tpu.memory_space<vmem>>, vector<196x8xbf16>
    %cst = arith.constant dense<0.000000e+00> : vector<128x8xf32>
    %2 = tpu.matmul %0, %1, %cst {dimension_numbers = #tpu.dot_dimension_numbers<[1], [0], [0], [1], [0, 0, 1, 1], [], []>} : vector<128x196xbf16>, vector<196x8xbf16>, vector<128x8xf32> -> vector<128x8xf32>
    %c0_3 = arith.constant 0 : index
    %c0_4 = arith.constant 0 : index
    %3 = vector.load %arg3[%c0_3, %c0_4] : memref<1x8xf32, #tpu.memory_space<vmem>>, vector<1x8xf32>
    %4 = vector.broadcast %3 : vector<1x8xf32> to vector<128x8xf32>
    %5 = arith.mulf %2, %4 : vector<128x8xf32>
    %c0_5 = arith.constant 0 : index
    %c0_6 = arith.constant 0 : index
    %6 = vector.load %arg4[%c0_5, %c0_6] : memref<1x8xf32, #tpu.memory_space<vmem>>, vector<1x8xf32>
    %7 = vector.broadcast %6 : vector<1x8xf32> to vector<128x8xf32>
    %8 = arith.addf %5, %7 : vector<128x8xf32>
    %cst_7 = arith.constant 0.000000e+00 : f32
    %9 = vector.broadcast %cst_7 : f32 to vector<128x8xf32>
    %10 = arith.maximumf %8, %9 : vector<128x8xf32>
    %11 = arith.truncf %10 : vector<128x8xf32> to vector<128x8xbf16>
    %c0_8 = arith.constant 0 : index
    %c0_9 = arith.constant 0 : index
    %12 = vector.load %arg5[%c0_8, %c0_9] : memref<128x8xbf16, #tpu.memory_space<vmem>>, vector<128x8xbf16>
    tpu.vector_store %arg5[%c0_8, %c0_9], %11 {strides = array<i32>} : memref<128x8xbf16, #tpu.memory_space<vmem>>, vector<128x8xbf16>,
    return
  }
  func.func @transform_0(%arg0: i32) -> (i32, i32) {
    %c0_i32 = arith.constant 0 : i32
    %c0_i32_0 = arith.constant 0 : i32
    return %arg0, %c0_i32 : i32, i32
  }
  func.func @transform_1(%arg0: i32) -> (i32, i32) {
    %c0_i32 = arith.constant 0 : i32
    %c0_i32_0 = arith.constant 0 : i32
    %c0_i32_1 = arith.constant 0 : i32
    return %c0_i32, %c0_i32_0 : i32, i32
  }
  func.func @transform_2(%arg0: i32) -> (i32, i32) {
    %c0_i32 = arith.constant 0 : i32
    %c0_i32_0 = arith.constant 0 : i32
    %c0_i32_1 = arith.constant 0 : i32
    return %c0_i32, %c0_i32_0 : i32, i32
  }
  func.func @transform_3(%arg0: i32) -> (i32, i32) {
    %c0_i32 = arith.constant 0 : i32
    %c0_i32_0 = arith.constant 0 : i32
    %c0_i32_1 = arith.constant 0 : i32
    return %c0_i32, %c0_i32_0 : i32, i32
  }
  func.func @transform_4(%arg0: i32) -> (i32, i32) {
    %c0_i32 = arith.constant 0 : i32
    %c0_i32_0 = arith.constant 0 : i32
    return %arg0, %c0_i32 : i32, i32
  }
}

module attributes {stable_mosaic.version = 11 : i64} {
  func.func @_mm_bn_act_kernel(%arg0: i32, %arg1: memref<128x8xbf16, #tpu.memory_space<vmem>>, %arg2: memref<8x8xbf16, #tpu.memory_space<vmem>>, %arg3: memref<1x8xf32, #tpu.memory_space<vmem>>, %arg4: memref<1x8xf32, #tpu.memory_space<vmem>>, %arg5: memref<128x8xbf16, #tpu.memory_space<vmem>>) attributes {dimension_semantics = [#tpu.dimension_semantics<parallel>], iteration_bounds = array<i64: 1>, scalar_prefetch = 0 : i64, scratch_operands = 0 : i64, tpu.core_type = #tpu.core_type<tc>, window_params = [{transform_indices = @transform_0, window_bounds = array<i64: 128, 8>}, {pipeline_mode = #tpu.pipeline_mode<synchronous>, transform_indices = @transform_1, window_bounds = array<i64: 8, 8>}, {pipeline_mode = #tpu.pipeline_mode<synchronous>, transform_indices = @transform_2, window_bounds = array<i64: 1, 8>}, {pipeline_mode = #tpu.pipeline_mode<synchronous>, transform_indices = @transform_3, window_bounds = array<i64: 1, 8>}, {transform_indices = @transform_4, window_bounds = array<i64: 128, 8>}]} {
    %c0 = arith.constant 0 : index
    %c0_0 = arith.constant 0 : index
    %0 = vector.load %arg1[%c0, %c0_0] : memref<128x8xbf16, #tpu.memory_space<vmem>>, vector<128x8xbf16>
    %c0_1 = arith.constant 0 : index
    %c0_2 = arith.constant 0 : index
    %1 = vector.load %arg2[%c0_1, %c0_2] : memref<8x8xbf16, #tpu.memory_space<vmem>>, vector<8x8xbf16>
    %cst = arith.constant dense<0.000000e+00> : vector<128x8xf32>
    %2 = tpu.matmul %0, %1, %cst {dimension_numbers = #tpu.dot_dimension_numbers<[1], [0], [0], [1], [0, 0, 1, 1], [], []>} : vector<128x8xbf16>, vector<8x8xbf16>, vector<128x8xf32> -> vector<128x8xf32>
    %c0_3 = arith.constant 0 : index
    %c0_4 = arith.constant 0 : index
    %3 = vector.load %arg3[%c0_3, %c0_4] : memref<1x8xf32, #tpu.memory_space<vmem>>, vector<1x8xf32>
    %4 = vector.broadcast %3 : vector<1x8xf32> to vector<128x8xf32>
    %5 = arith.mulf %2, %4 : vector<128x8xf32>
    %c0_5 = arith.constant 0 : index
    %c0_6 = arith.constant 0 : index
    %6 = vector.load %arg4[%c0_5, %c0_6] : memref<1x8xf32, #tpu.memory_space<vmem>>, vector<1x8xf32>
    %7 = vector.broadcast %6 : vector<1x8xf32> to vector<128x8xf32>
    %8 = arith.addf %5, %7 : vector<128x8xf32>
    %cst_7 = arith.constant 0.000000e+00 : f32
    %9 = vector.broadcast %cst_7 : f32 to vector<128x8xf32>
    %10 = arith.maximumf %8, %9 : vector<128x8xf32>
    %11 = arith.truncf %10 : vector<128x8xf32> to vector<128x8xbf16>
    %c0_8 = arith.constant 0 : index
    %c0_9 = arith.constant 0 : index
    %12 = vector.load %arg5[%c0_8, %c0_9] : memref<128x8xbf16, #tpu.memory_space<vmem>>, vector<128x8xbf16>
    tpu.vector_store %arg5[%c0_8, %c0_9], %11 {strides = array<i32>} : memref<128x8xbf16, #tpu.memory_space<vmem>>, vector<128x8xbf16>,
    return
  }
  func.func @transform_0(%arg0: i32) -> (i32, i32) {
    %c0_i32 = arith.constant 0 : i32
    %c0_i32_0 = arith.constant 0 : i32
    return %arg0, %c0_i32 : i32, i32
  }
  func.func @transform_1(%arg0: i32) -> (i32, i32) {
    %c0_i32 = arith.constant 0 : i32
    %c0_i32_0 = arith.constant 0 : i32
    %c0_i32_1 = arith.constant 0 : i32
    return %c0_i32, %c0_i32_0 : i32, i32
  }
  func.func @transform_2(%arg0: i32) -> (i32, i32) {
    %c0_i32 = arith.constant 0 : i32
    %c0_i32_0 = arith.constant 0 : i32
    %c0_i32_1 = arith.constant 0 : i32
    return %c0_i32, %c0_i32_0 : i32, i32
  }
  func.func @transform_3(%arg0: i32) -> (i32, i32) {
    %c0_i32 = arith.constant 0 : i32
    %c0_i32_0 = arith.constant 0 : i32
    %c0_i32_1 = arith.constant 0 : i32
    return %c0_i32, %c0_i32_0 : i32, i32
  }
  func.func @transform_4(%arg0: i32) -> (i32, i32) {
    %c0_i32 = arith.constant 0 : i32
    %c0_i32_0 = arith.constant 0 : i32
    return %arg0, %c0_i32 : i32, i32
  }
}

module attributes {stable_mosaic.version = 11 : i64} {
  func.func @_mm_bn_act_kernel(%arg0: i32, %arg1: memref<128x72xbf16, #tpu.memory_space<vmem>>, %arg2: memref<72x8xbf16, #tpu.memory_space<vmem>>, %arg3: memref<1x8xf32, #tpu.memory_space<vmem>>, %arg4: memref<1x8xf32, #tpu.memory_space<vmem>>, %arg5: memref<128x8xbf16, #tpu.memory_space<vmem>>) attributes {dimension_semantics = [#tpu.dimension_semantics<parallel>], iteration_bounds = array<i64: 1>, scalar_prefetch = 0 : i64, scratch_operands = 0 : i64, tpu.core_type = #tpu.core_type<tc>, window_params = [{transform_indices = @transform_0, window_bounds = array<i64: 128, 72>}, {pipeline_mode = #tpu.pipeline_mode<synchronous>, transform_indices = @transform_1, window_bounds = array<i64: 72, 8>}, {pipeline_mode = #tpu.pipeline_mode<synchronous>, transform_indices = @transform_2, window_bounds = array<i64: 1, 8>}, {pipeline_mode = #tpu.pipeline_mode<synchronous>, transform_indices = @transform_3, window_bounds = array<i64: 1, 8>}, {transform_indices = @transform_4, window_bounds = array<i64: 128, 8>}]} {
    %c0 = arith.constant 0 : index
    %c0_0 = arith.constant 0 : index
    %0 = vector.load %arg1[%c0, %c0_0] : memref<128x72xbf16, #tpu.memory_space<vmem>>, vector<128x72xbf16>
    %c0_1 = arith.constant 0 : index
    %c0_2 = arith.constant 0 : index
    %1 = vector.load %arg2[%c0_1, %c0_2] : memref<72x8xbf16, #tpu.memory_space<vmem>>, vector<72x8xbf16>
    %cst = arith.constant dense<0.000000e+00> : vector<128x8xf32>
    %2 = tpu.matmul %0, %1, %cst {dimension_numbers = #tpu.dot_dimension_numbers<[1], [0], [0], [1], [0, 0, 1, 1], [], []>} : vector<128x72xbf16>, vector<72x8xbf16>, vector<128x8xf32> -> vector<128x8xf32>
    %c0_3 = arith.constant 0 : index
    %c0_4 = arith.constant 0 : index
    %3 = vector.load %arg3[%c0_3, %c0_4] : memref<1x8xf32, #tpu.memory_space<vmem>>, vector<1x8xf32>
    %4 = vector.broadcast %3 : vector<1x8xf32> to vector<128x8xf32>
    %5 = arith.mulf %2, %4 : vector<128x8xf32>
    %c0_5 = arith.constant 0 : index
    %c0_6 = arith.constant 0 : index
    %6 = vector.load %arg4[%c0_5, %c0_6] : memref<1x8xf32, #tpu.memory_space<vmem>>, vector<1x8xf32>
    %7 = vector.broadcast %6 : vector<1x8xf32> to vector<128x8xf32>
    %8 = arith.addf %5, %7 : vector<128x8xf32>
    %cst_7 = arith.constant 0.000000e+00 : f32
    %9 = vector.broadcast %cst_7 : f32 to vector<128x8xf32>
    %10 = arith.maximumf %8, %9 : vector<128x8xf32>
    %11 = arith.truncf %10 : vector<128x8xf32> to vector<128x8xbf16>
    %c0_8 = arith.constant 0 : index
    %c0_9 = arith.constant 0 : index
    %12 = vector.load %arg5[%c0_8, %c0_9] : memref<128x8xbf16, #tpu.memory_space<vmem>>, vector<128x8xbf16>
    tpu.vector_store %arg5[%c0_8, %c0_9], %11 {strides = array<i32>} : memref<128x8xbf16, #tpu.memory_space<vmem>>, vector<128x8xbf16>,
    return
  }
  func.func @transform_0(%arg0: i32) -> (i32, i32) {
    %c0_i32 = arith.constant 0 : i32
    %c0_i32_0 = arith.constant 0 : i32
    return %arg0, %c0_i32 : i32, i32
  }
  func.func @transform_1(%arg0: i32) -> (i32, i32) {
    %c0_i32 = arith.constant 0 : i32
    %c0_i32_0 = arith.constant 0 : i32
    %c0_i32_1 = arith.constant 0 : i32
    return %c0_i32, %c0_i32_0 : i32, i32
  }
  func.func @transform_2(%arg0: i32) -> (i32, i32) {
    %c0_i32 = arith.constant 0 : i32
    %c0_i32_0 = arith.constant 0 : i32
    %c0_i32_1 = arith.constant 0 : i32
    return %c0_i32, %c0_i32_0 : i32, i32
  }
  func.func @transform_3(%arg0: i32) -> (i32, i32) {
    %c0_i32 = arith.constant 0 : i32
    %c0_i32_0 = arith.constant 0 : i32
    %c0_i32_1 = arith.constant 0 : i32
    return %c0_i32, %c0_i32_0 : i32, i32
  }
  func.func @transform_4(%arg0: i32) -> (i32, i32) {
    %c0_i32 = arith.constant 0 : i32
    %c0_i32_0 = arith.constant 0 : i32
    return %arg0, %c0_i32 : i32, i32
  }
}

module attributes {stable_mosaic.version = 11 : i64} {
  func.func @_mm_bn_act_kernel(%arg0: i32, %arg1: memref<128x8xbf16, #tpu.memory_space<vmem>>, %arg2: memref<8x16xbf16, #tpu.memory_space<vmem>>, %arg3: memref<1x16xf32, #tpu.memory_space<vmem>>, %arg4: memref<1x16xf32, #tpu.memory_space<vmem>>, %arg5: memref<128x16xbf16, #tpu.memory_space<vmem>>) attributes {dimension_semantics = [#tpu.dimension_semantics<parallel>], iteration_bounds = array<i64: 1>, scalar_prefetch = 0 : i64, scratch_operands = 0 : i64, tpu.core_type = #tpu.core_type<tc>, window_params = [{transform_indices = @transform_0, window_bounds = array<i64: 128, 8>}, {pipeline_mode = #tpu.pipeline_mode<synchronous>, transform_indices = @transform_1, window_bounds = array<i64: 8, 16>}, {pipeline_mode = #tpu.pipeline_mode<synchronous>, transform_indices = @transform_2, window_bounds = array<i64: 1, 16>}, {pipeline_mode = #tpu.pipeline_mode<synchronous>, transform_indices = @transform_3, window_bounds = array<i64: 1, 16>}, {transform_indices = @transform_4, window_bounds = array<i64: 128, 16>}]} {
    %c0 = arith.constant 0 : index
    %c0_0 = arith.constant 0 : index
    %0 = vector.load %arg1[%c0, %c0_0] : memref<128x8xbf16, #tpu.memory_space<vmem>>, vector<128x8xbf16>
    %c0_1 = arith.constant 0 : index
    %c0_2 = arith.constant 0 : index
    %1 = vector.load %arg2[%c0_1, %c0_2] : memref<8x16xbf16, #tpu.memory_space<vmem>>, vector<8x16xbf16>
    %cst = arith.constant dense<0.000000e+00> : vector<128x16xf32>
    %2 = tpu.matmul %0, %1, %cst {dimension_numbers = #tpu.dot_dimension_numbers<[1], [0], [0], [1], [0, 0, 1, 1], [], []>} : vector<128x8xbf16>, vector<8x16xbf16>, vector<128x16xf32> -> vector<128x16xf32>
    %c0_3 = arith.constant 0 : index
    %c0_4 = arith.constant 0 : index
    %3 = vector.load %arg3[%c0_3, %c0_4] : memref<1x16xf32, #tpu.memory_space<vmem>>, vector<1x16xf32>
    %4 = vector.broadcast %3 : vector<1x16xf32> to vector<128x16xf32>
    %5 = arith.mulf %2, %4 : vector<128x16xf32>
    %c0_5 = arith.constant 0 : index
    %c0_6 = arith.constant 0 : index
    %6 = vector.load %arg4[%c0_5, %c0_6] : memref<1x16xf32, #tpu.memory_space<vmem>>, vector<1x16xf32>
    %7 = vector.broadcast %6 : vector<1x16xf32> to vector<128x16xf32>
    %8 = arith.addf %5, %7 : vector<128x16xf32>
    %9 = arith.truncf %8 : vector<128x16xf32> to vector<128x16xbf16>
    %c0_7 = arith.constant 0 : index
    %c0_8 = arith.constant 0 : index
    %10 = vector.load %arg5[%c0_7, %c0_8] : memref<128x16xbf16, #tpu.memory_space<vmem>>, vector<128x16xbf16>
    tpu.vector_store %arg5[%c0_7, %c0_8], %9 {strides = array<i32>} : memref<128x16xbf16, #tpu.memory_space<vmem>>, vector<128x16xbf16>,
    return
  }
  func.func @transform_0(%arg0: i32) -> (i32, i32) {
    %c0_i32 = arith.constant 0 : i32
    %c0_i32_0 = arith.constant 0 : i32
    return %arg0, %c0_i32 : i32, i32
  }
  func.func @transform_1(%arg0: i32) -> (i32, i32) {
    %c0_i32 = arith.constant 0 : i32
    %c0_i32_0 = arith.constant 0 : i32
    %c0_i32_1 = arith.constant 0 : i32
    return %c0_i32, %c0_i32_0 : i32, i32
  }
  func.func @transform_2(%arg0: i32) -> (i32, i32) {
    %c0_i32 = arith.constant 0 : i32
    %c0_i32_0 = arith.constant 0 : i32
    %c0_i32_1 = arith.constant 0 : i32
    return %c0_i32, %c0_i32_0 : i32, i32
  }
  func.func @transform_3(%arg0: i32) -> (i32, i32) {
    %c0_i32 = arith.constant 0 : i32
    %c0_i32_0 = arith.constant 0 : i32
    %c0_i32_1 = arith.constant 0 : i32
    return %c0_i32, %c0_i32_0 : i32, i32
  }
  func.func @transform_4(%arg0: i32) -> (i32, i32) {
    %c0_i32 = arith.constant 0 : i32
    %c0_i32_0 = arith.constant 0 : i32
    return %arg0, %c0_i32 : i32, i32
  }
}

module attributes {stable_mosaic.version = 11 : i64} {
  func.func @_mm_bn_act_kernel(%arg0: i32, %arg1: memref<128x8xbf16, #tpu.memory_space<vmem>>, %arg2: memref<8x16xbf16, #tpu.memory_space<vmem>>, %arg3: memref<1x16xf32, #tpu.memory_space<vmem>>, %arg4: memref<1x16xf32, #tpu.memory_space<vmem>>, %arg5: memref<128x16xbf16, #tpu.memory_space<vmem>>, %arg6: memref<128x16xbf16, #tpu.memory_space<vmem>>) attributes {dimension_semantics = [#tpu.dimension_semantics<parallel>], iteration_bounds = array<i64: 1>, scalar_prefetch = 0 : i64, scratch_operands = 0 : i64, tpu.core_type = #tpu.core_type<tc>, window_params = [{transform_indices = @transform_0, window_bounds = array<i64: 128, 8>}, {pipeline_mode = #tpu.pipeline_mode<synchronous>, transform_indices = @transform_1, window_bounds = array<i64: 8, 16>}, {pipeline_mode = #tpu.pipeline_mode<synchronous>, transform_indices = @transform_2, window_bounds = array<i64: 1, 16>}, {pipeline_mode = #tpu.pipeline_mode<synchronous>, transform_indices = @transform_3, window_bounds = array<i64: 1, 16>}, {transform_indices = @transform_4, window_bounds = array<i64: 128, 16>}, {transform_indices = @transform_5, window_bounds = array<i64: 128, 16>}]} {
    %c0 = arith.constant 0 : index
    %c0_0 = arith.constant 0 : index
    %0 = vector.load %arg1[%c0, %c0_0] : memref<128x8xbf16, #tpu.memory_space<vmem>>, vector<128x8xbf16>
    %c0_1 = arith.constant 0 : index
    %c0_2 = arith.constant 0 : index
    %1 = vector.load %arg2[%c0_1, %c0_2] : memref<8x16xbf16, #tpu.memory_space<vmem>>, vector<8x16xbf16>
    %cst = arith.constant dense<0.000000e+00> : vector<128x16xf32>
    %2 = tpu.matmul %0, %1, %cst {dimension_numbers = #tpu.dot_dimension_numbers<[1], [0], [0], [1], [0, 0, 1, 1], [], []>} : vector<128x8xbf16>, vector<8x16xbf16>, vector<128x16xf32> -> vector<128x16xf32>
    %c0_3 = arith.constant 0 : index
    %c0_4 = arith.constant 0 : index
    %3 = vector.load %arg3[%c0_3, %c0_4] : memref<1x16xf32, #tpu.memory_space<vmem>>, vector<1x16xf32>
    %4 = vector.broadcast %3 : vector<1x16xf32> to vector<128x16xf32>
    %5 = arith.mulf %2, %4 : vector<128x16xf32>
    %c0_5 = arith.constant 0 : index
    %c0_6 = arith.constant 0 : index
    %6 = vector.load %arg4[%c0_5, %c0_6] : memref<1x16xf32, #tpu.memory_space<vmem>>, vector<1x16xf32>
    %7 = vector.broadcast %6 : vector<1x16xf32> to vector<128x16xf32>
    %8 = arith.addf %5, %7 : vector<128x16xf32>
    %c0_7 = arith.constant 0 : index
    %c0_8 = arith.constant 0 : index
    %9 = vector.load %arg5[%c0_7, %c0_8] : memref<128x16xbf16, #tpu.memory_space<vmem>>, vector<128x16xbf16>
    %10 = arith.extf %9 : vector<128x16xbf16> to vector<128x16xf32>
    %11 = arith.addf %8, %10 : vector<128x16xf32>
    %cst_9 = arith.constant 0.000000e+00 : f32
    %12 = vector.broadcast %cst_9 : f32 to vector<128x16xf32>
    %13 = arith.maximumf %11, %12 : vector<128x16xf32>
    %14 = arith.truncf %13 : vector<128x16xf32> to vector<128x16xbf16>
    %c0_10 = arith.constant 0 : index
    %c0_11 = arith.constant 0 : index
    %15 = vector.load %arg6[%c0_10, %c0_11] : memref<128x16xbf16, #tpu.memory_space<vmem>>, vector<128x16xbf16>
    tpu.vector_store %arg6[%c0_10, %c0_11], %14 {strides = array<i32>} : memref<128x16xbf16, #tpu.memory_space<vmem>>, vector<128x16xbf16>,
    return
  }
  func.func @transform_0(%arg0: i32) -> (i32, i32) {
    %c0_i32 = arith.constant 0 : i32
    %c0_i32_0 = arith.constant 0 : i32
    return %arg0, %c0_i32 : i32, i32
  }
  func.func @transform_1(%arg0: i32) -> (i32, i32) {
    %c0_i32 = arith.constant 0 : i32
    %c0_i32_0 = arith.constant 0 : i32
    %c0_i32_1 = arith.constant 0 : i32
    return %c0_i32, %c0_i32_0 : i32, i32
  }
  func.func @transform_2(%arg0: i32) -> (i32, i32) {
    %c0_i32 = arith.constant 0 : i32
    %c0_i32_0 = arith.constant 0 : i32
    %c0_i32_1 = arith.constant 0 : i32
    return %c0_i32, %c0_i32_0 : i32, i32
  }
  func.func @transform_3(%arg0: i32) -> (i32, i32) {
    %c0_i32 = arith.constant 0 : i32
    %c0_i32_0 = arith.constant 0 : i32
    %c0_i32_1 = arith.constant 0 : i32
    return %c0_i32, %c0_i32_0 : i32, i32
  }
  func.func @transform_4(%arg0: i32) -> (i32, i32) {
    %c0_i32 = arith.constant 0 : i32
    %c0_i32_0 = arith.constant 0 : i32
    return %arg0, %c0_i32 : i32, i32
  }
  func.func @transform_5(%arg0: i32) -> (i32, i32) {
    %c0_i32 = arith.constant 0 : i32
    %c0_i32_0 = arith.constant 0 : i32
    return %arg0, %c0_i32 : i32, i32
  }
}

module attributes {stable_mosaic.version = 11 : i64} {
  func.func @_maxpool_kernel(%arg0: i32, %arg1: memref<8x2x4x32xbf16, #tpu.memory_space<vmem>>, %arg2: memref<8x4x16xbf16, #tpu.memory_space<vmem>>) attributes {dimension_semantics = [#tpu.dimension_semantics<parallel>], iteration_bounds = array<i64: 1>, scalar_prefetch = 0 : i64, scratch_operands = 0 : i64, tpu.core_type = #tpu.core_type<tc>, window_params = [{transform_indices = @transform_0, window_bounds = array<i64: 8, 2, 4, 32>}, {transform_indices = @transform_1, window_bounds = array<i64: 8, 4, 16>}]} {
    %c0 = arith.constant 0 : index
    %c0_0 = arith.constant 0 : index
    %c0_1 = arith.constant 0 : index
    %c0_2 = arith.constant 0 : index
    %0 = vector.load %arg1[%c0, %c0_0, %c0_1, %c0_2] : memref<8x2x4x32xbf16, #tpu.memory_space<vmem>>, vector<8x2x4x32xbf16>
    %1 = vector.extract_strided_slice %0 {offsets = [0, 0, 0, 0], sizes = [8, 1, 4, 32], strides = [1, 1, 1, 1]} : vector<8x2x4x32xbf16> to vector<8x1x4x32xbf16>
    %2 = vector.shape_cast %1 : vector<8x1x4x32xbf16> to vector<8x4x32xbf16>
    %3 = vector.extract_strided_slice %0 {offsets = [0, 1, 0, 0], sizes = [8, 1, 4, 32], strides = [1, 1, 1, 1]} : vector<8x2x4x32xbf16> to vector<8x1x4x32xbf16>
    %4 = vector.shape_cast %3 : vector<8x1x4x32xbf16> to vector<8x4x32xbf16>
    %5 = arith.maximumf %2, %4 : vector<8x4x32xbf16>
    %6 = vector.extract_strided_slice %5 {offsets = [0, 0, 0], sizes = [8, 4, 16], strides = [1, 1, 1]} : vector<8x4x32xbf16> to vector<8x4x16xbf16>
    %7 = vector.extract_strided_slice %5 {offsets = [0, 0, 16], sizes = [8, 4, 16], strides = [1, 1, 1]} : vector<8x4x32xbf16> to vector<8x4x16xbf16>
    %8 = arith.maximumf %6, %7 : vector<8x4x16xbf16>
    %c0_3 = arith.constant 0 : index
    %c0_4 = arith.constant 0 : index
    %c0_5 = arith.constant 0 : index
    %9 = vector.load %arg2[%c0_3, %c0_4, %c0_5] : memref<8x4x16xbf16, #tpu.memory_space<vmem>>, vector<8x4x16xbf16>
    tpu.vector_store %arg2[%c0_3, %c0_4, %c0_5], %8 {strides = array<i32>} : memref<8x4x16xbf16, #tpu.memory_space<vmem>>, vector<8x4x16xbf16>,
    return
  }
  func.func @transform_0(%arg0: i32) -> (i32, i32, i32, i32) {
    %c0_i32 = arith.constant 0 : i32
    %c0_i32_0 = arith.constant 0 : i32
    %c0_i32_1 = arith.constant 0 : i32
    %c0_i32_2 = arith.constant 0 : i32
    return %arg0, %c0_i32, %c0_i32_0, %c0_i32_1 : i32, i32, i32, i32
  }
  func.func @transform_1(%arg0: i32) -> (i32, i32, i32) {
    %c0_i32 = arith.constant 0 : i32
    %c0_i32_0 = arith.constant 0 : i32
    %c0_i32_1 = arith.constant 0 : i32
    return %arg0, %c0_i32, %c0_i32_0 : i32, i32, i32
  }
}

module attributes {stable_mosaic.version = 11 : i64} {
  func.func @_mm_bn_act_kernel(%arg0: i32, %arg1: memref<32x16xbf16, #tpu.memory_space<vmem>>, %arg2: memref<16x8xbf16, #tpu.memory_space<vmem>>, %arg3: memref<1x8xf32, #tpu.memory_space<vmem>>, %arg4: memref<1x8xf32, #tpu.memory_space<vmem>>, %arg5: memref<32x8xbf16, #tpu.memory_space<vmem>>) attributes {dimension_semantics = [#tpu.dimension_semantics<parallel>], iteration_bounds = array<i64: 1>, scalar_prefetch = 0 : i64, scratch_operands = 0 : i64, tpu.core_type = #tpu.core_type<tc>, window_params = [{transform_indices = @transform_0, window_bounds = array<i64: 32, 16>}, {pipeline_mode = #tpu.pipeline_mode<synchronous>, transform_indices = @transform_1, window_bounds = array<i64: 16, 8>}, {pipeline_mode = #tpu.pipeline_mode<synchronous>, transform_indices = @transform_2, window_bounds = array<i64: 1, 8>}, {pipeline_mode = #tpu.pipeline_mode<synchronous>, transform_indices = @transform_3, window_bounds = array<i64: 1, 8>}, {transform_indices = @transform_4, window_bounds = array<i64: 32, 8>}]} {
    %c0 = arith.constant 0 : index
    %c0_0 = arith.constant 0 : index
    %0 = vector.load %arg1[%c0, %c0_0] : memref<32x16xbf16, #tpu.memory_space<vmem>>, vector<32x16xbf16>
    %c0_1 = arith.constant 0 : index
    %c0_2 = arith.constant 0 : index
    %1 = vector.load %arg2[%c0_1, %c0_2] : memref<16x8xbf16, #tpu.memory_space<vmem>>, vector<16x8xbf16>
    %cst = arith.constant dense<0.000000e+00> : vector<32x8xf32>
    %2 = tpu.matmul %0, %1, %cst {dimension_numbers = #tpu.dot_dimension_numbers<[1], [0], [0], [1], [0, 0, 1, 1], [], []>} : vector<32x16xbf16>, vector<16x8xbf16>, vector<32x8xf32> -> vector<32x8xf32>
    %c0_3 = arith.constant 0 : index
    %c0_4 = arith.constant 0 : index
    %3 = vector.load %arg3[%c0_3, %c0_4] : memref<1x8xf32, #tpu.memory_space<vmem>>, vector<1x8xf32>
    %4 = vector.broadcast %3 : vector<1x8xf32> to vector<32x8xf32>
    %5 = arith.mulf %2, %4 : vector<32x8xf32>
    %c0_5 = arith.constant 0 : index
    %c0_6 = arith.constant 0 : index
    %6 = vector.load %arg4[%c0_5, %c0_6] : memref<1x8xf32, #tpu.memory_space<vmem>>, vector<1x8xf32>
    %7 = vector.broadcast %6 : vector<1x8xf32> to vector<32x8xf32>
    %8 = arith.addf %5, %7 : vector<32x8xf32>
    %cst_7 = arith.constant 0.000000e+00 : f32
    %9 = vector.broadcast %cst_7 : f32 to vector<32x8xf32>
    %10 = arith.maximumf %8, %9 : vector<32x8xf32>
    %11 = arith.truncf %10 : vector<32x8xf32> to vector<32x8xbf16>
    %c0_8 = arith.constant 0 : index
    %c0_9 = arith.constant 0 : index
    %12 = vector.load %arg5[%c0_8, %c0_9] : memref<32x8xbf16, #tpu.memory_space<vmem>>, vector<32x8xbf16>
    tpu.vector_store %arg5[%c0_8, %c0_9], %11 {strides = array<i32>} : memref<32x8xbf16, #tpu.memory_space<vmem>>, vector<32x8xbf16>,
    return
  }
  func.func @transform_0(%arg0: i32) -> (i32, i32) {
    %c0_i32 = arith.constant 0 : i32
    %c0_i32_0 = arith.constant 0 : i32
    return %arg0, %c0_i32 : i32, i32
  }
  func.func @transform_1(%arg0: i32) -> (i32, i32) {
    %c0_i32 = arith.constant 0 : i32
    %c0_i32_0 = arith.constant 0 : i32
    %c0_i32_1 = arith.constant 0 : i32
    return %c0_i32, %c0_i32_0 : i32, i32
  }
  func.func @transform_2(%arg0: i32) -> (i32, i32) {
    %c0_i32 = arith.constant 0 : i32
    %c0_i32_0 = arith.constant 0 : i32
    %c0_i32_1 = arith.constant 0 : i32
    return %c0_i32, %c0_i32_0 : i32, i32
  }
  func.func @transform_3(%arg0: i32) -> (i32, i32) {
    %c0_i32 = arith.constant 0 : i32
    %c0_i32_0 = arith.constant 0 : i32
    %c0_i32_1 = arith.constant 0 : i32
    return %c0_i32, %c0_i32_0 : i32, i32
  }
  func.func @transform_4(%arg0: i32) -> (i32, i32) {
    %c0_i32 = arith.constant 0 : i32
    %c0_i32_0 = arith.constant 0 : i32
    return %arg0, %c0_i32 : i32, i32
  }
}

module attributes {stable_mosaic.version = 11 : i64} {
  func.func @_mm_bn_act_kernel(%arg0: i32, %arg1: memref<32x72xbf16, #tpu.memory_space<vmem>>, %arg2: memref<72x8xbf16, #tpu.memory_space<vmem>>, %arg3: memref<1x8xf32, #tpu.memory_space<vmem>>, %arg4: memref<1x8xf32, #tpu.memory_space<vmem>>, %arg5: memref<32x8xbf16, #tpu.memory_space<vmem>>) attributes {dimension_semantics = [#tpu.dimension_semantics<parallel>], iteration_bounds = array<i64: 1>, scalar_prefetch = 0 : i64, scratch_operands = 0 : i64, tpu.core_type = #tpu.core_type<tc>, window_params = [{transform_indices = @transform_0, window_bounds = array<i64: 32, 72>}, {pipeline_mode = #tpu.pipeline_mode<synchronous>, transform_indices = @transform_1, window_bounds = array<i64: 72, 8>}, {pipeline_mode = #tpu.pipeline_mode<synchronous>, transform_indices = @transform_2, window_bounds = array<i64: 1, 8>}, {pipeline_mode = #tpu.pipeline_mode<synchronous>, transform_indices = @transform_3, window_bounds = array<i64: 1, 8>}, {transform_indices = @transform_4, window_bounds = array<i64: 32, 8>}]} {
    %c0 = arith.constant 0 : index
    %c0_0 = arith.constant 0 : index
    %0 = vector.load %arg1[%c0, %c0_0] : memref<32x72xbf16, #tpu.memory_space<vmem>>, vector<32x72xbf16>
    %c0_1 = arith.constant 0 : index
    %c0_2 = arith.constant 0 : index
    %1 = vector.load %arg2[%c0_1, %c0_2] : memref<72x8xbf16, #tpu.memory_space<vmem>>, vector<72x8xbf16>
    %cst = arith.constant dense<0.000000e+00> : vector<32x8xf32>
    %2 = tpu.matmul %0, %1, %cst {dimension_numbers = #tpu.dot_dimension_numbers<[1], [0], [0], [1], [0, 0, 1, 1], [], []>} : vector<32x72xbf16>, vector<72x8xbf16>, vector<32x8xf32> -> vector<32x8xf32>
    %c0_3 = arith.constant 0 : index
    %c0_4 = arith.constant 0 : index
    %3 = vector.load %arg3[%c0_3, %c0_4] : memref<1x8xf32, #tpu.memory_space<vmem>>, vector<1x8xf32>
    %4 = vector.broadcast %3 : vector<1x8xf32> to vector<32x8xf32>
    %5 = arith.mulf %2, %4 : vector<32x8xf32>
    %c0_5 = arith.constant 0 : index
    %c0_6 = arith.constant 0 : index
    %6 = vector.load %arg4[%c0_5, %c0_6] : memref<1x8xf32, #tpu.memory_space<vmem>>, vector<1x8xf32>
    %7 = vector.broadcast %6 : vector<1x8xf32> to vector<32x8xf32>
    %8 = arith.addf %5, %7 : vector<32x8xf32>
    %cst_7 = arith.constant 0.000000e+00 : f32
    %9 = vector.broadcast %cst_7 : f32 to vector<32x8xf32>
    %10 = arith.maximumf %8, %9 : vector<32x8xf32>
    %11 = arith.truncf %10 : vector<32x8xf32> to vector<32x8xbf16>
    %c0_8 = arith.constant 0 : index
    %c0_9 = arith.constant 0 : index
    %12 = vector.load %arg5[%c0_8, %c0_9] : memref<32x8xbf16, #tpu.memory_space<vmem>>, vector<32x8xbf16>
    tpu.vector_store %arg5[%c0_8, %c0_9], %11 {strides = array<i32>} : memref<32x8xbf16, #tpu.memory_space<vmem>>, vector<32x8xbf16>,
    return
  }
  func.func @transform_0(%arg0: i32) -> (i32, i32) {
    %c0_i32 = arith.constant 0 : i32
    %c0_i32_0 = arith.constant 0 : i32
    return %arg0, %c0_i32 : i32, i32
  }
  func.func @transform_1(%arg0: i32) -> (i32, i32) {
    %c0_i32 = arith.constant 0 : i32
    %c0_i32_0 = arith.constant 0 : i32
    %c0_i32_1 = arith.constant 0 : i32
    return %c0_i32, %c0_i32_0 : i32, i32
  }
  func.func @transform_2(%arg0: i32) -> (i32, i32) {
    %c0_i32 = arith.constant 0 : i32
    %c0_i32_0 = arith.constant 0 : i32
    %c0_i32_1 = arith.constant 0 : i32
    return %c0_i32, %c0_i32_0 : i32, i32
  }
  func.func @transform_3(%arg0: i32) -> (i32, i32) {
    %c0_i32 = arith.constant 0 : i32
    %c0_i32_0 = arith.constant 0 : i32
    %c0_i32_1 = arith.constant 0 : i32
    return %c0_i32, %c0_i32_0 : i32, i32
  }
  func.func @transform_4(%arg0: i32) -> (i32, i32) {
    %c0_i32 = arith.constant 0 : i32
    %c0_i32_0 = arith.constant 0 : i32
    return %arg0, %c0_i32 : i32, i32
  }
}

module attributes {stable_mosaic.version = 11 : i64} {
  func.func @_mm_bn_act_kernel(%arg0: i32, %arg1: memref<32x8xbf16, #tpu.memory_space<vmem>>, %arg2: memref<8x16xbf16, #tpu.memory_space<vmem>>, %arg3: memref<1x16xf32, #tpu.memory_space<vmem>>, %arg4: memref<1x16xf32, #tpu.memory_space<vmem>>, %arg5: memref<32x16xbf16, #tpu.memory_space<vmem>>, %arg6: memref<32x16xbf16, #tpu.memory_space<vmem>>) attributes {dimension_semantics = [#tpu.dimension_semantics<parallel>], iteration_bounds = array<i64: 1>, scalar_prefetch = 0 : i64, scratch_operands = 0 : i64, tpu.core_type = #tpu.core_type<tc>, window_params = [{transform_indices = @transform_0, window_bounds = array<i64: 32, 8>}, {pipeline_mode = #tpu.pipeline_mode<synchronous>, transform_indices = @transform_1, window_bounds = array<i64: 8, 16>}, {pipeline_mode = #tpu.pipeline_mode<synchronous>, transform_indices = @transform_2, window_bounds = array<i64: 1, 16>}, {pipeline_mode = #tpu.pipeline_mode<synchronous>, transform_indices = @transform_3, window_bounds = array<i64: 1, 16>}, {transform_indices = @transform_4, window_bounds = array<i64: 32, 16>}, {transform_indices = @transform_5, window_bounds = array<i64: 32, 16>}]} {
    %c0 = arith.constant 0 : index
    %c0_0 = arith.constant 0 : index
    %0 = vector.load %arg1[%c0, %c0_0] : memref<32x8xbf16, #tpu.memory_space<vmem>>, vector<32x8xbf16>
    %c0_1 = arith.constant 0 : index
    %c0_2 = arith.constant 0 : index
    %1 = vector.load %arg2[%c0_1, %c0_2] : memref<8x16xbf16, #tpu.memory_space<vmem>>, vector<8x16xbf16>
    %cst = arith.constant dense<0.000000e+00> : vector<32x16xf32>
    %2 = tpu.matmul %0, %1, %cst {dimension_numbers = #tpu.dot_dimension_numbers<[1], [0], [0], [1], [0, 0, 1, 1], [], []>} : vector<32x8xbf16>, vector<8x16xbf16>, vector<32x16xf32> -> vector<32x16xf32>
    %c0_3 = arith.constant 0 : index
    %c0_4 = arith.constant 0 : index
    %3 = vector.load %arg3[%c0_3, %c0_4] : memref<1x16xf32, #tpu.memory_space<vmem>>, vector<1x16xf32>
    %4 = vector.broadcast %3 : vector<1x16xf32> to vector<32x16xf32>
    %5 = arith.mulf %2, %4 : vector<32x16xf32>
    %c0_5 = arith.constant 0 : index
    %c0_6 = arith.constant 0 : index
    %6 = vector.load %arg4[%c0_5, %c0_6] : memref<1x16xf32, #tpu.memory_space<vmem>>, vector<1x16xf32>
    %7 = vector.broadcast %6 : vector<1x16xf32> to vector<32x16xf32>
    %8 = arith.addf %5, %7 : vector<32x16xf32>
    %c0_7 = arith.constant 0 : index
    %c0_8 = arith.constant 0 : index
    %9 = vector.load %arg5[%c0_7, %c0_8] : memref<32x16xbf16, #tpu.memory_space<vmem>>, vector<32x16xbf16>
    %10 = arith.extf %9 : vector<32x16xbf16> to vector<32x16xf32>
    %11 = arith.addf %8, %10 : vector<32x16xf32>
    %cst_9 = arith.constant 0.000000e+00 : f32
    %12 = vector.broadcast %cst_9 : f32 to vector<32x16xf32>
    %13 = arith.maximumf %11, %12 : vector<32x16xf32>
    %14 = arith.truncf %13 : vector<32x16xf32> to vector<32x16xbf16>
    %c0_10 = arith.constant 0 : index
    %c0_11 = arith.constant 0 : index
    %15 = vector.load %arg6[%c0_10, %c0_11] : memref<32x16xbf16, #tpu.memory_space<vmem>>, vector<32x16xbf16>
    tpu.vector_store %arg6[%c0_10, %c0_11], %14 {strides = array<i32>} : memref<32x16xbf16, #tpu.memory_space<vmem>>, vector<32x16xbf16>,
    return
  }
  func.func @transform_0(%arg0: i32) -> (i32, i32) {
    %c0_i32 = arith.constant 0 : i32
    %c0_i32_0 = arith.constant 0 : i32
    return %arg0, %c0_i32 : i32, i32
  }
  func.func @transform_1(%arg0: i32) -> (i32, i32) {
    %c0_i32 = arith.constant 0 : i32
    %c0_i32_0 = arith.constant 0 : i32
    %c0_i32_1 = arith.constant 0 : i32
    return %c0_i32, %c0_i32_0 : i32, i32
  }
  func.func @transform_2(%arg0: i32) -> (i32, i32) {
    %c0_i32 = arith.constant 0 : i32
    %c0_i32_0 = arith.constant 0 : i32
    %c0_i32_1 = arith.constant 0 : i32
    return %c0_i32, %c0_i32_0 : i32, i32
  }
  func.func @transform_3(%arg0: i32) -> (i32, i32) {
    %c0_i32 = arith.constant 0 : i32
    %c0_i32_0 = arith.constant 0 : i32
    %c0_i32_1 = arith.constant 0 : i32
    return %c0_i32, %c0_i32_0 : i32, i32
  }
  func.func @transform_4(%arg0: i32) -> (i32, i32) {
    %c0_i32 = arith.constant 0 : i32
    %c0_i32_0 = arith.constant 0 : i32
    return %arg0, %c0_i32 : i32, i32
  }
  func.func @transform_5(%arg0: i32) -> (i32, i32) {
    %c0_i32 = arith.constant 0 : i32
    %c0_i32_0 = arith.constant 0 : i32
    return %arg0, %c0_i32 : i32, i32
  }
}

module attributes {stable_mosaic.version = 11 : i64} {
  func.func @_mm_bn_act_kernel(%arg0: i32, %arg1: memref<32x144xbf16, #tpu.memory_space<vmem>>, %arg2: memref<144x16xbf16, #tpu.memory_space<vmem>>, %arg3: memref<1x16xf32, #tpu.memory_space<vmem>>, %arg4: memref<1x16xf32, #tpu.memory_space<vmem>>, %arg5: memref<32x16xbf16, #tpu.memory_space<vmem>>) attributes {dimension_semantics = [#tpu.dimension_semantics<parallel>], iteration_bounds = array<i64: 1>, scalar_prefetch = 0 : i64, scratch_operands = 0 : i64, tpu.core_type = #tpu.core_type<tc>, window_params = [{transform_indices = @transform_0, window_bounds = array<i64: 32, 144>}, {pipeline_mode = #tpu.pipeline_mode<synchronous>, transform_indices = @transform_1, window_bounds = array<i64: 144, 16>}, {pipeline_mode = #tpu.pipeline_mode<synchronous>, transform_indices = @transform_2, window_bounds = array<i64: 1, 16>}, {pipeline_mode = #tpu.pipeline_mode<synchronous>, transform_indices = @transform_3, window_bounds = array<i64: 1, 16>}, {transform_indices = @transform_4, window_bounds = array<i64: 32, 16>}]} {
    %c0 = arith.constant 0 : index
    %c0_0 = arith.constant 0 : index
    %0 = vector.load %arg1[%c0, %c0_0] : memref<32x144xbf16, #tpu.memory_space<vmem>>, vector<32x144xbf16>
    %c0_1 = arith.constant 0 : index
    %c0_2 = arith.constant 0 : index
    %1 = vector.load %arg2[%c0_1, %c0_2] : memref<144x16xbf16, #tpu.memory_space<vmem>>, vector<144x16xbf16>
    %cst = arith.constant dense<0.000000e+00> : vector<32x16xf32>
    %2 = tpu.matmul %0, %1, %cst {dimension_numbers = #tpu.dot_dimension_numbers<[1], [0], [0], [1], [0, 0, 1, 1], [], []>} : vector<32x144xbf16>, vector<144x16xbf16>, vector<32x16xf32> -> vector<32x16xf32>
    %c0_3 = arith.constant 0 : index
    %c0_4 = arith.constant 0 : index
    %3 = vector.load %arg3[%c0_3, %c0_4] : memref<1x16xf32, #tpu.memory_space<vmem>>, vector<1x16xf32>
    %4 = vector.broadcast %3 : vector<1x16xf32> to vector<32x16xf32>
    %5 = arith.mulf %2, %4 : vector<32x16xf32>
    %c0_5 = arith.constant 0 : index
    %c0_6 = arith.constant 0 : index
    %6 = vector.load %arg4[%c0_5, %c0_6] : memref<1x16xf32, #tpu.memory_space<vmem>>, vector<1x16xf32>
    %7 = vector.broadcast %6 : vector<1x16xf32> to vector<32x16xf32>
    %8 = arith.addf %5, %7 : vector<32x16xf32>
    %cst_7 = arith.constant 0.000000e+00 : f32
    %9 = vector.broadcast %cst_7 : f32 to vector<32x16xf32>
    %10 = arith.maximumf %8, %9 : vector<32x16xf32>
    %11 = arith.truncf %10 : vector<32x16xf32> to vector<32x16xbf16>
    %c0_8 = arith.constant 0 : index
    %c0_9 = arith.constant 0 : index
    %12 = vector.load %arg5[%c0_8, %c0_9] : memref<32x16xbf16, #tpu.memory_space<vmem>>, vector<32x16xbf16>
    tpu.vector_store %arg5[%c0_8, %c0_9], %11 {strides = array<i32>} : memref<32x16xbf16, #tpu.memory_space<vmem>>, vector<32x16xbf16>,
    return
  }
  func.func @transform_0(%arg0: i32) -> (i32, i32) {
    %c0_i32 = arith.constant 0 : i32
    %c0_i32_0 = arith.constant 0 : i32
    return %arg0, %c0_i32 : i32, i32
  }
  func.func @transform_1(%arg0: i32) -> (i32, i32) {
    %c0_i32 = arith.constant 0 : i32
    %c0_i32_0 = arith.constant 0 : i32
    %c0_i32_1 = arith.constant 0 : i32
    return %c0_i32, %c0_i32_0 : i32, i32
  }
  func.func @transform_2(%arg0: i32) -> (i32, i32) {
    %c0_i32 = arith.constant 0 : i32
    %c0_i32_0 = arith.constant 0 : i32
    %c0_i32_1 = arith.constant 0 : i32
    return %c0_i32, %c0_i32_0 : i32, i32
  }
  func.func @transform_3(%arg0: i32) -> (i32, i32) {
    %c0_i32 = arith.constant 0 : i32
    %c0_i32_0 = arith.constant 0 : i32
    %c0_i32_1 = arith.constant 0 : i32
    return %c0_i32, %c0_i32_0 : i32, i32
  }
  func.func @transform_4(%arg0: i32) -> (i32, i32) {
    %c0_i32 = arith.constant 0 : i32
    %c0_i32_0 = arith.constant 0 : i32
    return %arg0, %c0_i32 : i32, i32
  }
}

</mosaic_0001>

<llo_original>
// kernel: ibp_backbone_forward.17
$region0: #{ibp_backbone_forward.17}
  #allocation0 [shape = 'u32[]', space=smem, size = 0x4, offset = 0x4, fixed_abs, tag = 'smem constant byte address 0x4 - core index']
  #allocation1 [shape = 'u32[144,128]{1,0:T(1,128)}', space=vmem, size = 0x12000, scoped, tag = 'internal scratch']
  %s0 = inlined_call_operand.vmem [shape: bf16[128,8], index: 0, kind: input, shape index: {}]
  %s1 = inlined_call_operand.vmem [shape: bf16[8,8], index: 1, kind: input, shape index: {}]
  %s2 = inlined_call_operand.vmem [shape: f32[1,8], index: 2, kind: input, shape index: {}]
  %s3 = inlined_call_operand.vmem [shape: f32[1,8], index: 3, kind: input, shape index: {}]
  %s4 = inlined_call_operand.vmem [shape: bf16[128,8], index: 4, kind: output, shape index: {}]
  %s5 = sld [smem:[#allocation0]]
  $region26: #{ibp_backbone_forward.17} parent=0
    _
  %s7 = ssub.s32 1, %s5
  %s8 = scalar_select 0, %s7, %s5
  // Predicated region
  $region2: #{ibp_backbone_forward.17} parent=0 // pred_check
    _
  $region3: #{ibp_backbone_forward.17} parent=0 // pred_check_branch
    %10 = sbr.rel (0) target = $region5
  $region4: #{ibp_backbone_forward.17} parent=0 // pred_region
    _
  $region5: #{ibp_backbone_forward.17} parent=0 // pred_fallthru
    _
  // Predicated region
  $region6: #{ibp_backbone_forward.17} parent=0 // pred_check
    _
  $region7: #{ibp_backbone_forward.17} parent=0 // pred_check_branch
    %12 = sbr.rel (0) target = $region9
  $region8: #{ibp_backbone_forward.17} parent=0 // pred_region
    _
  $region9: #{ibp_backbone_forward.17} parent=0 // pred_fallthru
    _
  // Predicated region
  $region10: #{ibp_backbone_forward.17} parent=0 // pred_check
    _
  $region11: #{ibp_backbone_forward.17} parent=0 // pred_check_branch
    %14 = sbr.rel (0) target = $region13
  $region12: #{ibp_backbone_forward.17} parent=0 // pred_region
    _
  $region13: #{ibp_backbone_forward.17} parent=0 // pred_fallthru
    _
  // Predicated region
  $region14: #{ibp_backbone_forward.17} parent=0 // pred_check
    _
  $region15: #{ibp_backbone_forward.17} parent=0 // pred_check_branch
    %16 = sbr.rel (0) target = $region17
  $region16: #{ibp_backbone_forward.17} parent=0 // pred_region
    _
  $region17: #{ibp_backbone_forward.17} parent=0 // pred_fallthru
    _
  %v18 = vld [vmem:[%s0] sm:$0xf]
  %v19 = vld [vmem:[%s0 + $0x4] sm:$0xf]
  %v20 = vld [vmem:[%s0 + $0x8] sm:$0xf]
  %v21 = vld [vmem:[%s0 + $0xc] sm:$0xf]
  %v22 = vld [vmem:[%s0 + $0x10] sm:$0xf]
  %v23 = vld [vmem:[%s0 + $0x14] sm:$0xf]
  %v24 = vld [vmem:[%s0 + $0x18] sm:$0xf]
  %v25 = vld [vmem:[%s0 + $0x1c] sm:$0xf]
  %v26 = vld [vmem:[%s0 + $0x20] sm:$0xf]
  %v27 = vld [vmem:[%s0 + $0x24] sm:$0xf]
  %v28 = vld [vmem:[%s0 + $0x28] sm:$0xf]
  %v29 = vld [vmem:[%s0 + $0x2c] sm:$0xf]
  %v30 = vld [vmem:[%s0 + $0x30] sm:$0xf]
  %v31 = vld [vmem:[%s0 + $0x34] sm:$0xf]
  %v32 = vld [vmem:[%s0 + $0x38] sm:$0xf]
  %v33 = vld [vmem:[%s0 + $0x3c] sm:$0xf]
  %v34 = vld [vmem:[%s1] sm:$0xf]
  %v51 = vunpack.c.l.b16 %v18
  %v52 = vunpack.c.l.b16 %v19
  %v53 = vunpack.c.l.b16 %v20
  %v54 = vunpack.c.l.b16 %v21
  %v55 = vunpack.c.l.b16 %v22
  %v56 = vunpack.c.l.b16 %v23
  %v57 = vunpack.c.l.b16 %v24
  %v58 = vunpack.c.l.b16 %v25
  %v59 = vunpack.c.l.b16 %v26
  %v60 = vunpack.c.l.b16 %v27
  %v61 = vunpack.c.l.b16 %v28
  %v62 = vunpack.c.l.b16 %v29
  %v63 = vunpack.c.l.b16 %v30
  %v64 = vunpack.c.l.b16 %v31
  %v65 = vunpack.c.l.b16 %v32
  %v66 = vunpack.c.l.b16 %v33
  %v67 = vpack.c.b16 %v52, %v51
  %v68 = vpack.c.b16 %v54, %v53
  %v69 = vpack.c.b16 %v56, %v55
  %v70 = vpack.c.b16 %v58, %v57
  %v71 = vpack.c.b16 %v60, %v59
  %v72 = vpack.c.b16 %v62, %v61
  %v73 = vpack.c.b16 %v64, %v63
  %v74 = vpack.c.b16 %v66, %v65
  %vm75 = vcmask 64512
  %v77 = vsel %vm75, %v67, 0
  %v80 = vsel %vm75, %v68, 0
  %v83 = vsel %vm75, %v69, 0
  %v86 = vsel %vm75, %v70, 0
  %v89 = vsel %vm75, %v71, 0
  %v92 = vsel %vm75, %v72, 0
  %v95 = vsel %vm75, %v73, 0
  %v98 = vsel %vm75, %v74, 0
  %vm100 = vcmask 1043456
  %v102 = vsel %vm100, %v34, 0
  %104 = vmatprep.subr.bf16.mxu0 0
  %105 = vmatpush1.bf16.msra.mxu0 %v102
  %106 = vmatprep.subr.bf16.mxu0 0
  %107 = vmatpush1.bf16.msra.mxu0 0
  %108 = vmatprep.subr.bf16.mxu0 0
  %109 = vmatpush1.bf16.msra.mxu0 0
  %110 = vmatprep.subr.bf16.mxu0 0
  %111 = vmatpush1.bf16.msra.mxu0 0
  %112 = vmatprep.subr.bf16.mxu0 0
  %113 = vmatpush1.bf16.msra.mxu0 0
  %114 = vmatprep.subr.bf16.mxu0 0
  %115 = vmatpush1.bf16.msra.mxu0 0
  %116 = vmatprep.subr.bf16.mxu0 0
  %117 = vmatpush1.bf16.msra.mxu0 0
  %118 = vmatprep.subr.bf16.mxu0 0
  %119 = vmatpush1.bf16.msra.mxu0 0
  %120 = vmatprep.subr.bf16.mxu0 0
  %121 = vmatpush1.bf16.msra.mxu0 0
  %122 = vmatprep.subr.bf16.mxu0 0
  %123 = vmatpush1.bf16.msra.mxu0 0
  %124 = vmatprep.subr.bf16.mxu0 0
  %125 = vmatpush1.bf16.msra.mxu0 0
  %126 = vmatprep.subr.bf16.mxu0 0
  %127 = vmatpush1.bf16.msra.mxu0 0
  %128 = vmatprep.subr.bf16.mxu0 0
  %129 = vmatpush1.bf16.msra.mxu0 0
  %130 = vmatprep.subr.bf16.mxu0 0
  %131 = vmatpush1.bf16.msra.mxu0 0
  %132 = vmatprep.subr.bf16.mxu0 0
  %133 = vmatpush1.bf16.msra.mxu0 0
  %134 = vmatprep.subr.bf16.mxu0 0
  %135 = vmatpush1.bf16.msra.mxu0 0
  %136 = vmatprep.mubr.bf16.mxu0 0
  %137 = vmatmul.mubr.bf16.gmra.mrb[0].mxu0 %v77
  %v138 = vpop.f32.mrb[0].mxu0
  %v139 = vadd.f32 0.0, %v138
  %v140 = vpop.f32.mrb[0].mxu0
  %v141 = vpop.f32.mrb[0].mxu0
  %v142 = vadd.f32 0.0, %v141
  %v143 = vpop.f32.mrb[0].mxu0
  %144 = vmatprep.mubr.bf16.mxu0 0
  %145 = vmatmul.mubr.bf16.gmra.mrb[0].mxu0 %v80
  %v146 = vpop.f32.mrb[0].mxu0
  %v147 = vadd.f32 0.0, %v146
  %v148 = vpop.f32.mrb[0].mxu0
  %v149 = vpop.f32.mrb[0].mxu0
  %v150 = vadd.f32 0.0, %v149
  %v151 = vpop.f32.mrb[0].mxu0
  %152 = vmatprep.mubr.bf16.mxu0 0
  %153 = vmatmul.mubr.bf16.gmra.mrb[0].mxu0 %v83
  %v154 = vpop.f32.mrb[0].mxu0
  %v155 = vadd.f32 0.0, %v154
  %v156 = vpop.f32.mrb[0].mxu0
  %v157 = vpop.f32.mrb[0].mxu0
  %v158 = vadd.f32 0.0, %v157
  %v159 = vpop.f32.mrb[0].mxu0
  %160 = vmatprep.mubr.bf16.mxu0 0
  %161 = vmatmul.mubr.bf16.gmra.mrb[0].mxu0 %v86
  %v162 = vpop.f32.mrb[0].mxu0
  %v163 = vadd.f32 0.0, %v162
  %v164 = vpop.f32.mrb[0].mxu0
  %v165 = vpop.f32.mrb[0].mxu0
  %v166 = vadd.f32 0.0, %v165
  %v167 = vpop.f32.mrb[0].mxu0
  %168 = vmatprep.mubr.bf16.mxu0 0
  %169 = vmatmul.mubr.bf16.gmra.mrb[0].mxu0 %v89
  %v170 = vpop.f32.mrb[0].mxu0
  %v171 = vadd.f32 0.0, %v170
  %v172 = vpop.f32.mrb[0].mxu0
  %v173 = vpop.f32.mrb[0].mxu0
  %v174 = vadd.f32 0.0, %v173
  %v175 = vpop.f32.mrb[0].mxu0
  %176 = vmatprep.mubr.bf16.mxu0 0
  %177 = vmatmul.mubr.bf16.gmra.mrb[0].mxu0 %v92
  %v178 = vpop.f32.mrb[0].mxu0
  %v179 = vadd.f32 0.0, %v178
  %v180 = vpop.f32.mrb[0].mxu0
  %v181 = vpop.f32.mrb[0].mxu0
  %v182 = vadd.f32 0.0, %v181
  %v183 = vpop.f32.mrb[0].mxu0
  %184 = vmatprep.mubr.bf16.mxu0 0
  %185 = vmatmul.mubr.bf16.gmra.mrb[0].mxu0 %v95
  %v186 = vpop.f32.mrb[0].mxu0
  %v187 = vadd.f32 0.0, %v186
  %v188 = vpop.f32.mrb[0].mxu0
  %v189 = vpop.f32.mrb[0].mxu0
  %v190 = vadd.f32 0.0, %v189
  %v191 = vpop.f32.mrb[0].mxu0
  %192 = vmatprep.mubr.bf16.mxu0 0
  %193 = vmatmul.mubr.bf16.gmra.mrb[0].mxu0 %v98
  %v194 = vpop.f32.mrb[0].mxu0
  %v195 = vadd.f32 0.0, %v194
  %v196 = vpop.f32.mrb[0].mxu0
  %v197 = vpop.f32.mrb[0].mxu0
  %v198 = vadd.f32 0.0, %v197
  %v199 = vpop.f32.mrb[0].mxu0
  %200 = vdwg.mxu0
  %v201 = vld [vmem:[%s2] sm:$0x1]
  %v203 = vlaneseq
  %v204 = vshrl.u32 %v203, 7
  %v205 = vsub.s32 0, %v204
  %v206 = vrot.slane %v201, %v205
  %v208 = vmul.f32 %v139, %v206
  %v209 = vmul.f32 %v142, %v206
  %v210 = vmul.f32 %v147, %v206
  %v211 = vmul.f32 %v150, %v206
  %v212 = vmul.f32 %v155, %v206
  %v213 = vmul.f32 %v158, %v206
  %v214 = vmul.f32 %v163, %v206
  %v215 = vmul.f32 %v166, %v206
  %v216 = vmul.f32 %v171, %v206
  %v217 = vmul.f32 %v174, %v206
  %v218 = vmul.f32 %v179, %v206
  %v219 = vmul.f32 %v182, %v206
  %v220 = vmul.f32 %v187, %v206
  %v221 = vmul.f32 %v190, %v206
  %v222 = vmul.f32 %v195, %v206
  %v223 = vmul.f32 %v198, %v206
  %v224 = vld [vmem:[%s3] sm:$0x1]
  %v226 = vlaneseq
  %v227 = vshrl.u32 %v226, 7
  %v228 = vsub.s32 0, %v227
  %v229 = vrot.slane %v224, %v228
  %v231 = vadd.f32 %v208, %v229
  %v232 = vadd.f32 %v209, %v229
  %v233 = vadd.f32 %v210, %v229
  %v234 = vadd.f32 %v211, %v229
  %v235 = vadd.f32 %v212, %v229
  %v236 = vadd.f32 %v213, %v229
  %v237 = vadd.f32 %v214, %v229
  %v238 = vadd.f32 %v215, %v229
  %v239 = vadd.f32 %v216, %v229
  %v240 = vadd.f32 %v217, %v229
  %v241 = vadd.f32 %v218, %v229
  %v242 = vadd.f32 %v219, %v229
  %v243 = vadd.f32 %v220, %v229
  %v244 = vadd.f32 %v221, %v229
  %v245 = vadd.f32 %v222, %v229
  %v246 = vadd.f32 %v223, %v229
  %v247 = vmax.f32 %v231, 0.0
  %v248 = vmax.f32 %v232, 0.0
  %v249 = vmax.f32 %v233, 0.0
  %v250 = vmax.f32 %v234, 0.0
  %v251 = vmax.f32 %v235, 0.0
  %v252 = vmax.f32 %v236, 0.0
  %v253 = vmax.f32 %v237, 0.0
  %v254 = vmax.f32 %v238, 0.0
  %v255 = vmax.f32 %v239, 0.0
  %v256 = vmax.f32 %v240, 0.0
  %v257 = vmax.f32 %v241, 0.0
  %v258 = vmax.f32 %v242, 0.0
  %v259 = vmax.f32 %v243, 0.0
  %v260 = vmax.f32 %v244, 0.0
  %v261 = vmax.f32 %v245, 0.0
  %v262 = vmax.f32 %v246, 0.0
  %v263 = vpack.c.bf16 %v248, %v247
  %v264 = vpack.c.bf16 %v250, %v249
  %v265 = vpack.c.bf16 %v252, %v251
  %v266 = vpack.c.bf16 %v254, %v253
  %v267 = vpack.c.bf16 %v256, %v255
  %v268 = vpack.c.bf16 %v258, %v257
  %v269 = vpack.c.bf16 %v260, %v259
  %v270 = vpack.c.bf16 %v262, %v261
  %v279 = vunpack.c.l.b16 %v263
  %v280 = vunpack.c.h.b16 %v263
  %v281 = vunpack.c.l.b16 %v264
  %v282 = vunpack.c.h.b16 %v264
  %v283 = vunpack.c.l.b16 %v265
  %v284 = vunpack.c.h.b16 %v265
  %v285 = vunpack.c.l.b16 %v266
  %v286 = vunpack.c.h.b16 %v266
  %v287 = vunpack.c.l.b16 %v267
  %v288 = vunpack.c.h.b16 %v267
  %v289 = vunpack.c.l.b16 %v268
  %v290 = vunpack.c.h.b16 %v268
  %v291 = vunpack.c.l.b16 %v269
  %v292 = vunpack.c.h.b16 %v269
  %v293 = vunpack.c.l.b16 %v270
  %v294 = vunpack.c.h.b16 %v270
  %v295 = vpack.c.b16 %v279, %v279
  %v296 = vpack.c.b16 %v280, %v280
  %v297 = vpack.c.b16 %v281, %v281
  %v298 = vpack.c.b16 %v282, %v282
  %v299 = vpack.c.b16 %v283, %v283
  %v300 = vpack.c.b16 %v284, %v284
  %v301 = vpack.c.b16 %v285, %v285
  %v302 = vpack.c.b16 %v286, %v286
  %v303 = vpack.c.b16 %v287, %v287
  %v304 = vpack.c.b16 %v288, %v288
  %v305 = vpack.c.b16 %v289, %v289
  %v306 = vpack.c.b16 %v290, %v290
  %v307 = vpack.c.b16 %v291, %v291
  %v308 = vpack.c.b16 %v292, %v292
  %v309 = vpack.c.b16 %v293, %v293
  %v310 = vpack.c.b16 %v294, %v294
  %vm327 = vcmask 60416
  %328 = vst.msk [vmem:[%s4] sm:$0xf] %vm327, %v295
  %329 = vst.msk [vmem:[%s4 + $0x4] sm:$0xf] %vm327, %v296
  %330 = vst.msk [vmem:[%s4 + $0x8] sm:$0xf] %vm327, %v297
  %331 = vst.msk [vmem:[%s4 + $0xc] sm:$0xf] %vm327, %v298
  %332 = vst.msk [vmem:[%s4 + $0x10] sm:$0xf] %vm327, %v299
  %333 = vst.msk [vmem:[%s4 + $0x14] sm:$0xf] %vm327, %v300
  %334 = vst.msk [vmem:[%s4 + $0x18] sm:$0xf] %vm327, %v301
  %335 = vst.msk [vmem:[%s4 + $0x1c] sm:$0xf] %vm327, %v302
  %336 = vst.msk [vmem:[%s4 + $0x20] sm:$0xf] %vm327, %v303
  %337 = vst.msk [vmem:[%s4 + $0x24] sm:$0xf] %vm327, %v304
  %338 = vst.msk [vmem:[%s4 + $0x28] sm:$0xf] %vm327, %v305
  %339 = vst.msk [vmem:[%s4 + $0x2c] sm:$0xf] %vm327, %v306
  %340 = vst.msk [vmem:[%s4 + $0x30] sm:$0xf] %vm327, %v307
  %341 = vst.msk [vmem:[%s4 + $0x34] sm:$0xf] %vm327, %v308
  %342 = vst.msk [vmem:[%s4 + $0x38] sm:$0xf] %vm327, %v309
  %343 = vst.msk [vmem:[%s4 + $0x3c] sm:$0xf] %vm327, %v310
  // Predicated region
  $region18: #{ibp_backbone_forward.17} parent=0 // pred_check
    _
  $region19: #{ibp_backbone_forward.17} parent=0 // pred_check_branch
    %345 = sbr.rel (0) target = $region21
  $region20: #{ibp_backbone_forward.17} parent=0 // pred_region
    _
  $region21: #{ibp_backbone_forward.17} parent=0 // pred_fallthru
    _
  // Predicated region
  $region22: #{ibp_backbone_forward.17} parent=0 // pred_check
    _
  $region23: #{ibp_backbone_forward.17} parent=0 // pred_check_branch
    %347 = sbr.rel (0) target = $region25
  $region24: #{ibp_backbone_forward.17} parent=0 // pred_region
    _
  $region25: #{ibp_backbone_forward.17} parent=0 // pred_fallthru
    _

// kernel: ibp_backbone_forward.15
$region0: #{ibp_backbone_forward.15}
  #allocation0 [shape = 'u32[]', space=smem, size = 0x4, offset = 0x4, fixed_abs, tag = 'smem constant byte address 0x4 - core index']
  #allocation1 [shape = 'u32[144,128]{1,0:T(1,128)}', space=vmem, size = 0x12000, scoped, tag = 'internal scratch']
  %s0 = inlined_call_operand.vmem [shape: bf16[128,196], index: 0, kind: input, shape index: {}]
  %s1 = inlined_call_operand.vmem [shape: bf16[196,8], index: 1, kind: input, shape index: {}]
  %s2 = inlined_call_operand.vmem [shape: f32[1,8], index: 2, kind: input, shape index: {}]
  %s3 = inlined_call_operand.vmem [shape: f32[1,8], index: 3, kind: input, shape index: {}]
  %s4 = inlined_call_operand.vmem [shape: bf16[128,8], index: 4, kind: output, shape index: {}]
  %s5 = sld [smem:[#allocation0]]
  $region26: #{ibp_backbone_forward.15} parent=0
    _
  %s7 = ssub.s32 1, %s5
  %s8 = scalar_select 0, %s7, %s5
  // Predicated region
  $region2: #{ibp_backbone_forward.15} parent=0 // pred_check
    _
  $region3: #{ibp_backbone_forward.15} parent=0 // pred_check_branch
    %10 = sbr.rel (0) target = $region5
  $region4: #{ibp_backbone_forward.15} parent=0 // pred_region
    _
  $region5: #{ibp_backbone_forward.15} parent=0 // pred_fallthru
    _
  // Predicated region
  $region6: #{ibp_backbone_forward.15} parent=0 // pred_check
    _
  $region7: #{ibp_backbone_forward.15} parent=0 // pred_check_branch
    %12 = sbr.rel (0) target = $region9
  $region8: #{ibp_backbone_forward.15} parent=0 // pred_region
    _
  $region9: #{ibp_backbone_forward.15} parent=0 // pred_fallthru
    _
  // Predicated region
  $region10: #{ibp_backbone_forward.15} parent=0 // pred_check
    _
  $region11: #{ibp_backbone_forward.15} parent=0 // pred_check_branch
    %14 = sbr.rel (0) target = $region13
  $region12: #{ibp_backbone_forward.15} parent=0 // pred_region
    _
  $region13: #{ibp_backbone_forward.15} parent=0 // pred_fallthru
    _
  // Predicated region
  $region14: #{ibp_backbone_forward.15} parent=0 // pred_check
    _
  $region15: #{ibp_backbone_forward.15} parent=0 // pred_check_branch
    %16 = sbr.rel (0) target = $region17
  $region16: #{ibp_backbone_forward.15} parent=0 // pred_region
    _
  $region17: #{ibp_backbone_forward.15} parent=0 // pred_fallthru
    _
  %v18 = vld [vmem:[%s0] sm:$0xff]
  %v19 = vld [vmem:[%s0 + $0x8] sm:$0xff]
  %v20 = vld [vmem:[%s0 + $0x10] sm:$0xff]
  %v21 = vld [vmem:[%s0 + $0x18] sm:$0xff]
  %v22 = vld [vmem:[%s0 + $0x20] sm:$0xff]
  %v23 = vld [vmem:[%s0 + $0x28] sm:$0xff]
  %v24 = vld [vmem:[%s0 + $0x30] sm:$0xff]
  %v25 = vld [vmem:[%s0 + $0x38] sm:$0xff]
  %v26 = vld [vmem:[%s0 + $0x40] sm:$0xff]
  %v27 = vld [vmem:[%s0 + $0x48] sm:$0xff]
  %v28 = vld [vmem:[%s0 + $0x50] sm:$0xff]
  %v29 = vld [vmem:[%s0 + $0x58] sm:$0xff]
  %v30 = vld [vmem:[%s0 + $0x60] sm:$0xff]
  %v31 = vld [vmem:[%s0 + $0x68] sm:$0xff]
  %v32 = vld [vmem:[%s0 + $0x70] sm:$0xff]
  %v33 = vld [vmem:[%s0 + $0x78] sm:$0xff]
  %v34 = vld [vmem:[%s1] sm:$0xf]
  %v35 = vld [vmem:[%s1 + $0x4] sm:$0xf]
  %v36 = vld [vmem:[%s1 + $0x8] sm:$0xf]
  %v37 = vld [vmem:[%s1 + $0xc] sm:$0xf]
  %v38 = vld [vmem:[%s1 + $0x10] sm:$0xf]
  %v39 = vld [vmem:[%s1 + $0x14] sm:$0xf]
  %v40 = vld [vmem:[%s1 + $0x18] sm:$0xf]
  %v41 = vld [vmem:[%s1 + $0x1c] sm:$0xf]
  %v42 = vld [vmem:[%s1 + $0x20] sm:$0xf]
  %v43 = vld [vmem:[%s1 + $0x24] sm:$0xf]
  %v44 = vld [vmem:[%s1 + $0x28] sm:$0xf]
  %v45 = vld [vmem:[%s1 + $0x2c] sm:$0xf]
  %v46 = vld [vmem:[%s1 + $0x30] sm:$0xf]
  %v47 = vld [vmem:[%s1 + $0x34] sm:$0xf]
  %v48 = vld [vmem:[%s1 + $0x38] sm:$0xf]
  %v49 = vld [vmem:[%s1 + $0x3c] sm:$0xf]
  %v50 = vld [vmem:[%s1 + $0x40] sm:$0xf]
  %v51 = vld [vmem:[%s1 + $0x44] sm:$0xf]
  %v52 = vld [vmem:[%s1 + $0x48] sm:$0xf]
  %v53 = vld [vmem:[%s1 + $0x4c] sm:$0xf]
  %v54 = vld [vmem:[%s1 + $0x50] sm:$0xf]
  %v55 = vld [vmem:[%s1 + $0x54] sm:$0xf]
  %v56 = vld [vmem:[%s1 + $0x58] sm:$0xf]
  %v57 = vld [vmem:[%s1 + $0x5c] sm:$0xf]
  %v58 = vld [vmem:[%s1 + $0x60] sm:$0x3]
  %v75 = vunpack.c.l.b16 %v18
  %v76 = vunpack.c.h.b16 %v18
  %v77 = vunpack.c.l.b16 %v19
  %v78 = vunpack.c.h.b16 %v19
  %v79 = vunpack.c.l.b16 %v20
  %v80 = vunpack.c.h.b16 %v20
  %v81 = vunpack.c.l.b16 %v21
  %v82 = vunpack.c.h.b16 %v21
  %v83 = vunpack.c.l.b16 %v22
  %v84 = vunpack.c.h.b16 %v22
  %v85 = vunpack.c.l.b16 %v23
  %v86 = vunpack.c.h.b16 %v23
  %v87 = vunpack.c.l.b16 %v24
  %v88 = vunpack.c.h.b16 %v24
  %v89 = vunpack.c.l.b16 %v25
  %v90 = vunpack.c.h.b16 %v25
  %v91 = vunpack.c.l.b16 %v26
  %v92 = vunpack.c.h.b16 %v26
  %v93 = vunpack.c.l.b16 %v27
  %v94 = vunpack.c.h.b16 %v27
  %v95 = vunpack.c.l.b16 %v28
  %v96 = vunpack.c.h.b16 %v28
  %v97 = vunpack.c.l.b16 %v29
  %v98 = vunpack.c.h.b16 %v29
  %v99 = vunpack.c.l.b16 %v30
  %v100 = vunpack.c.h.b16 %v30
  %v101 = vunpack.c.l.b16 %v31
  %v102 = vunpack.c.h.b16 %v31
  %v103 = vunpack.c.l.b16 %v32
  %v104 = vunpack.c.h.b16 %v32
  %v105 = vunpack.c.l.b16 %v33
  %v106 = vunpack.c.h.b16 %v33
  %v107 = vpack.c.b16 %v77, %v75
  %v108 = vpack.c.b16 %v78, %v76
  %v109 = vpack.c.b16 %v81, %v79
  %v110 = vpack.c.b16 %v82, %v80
  %v111 = vpack.c.b16 %v85, %v83
  %v112 = vpack.c.b16 %v86, %v84
  %v113 = vpack.c.b16 %v89, %v87
  %v114 = vpack.c.b16 %v90, %v88
  %v115 = vpack.c.b16 %v93, %v91
  %v116 = vpack.c.b16 %v94, %v92
  %v117 = vpack.c.b16 %v97, %v95
  %v118 = vpack.c.b16 %v98, %v96
  %v119 = vpack.c.b16 %v101, %v99
  %v120 = vpack.c.b16 %v102, %v100
  %v121 = vpack.c.b16 %v105, %v103
  %v122 = vpack.c.b16 %v106, %v104
  %v156 = vunpack.c.l.b16 %v34
  %v157 = vunpack.c.l.b16 %v35
  %v158 = vunpack.c.l.b16 %v36
  %v159 = vunpack.c.l.b16 %v37
  %v160 = vunpack.c.l.b16 %v38
  %v161 = vunpack.c.l.b16 %v39
  %v162 = vunpack.c.l.b16 %v40
  %v163 = vunpack.c.l.b16 %v41
  %v164 = vunpack.c.l.b16 %v42
  %v165 = vunpack.c.l.b16 %v43
  %v166 = vunpack.c.l.b16 %v44
  %v167 = vunpack.c.l.b16 %v45
  %v168 = vunpack.c.l.b16 %v46
  %v169 = vunpack.c.l.b16 %v47
  %v170 = vunpack.c.l.b16 %v48
  %v171 = vunpack.c.l.b16 %v49
  %v172 = vunpack.c.l.b16 %v50
  %v173 = vunpack.c.l.b16 %v51
  %v174 = vunpack.c.l.b16 %v52
  %v175 = vunpack.c.l.b16 %v53
  %v176 = vunpack.c.l.b16 %v54
  %v177 = vunpack.c.l.b16 %v55
  %v178 = vunpack.c.l.b16 %v56
  %v179 = vunpack.c.l.b16 %v57
  %v180 = vunpack.c.l.b16 %v58
  %v181 = vpack.c.b16 %v157, %v156
  %v182 = vpack.c.b16 %v159, %v158
  %v183 = vpack.c.b16 %v161, %v160
  %v184 = vpack.c.b16 %v163, %v162
  %v185 = vpack.c.b16 %v165, %v164
  %v186 = vpack.c.b16 %v167, %v166
  %v187 = vpack.c.b16 %v169, %v168
  %v188 = vpack.c.b16 %v171, %v170
  %v189 = vpack.c.b16 %v173, %v172
  %v190 = vpack.c.b16 %v175, %v174
  %v191 = vpack.c.b16 %v177, %v176
  %v192 = vpack.c.b16 %v179, %v178
  %v193 = vpack.c.b16 %v180, %v180
  %vm206 = vcmask 556032
  %v208 = vsel %vm206, %v108, 0
  %v211 = vsel %vm206, %v110, 0
  %v214 = vsel %vm206, %v112, 0
  %v217 = vsel %vm206, %v114, 0
  %v220 = vsel %vm206, %v116, 0
  %v223 = vsel %vm206, %v118, 0
  %v226 = vsel %vm206, %v120, 0
  %v229 = vsel %vm206, %v122, 0
  %vm231 = vcmask 1041408
  %v233 = vsel %vm231, %v193, 0
  %235 = vmatprep.subr.bf16.mxu0 0
  %236 = vmatpush1.bf16.msra.mxu0 %v181
  %237 = vmatprep.subr.bf16.mxu0 0
  %238 = vmatpush1.bf16.msra.mxu0 %v182
  %239 = vmatprep.subr.bf16.mxu0 0
  %240 = vmatpush1.bf16.msra.mxu0 %v183
  %241 = vmatprep.subr.bf16.mxu0 0
  %242 = vmatpush1.bf16.msra.mxu0 %v184
  %243 = vmatprep.subr.bf16.mxu0 0
  %244 = vmatpush1.bf16.msra.mxu0 %v185
  %245 = vmatprep.subr.bf16.mxu0 0
  %246 = vmatpush1.bf16.msra.mxu0 %v186
  %247 = vmatprep.subr.bf16.mxu0 0
  %248 = vmatpush1.bf16.msra.mxu0 %v187
  %249 = vmatprep.subr.bf16.mxu0 0
  %250 = vmatpush1.bf16.msra.mxu0 %v188
  %251 = vmatprep.subr.bf16.mxu0 0
  %252 = vmatpush1.bf16.msra.mxu0 %v189
  %253 = vmatprep.subr.bf16.mxu0 0
  %254 = vmatpush1.bf16.msra.mxu0 %v190
  %255 = vmatprep.subr.bf16.mxu0 0
  %256 = vmatpush1.bf16.msra.mxu0 %v191
  %257 = vmatprep.subr.bf16.mxu0 0
  %258 = vmatpush1.bf16.msra.mxu0 %v192
  %259 = vmatprep.subr.bf16.mxu0 0
  %260 = vmatpush1.bf16.msra.mxu0 %v233
  %261 = vmatprep.subr.bf16.mxu0 0
  %262 = vmatpush1.bf16.msra.mxu0 0
  %263 = vmatprep.subr.bf16.mxu0 0
  %264 = vmatpush1.bf16.msra.mxu0 0
  %265 = vmatprep.subr.bf16.mxu0 0
  %266 = vmatpush1.bf16.msra.mxu0 0
  %267 = vmatprep.mubr.bf16.mxu0 %v208
  %268 = vmatmul.mubr.bf16.gmra.mrb[0].mxu0 %v107
  %v269 = vpop.f32.mrb[0].mxu0
  %v270 = vadd.f32 0.0, %v269
  %v271 = vpop.f32.mrb[0].mxu0
  %v272 = vpop.f32.mrb[0].mxu0
  %v273 = vadd.f32 0.0, %v272
  %v274 = vpop.f32.mrb[0].mxu0
  %275 = vmatprep.mubr.bf16.mxu0 %v211
  %276 = vmatmul.mubr.bf16.gmra.mrb[0].mxu0 %v109
  %v277 = vpop.f32.mrb[0].mxu0
  %v278 = vadd.f32 0.0, %v277
  %v279 = vpop.f32.mrb[0].mxu0
  %v280 = vpop.f32.mrb[0].mxu0
  %v281 = vadd.f32 0.0, %v280
  %v282 = vpop.f32.mrb[0].mxu0
  %283 = vmatprep.mubr.bf16.mxu0 %v214
  %284 = vmatmul.mubr.bf16.gmra.mrb[0].mxu0 %v111
  %v285 = vpop.f32.mrb[0].mxu0
  %v286 = vadd.f32 0.0, %v285
  %v287 = vpop.f32.mrb[0].mxu0
  %v288 = vpop.f32.mrb[0].mxu0
  %v289 = vadd.f32 0.0, %v288
  %v290 = vpop.f32.mrb[0].mxu0
  %291 = vmatprep.mubr.bf16.mxu0 %v217
  %292 = vmatmul.mubr.bf16.gmra.mrb[0].mxu0 %v113
  %v293 = vpop.f32.mrb[0].mxu0
  %v294 = vadd.f32 0.0, %v293
  %v295 = vpop.f32.mrb[0].mxu0
  %v296 = vpop.f32.mrb[0].mxu0
  %v297 = vadd.f32 0.0, %v296
  %v298 = vpop.f32.mrb[0].mxu0
  %299 = vmatprep.mubr.bf16.mxu0 %v220
  %300 = vmatmul.mubr.bf16.gmra.mrb[0].mxu0 %v115
  %v301 = vpop.f32.mrb[0].mxu0
  %v302 = vadd.f32 0.0, %v301
  %v303 = vpop.f32.mrb[0].mxu0
  %v304 = vpop.f32.mrb[0].mxu0
  %v305 = vadd.f32 0.0, %v304
  %v306 = vpop.f32.mrb[0].mxu0
  %307 = vmatprep.mubr.bf16.mxu0 %v223
  %308 = vmatmul.mubr.bf16.gmra.mrb[0].mxu0 %v117
  %v309 = vpop.f32.mrb[0].mxu0
  %v310 = vadd.f32 0.0, %v309
  %v311 = vpop.f32.mrb[0].mxu0
  %v312 = vpop.f32.mrb[0].mxu0
  %v313 = vadd.f32 0.0, %v312
  %v314 = vpop.f32.mrb[0].mxu0
  %315 = vmatprep.mubr.bf16.mxu0 %v226
  %316 = vmatmul.mubr.bf16.gmra.mrb[0].mxu0 %v119
  %v317 = vpop.f32.mrb[0].mxu0
  %v318 = vadd.f32 0.0, %v317
  %v319 = vpop.f32.mrb[0].mxu0
  %v320 = vpop.f32.mrb[0].mxu0
  %v321 = vadd.f32 0.0, %v320
  %v322 = vpop.f32.mrb[0].mxu0
  %323 = vmatprep.mubr.bf16.mxu0 %v229
  %324 = vmatmul.mubr.bf16.gmra.mrb[0].mxu0 %v121
  %v325 = vpop.f32.mrb[0].mxu0
  %v326 = vadd.f32 0.0, %v325
  %v327 = vpop.f32.mrb[0].mxu0
  %v328 = vpop.f32.mrb[0].mxu0
  %v329 = vadd.f32 0.0, %v328
  %v330 = vpop.f32.mrb[0].mxu0
  %331 = vdwg.mxu0
  %v332 = vld [vmem:[%s2] sm:$0x1]
  %v334 = vlaneseq
  %v335 = vshrl.u32 %v334, 7
  %v336 = vsub.s32 0, %v335
  %v337 = vrot.slane %v332, %v336
  %v339 = vmul.f32 %v270, %v337
  %v340 = vmul.f32 %v273, %v337
  %v341 = vmul.f32 %v278, %v337
  %v342 = vmul.f32 %v281, %v337
  %v343 = vmul.f32 %v286, %v337
  %v344 = vmul.f32 %v289, %v337
  %v345 = vmul.f32 %v294, %v337
  %v346 = vmul.f32 %v297, %v337
  %v347 = vmul.f32 %v302, %v337
  %v348 = vmul.f32 %v305, %v337
  %v349 = vmul.f32 %v310, %v337
  %v350 = vmul.f32 %v313, %v337
  %v351 = vmul.f32 %v318, %v337
  %v352 = vmul.f32 %v321, %v337
  %v353 = vmul.f32 %v326, %v337
  %v354 = vmul.f32 %v329, %v337
  %v355 = vld [vmem:[%s3] sm:$0x1]
  %v357 = vlaneseq
  %v358 = vshrl.u32 %v357, 7
  %v359 = vsub.s32 0, %v358
  %v360 = vrot.slane %v355, %v359
  %v362 = vadd.f32 %v339, %v360
  %v363 = vadd.f32 %v340, %v360
  %v364 = vadd.f32 %v341, %v360
  %v365 = vadd.f32 %v342, %v360
  %v366 = vadd.f32 %v343, %v360
  %v367 = vadd.f32 %v344, %v360
  %v368 = vadd.f32 %v345, %v360
  %v369 = vadd.f32 %v346, %v360
  %v370 = vadd.f32 %v347, %v360
  %v371 = vadd.f32 %v348, %v360
  %v372 = vadd.f32 %v349, %v360
  %v373 = vadd.f32 %v350, %v360
  %v374 = vadd.f32 %v351, %v360
  %v375 = vadd.f32 %v352, %v360
  %v376 = vadd.f32 %v353, %v360
  %v377 = vadd.f32 %v354, %v360
  %v378 = vmax.f32 %v362, 0.0
  %v379 = vmax.f32 %v363, 0.0
  %v380 = vmax.f32 %v364, 0.0
  %v381 = vmax.f32 %v365, 0.0
  %v382 = vmax.f32 %v366, 0.0
  %v383 = vmax.f32 %v367, 0.0
  %v384 = vmax.f32 %v368, 0.0
  %v385 = vmax.f32 %v369, 0.0
  %v386 = vmax.f32 %v370, 0.0
  %v387 = vmax.f32 %v371, 0.0
  %v388 = vmax.f32 %v372, 0.0
  %v389 = vmax.f32 %v373, 0.0
  %v390 = vmax.f32 %v374, 0.0
  %v391 = vmax.f32 %v375, 0.0
  %v392 = vmax.f32 %v376, 0.0
  %v393 = vmax.f32 %v377, 0.0
  %v394 = vpack.c.bf16 %v379, %v378
  %v395 = vpack.c.bf16 %v381, %v380
  %v396 = vpack.c.bf16 %v383, %v382
  %v397 = vpack.c.bf16 %v385, %v384
  %v398 = vpack.c.bf16 %v387, %v386
  %v399 = vpack.c.bf16 %v389, %v388
  %v400 = vpack.c.bf16 %v391, %v390
  %v401 = vpack.c.bf16 %v393, %v392
  %v410 = vunpack.c.l.b16 %v394
  %v411 = vunpack.c.h.b16 %v394
  %v412 = vunpack.c.l.b16 %v395
  %v413 = vunpack.c.h.b16 %v395
  %v414 = vunpack.c.l.b16 %v396
  %v415 = vunpack.c.h.b16 %v396
  %v416 = vunpack.c.l.b16 %v397
  %v417 = vunpack.c.h.b16 %v397
  %v418 = vunpack.c.l.b16 %v398
  %v419 = vunpack.c.h.b16 %v398
  %v420 = vunpack.c.l.b16 %v399
  %v421 = vunpack.c.h.b16 %v399
  %v422 = vunpack.c.l.b16 %v400
  %v423 = vunpack.c.h.b16 %v400
  %v424 = vunpack.c.l.b16 %v401
  %v425 = vunpack.c.h.b16 %v401
  %v426 = vpack.c.b16 %v410, %v410
  %v427 = vpack.c.b16 %v411, %v411
  %v428 = vpack.c.b16 %v412, %v412
  %v429 = vpack.c.b16 %v413, %v413
  %v430 = vpack.c.b16 %v414, %v414
  %v431 = vpack.c.b16 %v415, %v415
  %v432 = vpack.c.b16 %v416, %v416
  %v433 = vpack.c.b16 %v417, %v417
  %v434 = vpack.c.b16 %v418, %v418
  %v435 = vpack.c.b16 %v419, %v419
  %v436 = vpack.c.b16 %v420, %v420
  %v437 = vpack.c.b16 %v421, %v421
  %v438 = vpack.c.b16 %v422, %v422
  %v439 = vpack.c.b16 %v423, %v423
  %v440 = vpack.c.b16 %v424, %v424
  %v441 = vpack.c.b16 %v425, %v425
  %vm458 = vcmask 60416
  %459 = vst.msk [vmem:[%s4] sm:$0xf] %vm458, %v426
  %460 = vst.msk [vmem:[%s4 + $0x4] sm:$0xf] %vm458, %v427
  %461 = vst.msk [vmem:[%s4 + $0x8] sm:$0xf] %vm458, %v428
  %462 = vst.msk [vmem:[%s4 + $0xc] sm:$0xf] %vm458, %v429
  %463 = vst.msk [vmem:[%s4 + $0x10] sm:$0xf] %vm458, %v430
  %464 = vst.msk [vmem:[%s4 + $0x14] sm:$0xf] %vm458, %v431
  %465 = vst.msk [vmem:[%s4 + $0x18] sm:$0xf] %vm458, %v432
  %466 = vst.msk [vmem:[%s4 + $0x1c] sm:$0xf] %vm458, %v433
  %467 = vst.msk [vmem:[%s4 + $0x20] sm:$0xf] %vm458, %v434
  %468 = vst.msk [vmem:[%s4 + $0x24] sm:$0xf] %vm458, %v435
  %469 = vst.msk [vmem:[%s4 + $0x28] sm:$0xf] %vm458, %v436
  %470 = vst.msk [vmem:[%s4 + $0x2c] sm:$0xf] %vm458, %v437
  %471 = vst.msk [vmem:[%s4 + $0x30] sm:$0xf] %vm458, %v438
  %472 = vst.msk [vmem:[%s4 + $0x34] sm:$0xf] %vm458, %v439
  %473 = vst.msk [vmem:[%s4 + $0x38] sm:$0xf] %vm458, %v440
  %474 = vst.msk [vmem:[%s4 + $0x3c] sm:$0xf] %vm458, %v441
  // Predicated region
  $region18: #{ibp_backbone_forward.15} parent=0 // pred_check
    _
  $region19: #{ibp_backbone_forward.15} parent=0 // pred_check_branch
    %476 = sbr.rel (0) target = $region21
  $region20: #{ibp_backbone_forward.15} parent=0 // pred_region
    _
  $region21: #{ibp_backbone_forward.15} parent=0 // pred_fallthru
    _
  // Predicated region
  $region22: #{ibp_backbone_forward.15} parent=0 // pred_check
    _
  $region23: #{ibp_backbone_forward.15} parent=0 // pred_check_branch
    %478 = sbr.rel (0) target = $region25
  $region24: #{ibp_backbone_forward.15} parent=0 // pred_region
    _
  $region25: #{ibp_backbone_forward.15} parent=0 // pred_fallthru
    _

// kernel: ibp_backbone_forward.18
$region0: #{ibp_backbone_forward.18}
  #allocation0 [shape = 'u32[]', space=smem, size = 0x4, offset = 0x4, fixed_abs, tag = 'smem constant byte address 0x4 - core index']
  #allocation1 [shape = 'u32[144,128]{1,0:T(1,128)}', space=vmem, size = 0x12000, scoped, tag = 'internal scratch']
  %s0 = inlined_call_operand.vmem [shape: bf16[128,72], index: 0, kind: input, shape index: {}]
  %s1 = inlined_call_operand.vmem [shape: bf16[72,8], index: 1, kind: input, shape index: {}]
  %s2 = inlined_call_operand.vmem [shape: f32[1,8], index: 2, kind: input, shape index: {}]
  %s3 = inlined_call_operand.vmem [shape: f32[1,8], index: 3, kind: input, shape index: {}]
  %s4 = inlined_call_operand.vmem [shape: bf16[128,8], index: 4, kind: output, shape index: {}]
  %s5 = sld [smem:[#allocation0]]
  $region26: #{ibp_backbone_forward.18} parent=0
    _
  %s7 = ssub.s32 1, %s5
  %s8 = scalar_select 0, %s7, %s5
  // Predicated region
  $region2: #{ibp_backbone_forward.18} parent=0 // pred_check
    _
  $region3: #{ibp_backbone_forward.18} parent=0 // pred_check_branch
    %10 = sbr.rel (0) target = $region5
  $region4: #{ibp_backbone_forward.18} parent=0 // pred_region
    _
  $region5: #{ibp_backbone_forward.18} parent=0 // pred_fallthru
    _
  // Predicated region
  $region6: #{ibp_backbone_forward.18} parent=0 // pred_check
    _
  $region7: #{ibp_backbone_forward.18} parent=0 // pred_check_branch
    %12 = sbr.rel (0) target = $region9
  $region8: #{ibp_backbone_forward.18} parent=0 // pred_region
    _
  $region9: #{ibp_backbone_forward.18} parent=0 // pred_fallthru
    _
  // Predicated region
  $region10: #{ibp_backbone_forward.18} parent=0 // pred_check
    _
  $region11: #{ibp_backbone_forward.18} parent=0 // pred_check_branch
    %14 = sbr.rel (0) target = $region13
  $region12: #{ibp_backbone_forward.18} parent=0 // pred_region
    _
  $region13: #{ibp_backbone_forward.18} parent=0 // pred_fallthru
    _
  // Predicated region
  $region14: #{ibp_backbone_forward.18} parent=0 // pred_check
    _
  $region15: #{ibp_backbone_forward.18} parent=0 // pred_check_branch
    %16 = sbr.rel (0) target = $region17
  $region16: #{ibp_backbone_forward.18} parent=0 // pred_region
    _
  $region17: #{ibp_backbone_forward.18} parent=0 // pred_fallthru
    _
  %v18 = vld [vmem:[%s0] sm:$0xf]
  %v19 = vld [vmem:[%s0 + $0x4] sm:$0xf]
  %v20 = vld [vmem:[%s0 + $0x8] sm:$0xf]
  %v21 = vld [vmem:[%s0 + $0xc] sm:$0xf]
  %v22 = vld [vmem:[%s0 + $0x10] sm:$0xf]
  %v23 = vld [vmem:[%s0 + $0x14] sm:$0xf]
  %v24 = vld [vmem:[%s0 + $0x18] sm:$0xf]
  %v25 = vld [vmem:[%s0 + $0x1c] sm:$0xf]
  %v26 = vld [vmem:[%s0 + $0x20] sm:$0xf]
  %v27 = vld [vmem:[%s0 + $0x24] sm:$0xf]
  %v28 = vld [vmem:[%s0 + $0x28] sm:$0xf]
  %v29 = vld [vmem:[%s0 + $0x2c] sm:$0xf]
  %v30 = vld [vmem:[%s0 + $0x30] sm:$0xf]
  %v31 = vld [vmem:[%s0 + $0x34] sm:$0xf]
  %v32 = vld [vmem:[%s0 + $0x38] sm:$0xf]
  %v33 = vld [vmem:[%s0 + $0x3c] sm:$0xf]
  %v34 = vld [vmem:[%s1] sm:$0xf]
  %v35 = vld [vmem:[%s1 + $0x4] sm:$0xf]
  %v36 = vld [vmem:[%s1 + $0x8] sm:$0xf]
  %v37 = vld [vmem:[%s1 + $0xc] sm:$0xf]
  %v38 = vld [vmem:[%s1 + $0x10] sm:$0xf]
  %v39 = vld [vmem:[%s1 + $0x14] sm:$0xf]
  %v40 = vld [vmem:[%s1 + $0x18] sm:$0xf]
  %v41 = vld [vmem:[%s1 + $0x1c] sm:$0xf]
  %v42 = vld [vmem:[%s1 + $0x20] sm:$0xf]
  %v59 = vunpack.c.l.b16 %v18
  %v60 = vunpack.c.l.b16 %v19
  %v61 = vunpack.c.l.b16 %v20
  %v62 = vunpack.c.l.b16 %v21
  %v63 = vunpack.c.l.b16 %v22
  %v64 = vunpack.c.l.b16 %v23
  %v65 = vunpack.c.l.b16 %v24
  %v66 = vunpack.c.l.b16 %v25
  %v67 = vunpack.c.l.b16 %v26
  %v68 = vunpack.c.l.b16 %v27
  %v69 = vunpack.c.l.b16 %v28
  %v70 = vunpack.c.l.b16 %v29
  %v71 = vunpack.c.l.b16 %v30
  %v72 = vunpack.c.l.b16 %v31
  %v73 = vunpack.c.l.b16 %v32
  %v74 = vunpack.c.l.b16 %v33
  %v75 = vpack.c.b16 %v60, %v59
  %v76 = vpack.c.b16 %v62, %v61
  %v77 = vpack.c.b16 %v64, %v63
  %v78 = vpack.c.b16 %v66, %v65
  %v79 = vpack.c.b16 %v68, %v67
  %v80 = vpack.c.b16 %v70, %v69
  %v81 = vpack.c.b16 %v72, %v71
  %v82 = vpack.c.b16 %v74, %v73
  %v92 = vunpack.c.l.b16 %v34
  %v93 = vunpack.c.l.b16 %v35
  %v94 = vunpack.c.l.b16 %v36
  %v95 = vunpack.c.l.b16 %v37
  %v96 = vunpack.c.l.b16 %v38
  %v97 = vunpack.c.l.b16 %v39
  %v98 = vunpack.c.l.b16 %v40
  %v99 = vunpack.c.l.b16 %v41
  %v100 = vunpack.c.l.b16 %v42
  %v101 = vpack.c.b16 %v93, %v92
  %v102 = vpack.c.b16 %v95, %v94
  %v103 = vpack.c.b16 %v97, %v96
  %v104 = vpack.c.b16 %v99, %v98
  %v105 = vpack.c.b16 %v100, %v100
  %vm110 = vcmask 588800
  %v112 = vsel %vm110, %v75, 0
  %v115 = vsel %vm110, %v76, 0
  %v118 = vsel %vm110, %v77, 0
  %v121 = vsel %vm110, %v78, 0
  %v124 = vsel %vm110, %v79, 0
  %v127 = vsel %vm110, %v80, 0
  %v130 = vsel %vm110, %v81, 0
  %v133 = vsel %vm110, %v82, 0
  %vm135 = vcmask 1043456
  %v137 = vsel %vm135, %v105, 0
  %139 = vmatprep.subr.bf16.mxu0 0
  %140 = vmatpush1.bf16.msra.mxu0 %v101
  %141 = vmatprep.subr.bf16.mxu0 0
  %142 = vmatpush1.bf16.msra.mxu0 %v102
  %143 = vmatprep.subr.bf16.mxu0 0
  %144 = vmatpush1.bf16.msra.mxu0 %v103
  %145 = vmatprep.subr.bf16.mxu0 0
  %146 = vmatpush1.bf16.msra.mxu0 %v104
  %147 = vmatprep.subr.bf16.mxu0 0
  %148 = vmatpush1.bf16.msra.mxu0 %v137
  %149 = vmatprep.subr.bf16.mxu0 0
  %150 = vmatpush1.bf16.msra.mxu0 0
  %151 = vmatprep.subr.bf16.mxu0 0
  %152 = vmatpush1.bf16.msra.mxu0 0
  %153 = vmatprep.subr.bf16.mxu0 0
  %154 = vmatpush1.bf16.msra.mxu0 0
  %155 = vmatprep.subr.bf16.mxu0 0
  %156 = vmatpush1.bf16.msra.mxu0 0
  %157 = vmatprep.subr.bf16.mxu0 0
  %158 = vmatpush1.bf16.msra.mxu0 0
  %159 = vmatprep.subr.bf16.mxu0 0
  %160 = vmatpush1.bf16.msra.mxu0 0
  %161 = vmatprep.subr.bf16.mxu0 0
  %162 = vmatpush1.bf16.msra.mxu0 0
  %163 = vmatprep.subr.bf16.mxu0 0
  %164 = vmatpush1.bf16.msra.mxu0 0
  %165 = vmatprep.subr.bf16.mxu0 0
  %166 = vmatpush1.bf16.msra.mxu0 0
  %167 = vmatprep.subr.bf16.mxu0 0
  %168 = vmatpush1.bf16.msra.mxu0 0
  %169 = vmatprep.subr.bf16.mxu0 0
  %170 = vmatpush1.bf16.msra.mxu0 0
  %171 = vmatprep.mubr.bf16.mxu0 0
  %172 = vmatmul.mubr.bf16.gmra.mrb[0].mxu0 %v112
  %v173 = vpop.f32.mrb[0].mxu0
  %v174 = vadd.f32 0.0, %v173
  %v175 = vpop.f32.mrb[0].mxu0
  %v176 = vpop.f32.mrb[0].mxu0
  %v177 = vadd.f32 0.0, %v176
  %v178 = vpop.f32.mrb[0].mxu0
  %179 = vmatprep.mubr.bf16.mxu0 0
  %180 = vmatmul.mubr.bf16.gmra.mrb[0].mxu0 %v115
  %v181 = vpop.f32.mrb[0].mxu0
  %v182 = vadd.f32 0.0, %v181
  %v183 = vpop.f32.mrb[0].mxu0
  %v184 = vpop.f32.mrb[0].mxu0
  %v185 = vadd.f32 0.0, %v184
  %v186 = vpop.f32.mrb[0].mxu0
  %187 = vmatprep.mubr.bf16.mxu0 0
  %188 = vmatmul.mubr.bf16.gmra.mrb[0].mxu0 %v118
  %v189 = vpop.f32.mrb[0].mxu0
  %v190 = vadd.f32 0.0, %v189
  %v191 = vpop.f32.mrb[0].mxu0
  %v192 = vpop.f32.mrb[0].mxu0
  %v193 = vadd.f32 0.0, %v192
  %v194 = vpop.f32.mrb[0].mxu0
  %195 = vmatprep.mubr.bf16.mxu0 0
  %196 = vmatmul.mubr.bf16.gmra.mrb[0].mxu0 %v121
  %v197 = vpop.f32.mrb[0].mxu0
  %v198 = vadd.f32 0.0, %v197
  %v199 = vpop.f32.mrb[0].mxu0
  %v200 = vpop.f32.mrb[0].mxu0
  %v201 = vadd.f32 0.0, %v200
  %v202 = vpop.f32.mrb[0].mxu0
  %203 = vmatprep.mubr.bf16.mxu0 0
  %204 = vmatmul.mubr.bf16.gmra.mrb[0].mxu0 %v124
  %v205 = vpop.f32.mrb[0].mxu0
  %v206 = vadd.f32 0.0, %v205
  %v207 = vpop.f32.mrb[0].mxu0
  %v208 = vpop.f32.mrb[0].mxu0
  %v209 = vadd.f32 0.0, %v208
  %v210 = vpop.f32.mrb[0].mxu0
  %211 = vmatprep.mubr.bf16.mxu0 0
  %212 = vmatmul.mubr.bf16.gmra.mrb[0].mxu0 %v127
  %v213 = vpop.f32.mrb[0].mxu0
  %v214 = vadd.f32 0.0, %v213
  %v215 = vpop.f32.mrb[0].mxu0
  %v216 = vpop.f32.mrb[0].mxu0
  %v217 = vadd.f32 0.0, %v216
  %v218 = vpop.f32.mrb[0].mxu0
  %219 = vmatprep.mubr.bf16.mxu0 0
  %220 = vmatmul.mubr.bf16.gmra.mrb[0].mxu0 %v130
  %v221 = vpop.f32.mrb[0].mxu0
  %v222 = vadd.f32 0.0, %v221
  %v223 = vpop.f32.mrb[0].mxu0
  %v224 = vpop.f32.mrb[0].mxu0
  %v225 = vadd.f32 0.0, %v224
  %v226 = vpop.f32.mrb[0].mxu0
  %227 = vmatprep.mubr.bf16.mxu0 0
  %228 = vmatmul.mubr.bf16.gmra.mrb[0].mxu0 %v133
  %v229 = vpop.f32.mrb[0].mxu0
  %v230 = vadd.f32 0.0, %v229
  %v231 = vpop.f32.mrb[0].mxu0
  %v232 = vpop.f32.mrb[0].mxu0
  %v233 = vadd.f32 0.0, %v232
  %v234 = vpop.f32.mrb[0].mxu0
  %235 = vdwg.mxu0
  %v236 = vld [vmem:[%s2] sm:$0x1]
  %v238 = vlaneseq
  %v239 = vshrl.u32 %v238, 7
  %v240 = vsub.s32 0, %v239
  %v241 = vrot.slane %v236, %v240
  %v243 = vmul.f32 %v174, %v241
  %v244 = vmul.f32 %v177, %v241
  %v245 = vmul.f32 %v182, %v241
  %v246 = vmul.f32 %v185, %v241
  %v247 = vmul.f32 %v190, %v241
  %v248 = vmul.f32 %v193, %v241
  %v249 = vmul.f32 %v198, %v241
  %v250 = vmul.f32 %v201, %v241
  %v251 = vmul.f32 %v206, %v241
  %v252 = vmul.f32 %v209, %v241
  %v253 = vmul.f32 %v214, %v241
  %v254 = vmul.f32 %v217, %v241
  %v255 = vmul.f32 %v222, %v241
  %v256 = vmul.f32 %v225, %v241
  %v257 = vmul.f32 %v230, %v241
  %v258 = vmul.f32 %v233, %v241
  %v259 = vld [vmem:[%s3] sm:$0x1]
  %v261 = vlaneseq
  %v262 = vshrl.u32 %v261, 7
  %v263 = vsub.s32 0, %v262
  %v264 = vrot.slane %v259, %v263
  %v266 = vadd.f32 %v243, %v264
  %v267 = vadd.f32 %v244, %v264
  %v268 = vadd.f32 %v245, %v264
  %v269 = vadd.f32 %v246, %v264
  %v270 = vadd.f32 %v247, %v264
  %v271 = vadd.f32 %v248, %v264
  %v272 = vadd.f32 %v249, %v264
  %v273 = vadd.f32 %v250, %v264
  %v274 = vadd.f32 %v251, %v264
  %v275 = vadd.f32 %v252, %v264
  %v276 = vadd.f32 %v253, %v264
  %v277 = vadd.f32 %v254, %v264
  %v278 = vadd.f32 %v255, %v264
  %v279 = vadd.f32 %v256, %v264
  %v280 = vadd.f32 %v257, %v264
  %v281 = vadd.f32 %v258, %v264
  %v282 = vmax.f32 %v266, 0.0
  %v283 = vmax.f32 %v267, 0.0
  %v284 = vmax.f32 %v268, 0.0
  %v285 = vmax.f32 %v269, 0.0
  %v286 = vmax.f32 %v270, 0.0
  %v287 = vmax.f32 %v271, 0.0
  %v288 = vmax.f32 %v272, 0.0
  %v289 = vmax.f32 %v273, 0.0
  %v290 = vmax.f32 %v274, 0.0
  %v291 = vmax.f32 %v275, 0.0
  %v292 = vmax.f32 %v276, 0.0
  %v293 = vmax.f32 %v277, 0.0
  %v294 = vmax.f32 %v278, 0.0
  %v295 = vmax.f32 %v279, 0.0
  %v296 = vmax.f32 %v280, 0.0
  %v297 = vmax.f32 %v281, 0.0
  %v298 = vpack.c.bf16 %v283, %v282
  %v299 = vpack.c.bf16 %v285, %v284
  %v300 = vpack.c.bf16 %v287, %v286
  %v301 = vpack.c.bf16 %v289, %v288
  %v302 = vpack.c.bf16 %v291, %v290
  %v303 = vpack.c.bf16 %v293, %v292
  %v304 = vpack.c.bf16 %v295, %v294
  %v305 = vpack.c.bf16 %v297, %v296
  %v314 = vunpack.c.l.b16 %v298
  %v315 = vunpack.c.h.b16 %v298
  %v316 = vunpack.c.l.b16 %v299
  %v317 = vunpack.c.h.b16 %v299
  %v318 = vunpack.c.l.b16 %v300
  %v319 = vunpack.c.h.b16 %v300
  %v320 = vunpack.c.l.b16 %v301
  %v321 = vunpack.c.h.b16 %v301
  %v322 = vunpack.c.l.b16 %v302
  %v323 = vunpack.c.h.b16 %v302
  %v324 = vunpack.c.l.b16 %v303
  %v325 = vunpack.c.h.b16 %v303
  %v326 = vunpack.c.l.b16 %v304
  %v327 = vunpack.c.h.b16 %v304
  %v328 = vunpack.c.l.b16 %v305
  %v329 = vunpack.c.h.b16 %v305
  %v330 = vpack.c.b16 %v314, %v314
  %v331 = vpack.c.b16 %v315, %v315
  %v332 = vpack.c.b16 %v316, %v316
  %v333 = vpack.c.b16 %v317, %v317
  %v334 = vpack.c.b16 %v318, %v318
  %v335 = vpack.c.b16 %v319, %v319
  %v336 = vpack.c.b16 %v320, %v320
  %v337 = vpack.c.b16 %v321, %v321
  %v338 = vpack.c.b16 %v322, %v322
  %v339 = vpack.c.b16 %v323, %v323
  %v340 = vpack.c.b16 %v324, %v324
  %v341 = vpack.c.b16 %v325, %v325
  %v342 = vpack.c.b16 %v326, %v326
  %v343 = vpack.c.b16 %v327, %v327
  %v344 = vpack.c.b16 %v328, %v328
  %v345 = vpack.c.b16 %v329, %v329
  %vm362 = vcmask 60416
  %363 = vst.msk [vmem:[%s4] sm:$0xf] %vm362, %v330
  %364 = vst.msk [vmem:[%s4 + $0x4] sm:$0xf] %vm362, %v331
  %365 = vst.msk [vmem:[%s4 + $0x8] sm:$0xf] %vm362, %v332
  %366 = vst.msk [vmem:[%s4 + $0xc] sm:$0xf] %vm362, %v333
  %367 = vst.msk [vmem:[%s4 + $0x10] sm:$0xf] %vm362, %v334
  %368 = vst.msk [vmem:[%s4 + $0x14] sm:$0xf] %vm362, %v335
  %369 = vst.msk [vmem:[%s4 + $0x18] sm:$0xf] %vm362, %v336
  %370 = vst.msk [vmem:[%s4 + $0x1c] sm:$0xf] %vm362, %v337
  %371 = vst.msk [vmem:[%s4 + $0x20] sm:$0xf] %vm362, %v338
  %372 = vst.msk [vmem:[%s4 + $0x24] sm:$0xf] %vm362, %v339
  %373 = vst.msk [vmem:[%s4 + $0x28] sm:$0xf] %vm362, %v340
  %374 = vst.msk [vmem:[%s4 + $0x2c] sm:$0xf] %vm362, %v341
  %375 = vst.msk [vmem:[%s4 + $0x30] sm:$0xf] %vm362, %v342
  %376 = vst.msk [vmem:[%s4 + $0x34] sm:$0xf] %vm362, %v343
  %377 = vst.msk [vmem:[%s4 + $0x38] sm:$0xf] %vm362, %v344
  %378 = vst.msk [vmem:[%s4 + $0x3c] sm:$0xf] %vm362, %v345
  // Predicated region
  $region18: #{ibp_backbone_forward.18} parent=0 // pred_check
    _
  $region19: #{ibp_backbone_forward.18} parent=0 // pred_check_branch
    %380 = sbr.rel (0) target = $region21
  $region20: #{ibp_backbone_forward.18} parent=0 // pred_region
    _
  $region21: #{ibp_backbone_forward.18} parent=0 // pred_fallthru
    _
  // Predicated region
  $region22: #{ibp_backbone_forward.18} parent=0 // pred_check
    _
  $region23: #{ibp_backbone_forward.18} parent=0 // pred_check_branch
    %382 = sbr.rel (0) target = $region25
  $region24: #{ibp_backbone_forward.18} parent=0 // pred_region
    _
  $region25: #{ibp_backbone_forward.18} parent=0 // pred_fallthru
    _

// kernel: ibp_backbone_forward.16
$region0: #{ibp_backbone_forward.16}
  #allocation0 [shape = 'u32[]', space=smem, size = 0x4, offset = 0x4, fixed_abs, tag = 'smem constant byte address 0x4 - core index']
  #allocation1 [shape = 'u32[144,128]{1,0:T(1,128)}', space=vmem, size = 0x12000, scoped, tag = 'internal scratch']
  %s0 = inlined_call_operand.vmem [shape: bf16[128,8], index: 0, kind: input, shape index: {}]
  %s1 = inlined_call_operand.vmem [shape: bf16[8,16], index: 1, kind: input, shape index: {}]
  %s2 = inlined_call_operand.vmem [shape: f32[1,16], index: 2, kind: input, shape index: {}]
  %s3 = inlined_call_operand.vmem [shape: f32[1,16], index: 3, kind: input, shape index: {}]
  %s4 = inlined_call_operand.vmem [shape: bf16[128,16], index: 4, kind: output, shape index: {}]
  %s5 = sld [smem:[#allocation0]]
  $region26: #{ibp_backbone_forward.16} parent=0
    _
  %s7 = ssub.s32 1, %s5
  %s8 = scalar_select 0, %s7, %s5
  // Predicated region
  $region2: #{ibp_backbone_forward.16} parent=0 // pred_check
    _
  $region3: #{ibp_backbone_forward.16} parent=0 // pred_check_branch
    %10 = sbr.rel (0) target = $region5
  $region4: #{ibp_backbone_forward.16} parent=0 // pred_region
    _
  $region5: #{ibp_backbone_forward.16} parent=0 // pred_fallthru
    _
  // Predicated region
  $region6: #{ibp_backbone_forward.16} parent=0 // pred_check
    _
  $region7: #{ibp_backbone_forward.16} parent=0 // pred_check_branch
    %12 = sbr.rel (0) target = $region9
  $region8: #{ibp_backbone_forward.16} parent=0 // pred_region
    _
  $region9: #{ibp_backbone_forward.16} parent=0 // pred_fallthru
    _
  // Predicated region
  $region10: #{ibp_backbone_forward.16} parent=0 // pred_check
    _
  $region11: #{ibp_backbone_forward.16} parent=0 // pred_check_branch
    %14 = sbr.rel (0) target = $region13
  $region12: #{ibp_backbone_forward.16} parent=0 // pred_region
    _
  $region13: #{ibp_backbone_forward.16} parent=0 // pred_fallthru
    _
  // Predicated region
  $region14: #{ibp_backbone_forward.16} parent=0 // pred_check
    _
  $region15: #{ibp_backbone_forward.16} parent=0 // pred_check_branch
    %16 = sbr.rel (0) target = $region17
  $region16: #{ibp_backbone_forward.16} parent=0 // pred_region
    _
  $region17: #{ibp_backbone_forward.16} parent=0 // pred_fallthru
    _
  %v18 = vld [vmem:[%s0] sm:$0xf]
  %v19 = vld [vmem:[%s0 + $0x4] sm:$0xf]
  %v20 = vld [vmem:[%s0 + $0x8] sm:$0xf]
  %v21 = vld [vmem:[%s0 + $0xc] sm:$0xf]
  %v22 = vld [vmem:[%s0 + $0x10] sm:$0xf]
  %v23 = vld [vmem:[%s0 + $0x14] sm:$0xf]
  %v24 = vld [vmem:[%s0 + $0x18] sm:$0xf]
  %v25 = vld [vmem:[%s0 + $0x1c] sm:$0xf]
  %v26 = vld [vmem:[%s0 + $0x20] sm:$0xf]
  %v27 = vld [vmem:[%s0 + $0x24] sm:$0xf]
  %v28 = vld [vmem:[%s0 + $0x28] sm:$0xf]
  %v29 = vld [vmem:[%s0 + $0x2c] sm:$0xf]
  %v30 = vld [vmem:[%s0 + $0x30] sm:$0xf]
  %v31 = vld [vmem:[%s0 + $0x34] sm:$0xf]
  %v32 = vld [vmem:[%s0 + $0x38] sm:$0xf]
  %v33 = vld [vmem:[%s0 + $0x3c] sm:$0xf]
  %v34 = vld [vmem:[%s1] sm:$0xf]
  %v51 = vunpack.c.l.b16 %v18
  %v52 = vunpack.c.l.b16 %v19
  %v53 = vunpack.c.l.b16 %v20
  %v54 = vunpack.c.l.b16 %v21
  %v55 = vunpack.c.l.b16 %v22
  %v56 = vunpack.c.l.b16 %v23
  %v57 = vunpack.c.l.b16 %v24
  %v58 = vunpack.c.l.b16 %v25
  %v59 = vunpack.c.l.b16 %v26
  %v60 = vunpack.c.l.b16 %v27
  %v61 = vunpack.c.l.b16 %v28
  %v62 = vunpack.c.l.b16 %v29
  %v63 = vunpack.c.l.b16 %v30
  %v64 = vunpack.c.l.b16 %v31
  %v65 = vunpack.c.l.b16 %v32
  %v66 = vunpack.c.l.b16 %v33
  %v67 = vpack.c.b16 %v52, %v51
  %v68 = vpack.c.b16 %v54, %v53
  %v69 = vpack.c.b16 %v56, %v55
  %v70 = vpack.c.b16 %v58, %v57
  %v71 = vpack.c.b16 %v60, %v59
  %v72 = vpack.c.b16 %v62, %v61
  %v73 = vpack.c.b16 %v64, %v63
  %v74 = vpack.c.b16 %v66, %v65
  %vm75 = vcmask 64512
  %v77 = vsel %vm75, %v67, 0
  %v80 = vsel %vm75, %v68, 0
  %v83 = vsel %vm75, %v69, 0
  %v86 = vsel %vm75, %v70, 0
  %v89 = vsel %vm75, %v71, 0
  %v92 = vsel %vm75, %v72, 0
  %v95 = vsel %vm75, %v73, 0
  %v98 = vsel %vm75, %v74, 0
  %vm100 = vcmask 1043456
  %v102 = vsel %vm100, %v34, 0
  %104 = vmatprep.subr.bf16.mxu0 0
  %105 = vmatpush1.bf16.msra.mxu0 %v102
  %106 = vmatprep.subr.bf16.mxu0 0
  %107 = vmatpush1.bf16.msra.mxu0 0
  %108 = vmatprep.subr.bf16.mxu0 0
  %109 = vmatpush1.bf16.msra.mxu0 0
  %110 = vmatprep.subr.bf16.mxu0 0
  %111 = vmatpush1.bf16.msra.mxu0 0
  %112 = vmatprep.subr.bf16.mxu0 0
  %113 = vmatpush1.bf16.msra.mxu0 0
  %114 = vmatprep.subr.bf16.mxu0 0
  %115 = vmatpush1.bf16.msra.mxu0 0
  %116 = vmatprep.subr.bf16.mxu0 0
  %117 = vmatpush1.bf16.msra.mxu0 0
  %118 = vmatprep.subr.bf16.mxu0 0
  %119 = vmatpush1.bf16.msra.mxu0 0
  %120 = vmatprep.subr.bf16.mxu0 0
  %121 = vmatpush1.bf16.msra.mxu0 0
  %122 = vmatprep.subr.bf16.mxu0 0
  %123 = vmatpush1.bf16.msra.mxu0 0
  %124 = vmatprep.subr.bf16.mxu0 0
  %125 = vmatpush1.bf16.msra.mxu0 0
  %126 = vmatprep.subr.bf16.mxu0 0
  %127 = vmatpush1.bf16.msra.mxu0 0
  %128 = vmatprep.subr.bf16.mxu0 0
  %129 = vmatpush1.bf16.msra.mxu0 0
  %130 = vmatprep.subr.bf16.mxu0 0
  %131 = vmatpush1.bf16.msra.mxu0 0
  %132 = vmatprep.subr.bf16.mxu0 0
  %133 = vmatpush1.bf16.msra.mxu0 0
  %134 = vmatprep.subr.bf16.mxu0 0
  %135 = vmatpush1.bf16.msra.mxu0 0
  %136 = vmatprep.mubr.bf16.mxu0 0
  %137 = vmatmul.mubr.bf16.gmra.mrb[0].mxu0 %v77
  %v138 = vpop.f32.mrb[0].mxu0
  %v139 = vadd.f32 0.0, %v138
  %v140 = vpop.f32.mrb[0].mxu0
  %v141 = vpop.f32.mrb[0].mxu0
  %v142 = vadd.f32 0.0, %v141
  %v143 = vpop.f32.mrb[0].mxu0
  %144 = vmatprep.mubr.bf16.mxu0 0
  %145 = vmatmul.mubr.bf16.gmra.mrb[0].mxu0 %v80
  %v146 = vpop.f32.mrb[0].mxu0
  %v147 = vadd.f32 0.0, %v146
  %v148 = vpop.f32.mrb[0].mxu0
  %v149 = vpop.f32.mrb[0].mxu0
  %v150 = vadd.f32 0.0, %v149
  %v151 = vpop.f32.mrb[0].mxu0
  %152 = vmatprep.mubr.bf16.mxu0 0
  %153 = vmatmul.mubr.bf16.gmra.mrb[0].mxu0 %v83
  %v154 = vpop.f32.mrb[0].mxu0
  %v155 = vadd.f32 0.0, %v154
  %v156 = vpop.f32.mrb[0].mxu0
  %v157 = vpop.f32.mrb[0].mxu0
  %v158 = vadd.f32 0.0, %v157
  %v159 = vpop.f32.mrb[0].mxu0
  %160 = vmatprep.mubr.bf16.mxu0 0
  %161 = vmatmul.mubr.bf16.gmra.mrb[0].mxu0 %v86
  %v162 = vpop.f32.mrb[0].mxu0
  %v163 = vadd.f32 0.0, %v162
  %v164 = vpop.f32.mrb[0].mxu0
  %v165 = vpop.f32.mrb[0].mxu0
  %v166 = vadd.f32 0.0, %v165
  %v167 = vpop.f32.mrb[0].mxu0
  %168 = vmatprep.mubr.bf16.mxu0 0
  %169 = vmatmul.mubr.bf16.gmra.mrb[0].mxu0 %v89
  %v170 = vpop.f32.mrb[0].mxu0
  %v171 = vadd.f32 0.0, %v170
  %v172 = vpop.f32.mrb[0].mxu0
  %v173 = vpop.f32.mrb[0].mxu0
  %v174 = vadd.f32 0.0, %v173
  %v175 = vpop.f32.mrb[0].mxu0
  %176 = vmatprep.mubr.bf16.mxu0 0
  %177 = vmatmul.mubr.bf16.gmra.mrb[0].mxu0 %v92
  %v178 = vpop.f32.mrb[0].mxu0
  %v179 = vadd.f32 0.0, %v178
  %v180 = vpop.f32.mrb[0].mxu0
  %v181 = vpop.f32.mrb[0].mxu0
  %v182 = vadd.f32 0.0, %v181
  %v183 = vpop.f32.mrb[0].mxu0
  %184 = vmatprep.mubr.bf16.mxu0 0
  %185 = vmatmul.mubr.bf16.gmra.mrb[0].mxu0 %v95
  %v186 = vpop.f32.mrb[0].mxu0
  %v187 = vadd.f32 0.0, %v186
  %v188 = vpop.f32.mrb[0].mxu0
  %v189 = vpop.f32.mrb[0].mxu0
  %v190 = vadd.f32 0.0, %v189
  %v191 = vpop.f32.mrb[0].mxu0
  %192 = vmatprep.mubr.bf16.mxu0 0
  %193 = vmatmul.mubr.bf16.gmra.mrb[0].mxu0 %v98
  %v194 = vpop.f32.mrb[0].mxu0
  %v195 = vadd.f32 0.0, %v194
  %v196 = vpop.f32.mrb[0].mxu0
  %v197 = vpop.f32.mrb[0].mxu0
  %v198 = vadd.f32 0.0, %v197
  %v199 = vpop.f32.mrb[0].mxu0
  %200 = vdwg.mxu0
  %v201 = vld [vmem:[%s2] sm:$0x1]
  %v203 = vlaneseq
  %v204 = vshrl.u32 %v203, 7
  %v205 = vsub.s32 0, %v204
  %v206 = vrot.slane %v201, %v205
  %v208 = vmul.f32 %v139, %v206
  %v209 = vmul.f32 %v142, %v206
  %v210 = vmul.f32 %v147, %v206
  %v211 = vmul.f32 %v150, %v206
  %v212 = vmul.f32 %v155, %v206
  %v213 = vmul.f32 %v158, %v206
  %v214 = vmul.f32 %v163, %v206
  %v215 = vmul.f32 %v166, %v206
  %v216 = vmul.f32 %v171, %v206
  %v217 = vmul.f32 %v174, %v206
  %v218 = vmul.f32 %v179, %v206
  %v219 = vmul.f32 %v182, %v206
  %v220 = vmul.f32 %v187, %v206
  %v221 = vmul.f32 %v190, %v206
  %v222 = vmul.f32 %v195, %v206
  %v223 = vmul.f32 %v198, %v206
  %v224 = vld [vmem:[%s3] sm:$0x1]
  %v226 = vlaneseq
  %v227 = vshrl.u32 %v226, 7
  %v228 = vsub.s32 0, %v227
  %v229 = vrot.slane %v224, %v228
  %v231 = vadd.f32 %v208, %v229
  %v232 = vadd.f32 %v209, %v229
  %v233 = vadd.f32 %v210, %v229
  %v234 = vadd.f32 %v211, %v229
  %v235 = vadd.f32 %v212, %v229
  %v236 = vadd.f32 %v213, %v229
  %v237 = vadd.f32 %v214, %v229
  %v238 = vadd.f32 %v215, %v229
  %v239 = vadd.f32 %v216, %v229
  %v240 = vadd.f32 %v217, %v229
  %v241 = vadd.f32 %v218, %v229
  %v242 = vadd.f32 %v219, %v229
  %v243 = vadd.f32 %v220, %v229
  %v244 = vadd.f32 %v221, %v229
  %v245 = vadd.f32 %v222, %v229
  %v246 = vadd.f32 %v223, %v229
  %v247 = vpack.c.bf16 %v232, %v231
  %v248 = vpack.c.bf16 %v234, %v233
  %v249 = vpack.c.bf16 %v236, %v235
  %v250 = vpack.c.bf16 %v238, %v237
  %v251 = vpack.c.bf16 %v240, %v239
  %v252 = vpack.c.bf16 %v242, %v241
  %v253 = vpack.c.bf16 %v244, %v243
  %v254 = vpack.c.bf16 %v246, %v245
  %v263 = vunpack.c.l.b16 %v247
  %v264 = vunpack.c.h.b16 %v247
  %v265 = vunpack.c.l.b16 %v248
  %v266 = vunpack.c.h.b16 %v248
  %v267 = vunpack.c.l.b16 %v249
  %v268 = vunpack.c.h.b16 %v249
  %v269 = vunpack.c.l.b16 %v250
  %v270 = vunpack.c.h.b16 %v250
  %v271 = vunpack.c.l.b16 %v251
  %v272 = vunpack.c.h.b16 %v251
  %v273 = vunpack.c.l.b16 %v252
  %v274 = vunpack.c.h.b16 %v252
  %v275 = vunpack.c.l.b16 %v253
  %v276 = vunpack.c.h.b16 %v253
  %v277 = vunpack.c.l.b16 %v254
  %v278 = vunpack.c.h.b16 %v254
  %v279 = vpack.c.b16 %v263, %v263
  %v280 = vpack.c.b16 %v264, %v264
  %v281 = vpack.c.b16 %v265, %v265
  %v282 = vpack.c.b16 %v266, %v266
  %v283 = vpack.c.b16 %v267, %v267
  %v284 = vpack.c.b16 %v268, %v268
  %v285 = vpack.c.b16 %v269, %v269
  %v286 = vpack.c.b16 %v270, %v270
  %v287 = vpack.c.b16 %v271, %v271
  %v288 = vpack.c.b16 %v272, %v272
  %v289 = vpack.c.b16 %v273, %v273
  %v290 = vpack.c.b16 %v274, %v274
  %v291 = vpack.c.b16 %v275, %v275
  %v292 = vpack.c.b16 %v276, %v276
  %v293 = vpack.c.b16 %v277, %v277
  %v294 = vpack.c.b16 %v278, %v278
  %vm311 = vcmask 125952
  %312 = vst.msk [vmem:[%s4] sm:$0xf] %vm311, %v279
  %313 = vst.msk [vmem:[%s4 + $0x4] sm:$0xf] %vm311, %v280
  %314 = vst.msk [vmem:[%s4 + $0x8] sm:$0xf] %vm311, %v281
  %315 = vst.msk [vmem:[%s4 + $0xc] sm:$0xf] %vm311, %v282
  %316 = vst.msk [vmem:[%s4 + $0x10] sm:$0xf] %vm311, %v283
  %317 = vst.msk [vmem:[%s4 + $0x14] sm:$0xf] %vm311, %v284
  %318 = vst.msk [vmem:[%s4 + $0x18] sm:$0xf] %vm311, %v285
  %319 = vst.msk [vmem:[%s4 + $0x1c] sm:$0xf] %vm311, %v286
  %320 = vst.msk [vmem:[%s4 + $0x20] sm:$0xf] %vm311, %v287
  %321 = vst.msk [vmem:[%s4 + $0x24] sm:$0xf] %vm311, %v288
  %322 = vst.msk [vmem:[%s4 + $0x28] sm:$0xf] %vm311, %v289
  %323 = vst.msk [vmem:[%s4 + $0x2c] sm:$0xf] %vm311, %v290
  %324 = vst.msk [vmem:[%s4 + $0x30] sm:$0xf] %vm311, %v291
  %325 = vst.msk [vmem:[%s4 + $0x34] sm:$0xf] %vm311, %v292
  %326 = vst.msk [vmem:[%s4 + $0x38] sm:$0xf] %vm311, %v293
  %327 = vst.msk [vmem:[%s4 + $0x3c] sm:$0xf] %vm311, %v294
  // Predicated region
  $region18: #{ibp_backbone_forward.16} parent=0 // pred_check
    _
  $region19: #{ibp_backbone_forward.16} parent=0 // pred_check_branch
    %329 = sbr.rel (0) target = $region21
  $region20: #{ibp_backbone_forward.16} parent=0 // pred_region
    _
  $region21: #{ibp_backbone_forward.16} parent=0 // pred_fallthru
    _
  // Predicated region
  $region22: #{ibp_backbone_forward.16} parent=0 // pred_check
    _
  $region23: #{ibp_backbone_forward.16} parent=0 // pred_check_branch
    %331 = sbr.rel (0) target = $region25
  $region24: #{ibp_backbone_forward.16} parent=0 // pred_region
    _
  $region25: #{ibp_backbone_forward.16} parent=0 // pred_fallthru
    _

// kernel: ibp_backbone_forward.20
$region0: #{ibp_backbone_forward.20}
  #allocation0 [shape = 'u32[]', space=smem, size = 0x4, offset = 0x4, fixed_abs, tag = 'smem constant byte address 0x4 - core index']
  #allocation1 [shape = 'u32[144,128]{1,0:T(1,128)}', space=vmem, size = 0x12000, scoped, tag = 'internal scratch']
  %s0 = inlined_call_operand.vmem [shape: bf16[8,2,4,32], index: 0, kind: input, shape index: {}]
  %s1 = inlined_call_operand.vmem [shape: bf16[8,4,16], index: 1, kind: output, shape index: {}]
  %s2 = sld [smem:[#allocation0]]
  $region14: #{ibp_backbone_forward.20} parent=0
    _
  %s4 = ssub.s32 1, %s2
  %s5 = scalar_select 0, %s4, %s2
  // Predicated region
  $region2: #{ibp_backbone_forward.20} parent=0 // pred_check
    _
  $region3: #{ibp_backbone_forward.20} parent=0 // pred_check_branch
    %7 = sbr.rel (0) target = $region5
  $region4: #{ibp_backbone_forward.20} parent=0 // pred_region
    _
  $region5: #{ibp_backbone_forward.20} parent=0 // pred_fallthru
    _
  %v8 = vld [vmem:[%s0] sm:$0x3]
  %v9 = vld [vmem:[%s0 + $0x2] sm:$0x3]
  %v10 = vld [vmem:[%s0 + $0x4] sm:$0x3]
  %v11 = vld [vmem:[%s0 + $0x6] sm:$0x3]
  %v12 = vld [vmem:[%s0 + $0x8] sm:$0x3]
  %v13 = vld [vmem:[%s0 + $0xa] sm:$0x3]
  %v14 = vld [vmem:[%s0 + $0xc] sm:$0x3]
  %v15 = vld [vmem:[%s0 + $0xe] sm:$0x3]
  %v16 = vld [vmem:[%s0 + $0x10] sm:$0x3]
  %v17 = vld [vmem:[%s0 + $0x12] sm:$0x3]
  %v18 = vld [vmem:[%s0 + $0x14] sm:$0x3]
  %v19 = vld [vmem:[%s0 + $0x16] sm:$0x3]
  %v20 = vld [vmem:[%s0 + $0x18] sm:$0x3]
  %v21 = vld [vmem:[%s0 + $0x1a] sm:$0x3]
  %v22 = vld [vmem:[%s0 + $0x1c] sm:$0x3]
  %v23 = vld [vmem:[%s0 + $0x1e] sm:$0x3]
  %v24 = vmax.bf16 %v8, %v9
  %v25 = vmax.bf16 %v10, %v11
  %v26 = vmax.bf16 %v12, %v13
  %v27 = vmax.bf16 %v14, %v15
  %v28 = vmax.bf16 %v16, %v17
  %v29 = vmax.bf16 %v18, %v19
  %v30 = vmax.bf16 %v20, %v21
  %v31 = vmax.bf16 %v22, %v23
  %40 = vrot.lane.b32.xlu0 %v24, 112
  %v41 = vpop.permute.xlu0 %40
  %42 = vrot.lane.b32.xlu0 %v25, 112
  %v43 = vpop.permute.xlu0 %42
  %44 = vrot.lane.b32.xlu0 %v26, 112
  %v45 = vpop.permute.xlu0 %44
  %46 = vrot.lane.b32.xlu0 %v27, 112
  %v47 = vpop.permute.xlu0 %46
  %48 = vrot.lane.b32.xlu0 %v28, 112
  %v49 = vpop.permute.xlu0 %48
  %50 = vrot.lane.b32.xlu0 %v29, 112
  %v51 = vpop.permute.xlu0 %50
  %52 = vrot.lane.b32.xlu0 %v30, 112
  %v53 = vpop.permute.xlu0 %52
  %54 = vrot.lane.b32.xlu0 %v31, 112
  %v55 = vpop.permute.xlu0 %54
  %v64 = vmax.bf16 %v24, %v41
  %v65 = vmax.bf16 %v25, %v43
  %v66 = vmax.bf16 %v26, %v45
  %v67 = vmax.bf16 %v27, %v47
  %v68 = vmax.bf16 %v28, %v49
  %v69 = vmax.bf16 %v29, %v51
  %v70 = vmax.bf16 %v30, %v53
  %v71 = vmax.bf16 %v31, %v55
  %vm72 = vcmask 123904
  %73 = vst.msk [vmem:[%s1] sm:$0x3] %vm72, %v64
  %74 = vst.msk [vmem:[%s1 + $0x2] sm:$0x3] %vm72, %v65
  %75 = vst.msk [vmem:[%s1 + $0x4] sm:$0x3] %vm72, %v66
  %76 = vst.msk [vmem:[%s1 + $0x6] sm:$0x3] %vm72, %v67
  %77 = vst.msk [vmem:[%s1 + $0x8] sm:$0x3] %vm72, %v68
  %78 = vst.msk [vmem:[%s1 + $0xa] sm:$0x3] %vm72, %v69
  %79 = vst.msk [vmem:[%s1 + $0xc] sm:$0x3] %vm72, %v70
  %80 = vst.msk [vmem:[%s1 + $0xe] sm:$0x3] %vm72, %v71
  // Predicated region
  $region6: #{ibp_backbone_forward.20} parent=0 // pred_check
    _
  $region7: #{ibp_backbone_forward.20} parent=0 // pred_check_branch
    %82 = sbr.rel (0) target = $region9
  $region8: #{ibp_backbone_forward.20} parent=0 // pred_region
    _
  $region9: #{ibp_backbone_forward.20} parent=0 // pred_fallthru
    _
  // Predicated region
  $region10: #{ibp_backbone_forward.20} parent=0 // pred_check
    _
  $region11: #{ibp_backbone_forward.20} parent=0 // pred_check_branch
    %84 = sbr.rel (0) target = $region13
  $region12: #{ibp_backbone_forward.20} parent=0 // pred_region
    _
  $region13: #{ibp_backbone_forward.20} parent=0 // pred_fallthru
    _

// kernel: ibp_backbone_forward.19
$region0: #{ibp_backbone_forward.19}
  #allocation0 [shape = 'u32[]', space=smem, size = 0x4, offset = 0x4, fixed_abs, tag = 'smem constant byte address 0x4 - core index']
  #allocation1 [shape = 'u32[144,128]{1,0:T(1,128)}', space=vmem, size = 0x12000, scoped, tag = 'internal scratch']
  %s0 = inlined_call_operand.vmem [shape: bf16[128,8], index: 0, kind: input, shape index: {}]
  %s1 = inlined_call_operand.vmem [shape: bf16[8,16], index: 1, kind: input, shape index: {}]
  %s2 = inlined_call_operand.vmem [shape: f32[1,16], index: 2, kind: input, shape index: {}]
  %s3 = inlined_call_operand.vmem [shape: f32[1,16], index: 3, kind: input, shape index: {}]
  %s4 = inlined_call_operand.vmem [shape: bf16[128,16], index: 4, kind: input, shape index: {}]
  %s5 = inlined_call_operand.vmem [shape: bf16[128,16], index: 5, kind: output, shape index: {}]
  %s6 = sld [smem:[#allocation0]]
  $region30: #{ibp_backbone_forward.19} parent=0
    _
  %s8 = ssub.s32 1, %s6
  %s9 = scalar_select 0, %s8, %s6
  // Predicated region
  $region2: #{ibp_backbone_forward.19} parent=0 // pred_check
    _
  $region3: #{ibp_backbone_forward.19} parent=0 // pred_check_branch
    %11 = sbr.rel (0) target = $region5
  $region4: #{ibp_backbone_forward.19} parent=0 // pred_region
    _
  $region5: #{ibp_backbone_forward.19} parent=0 // pred_fallthru
    _
  // Predicated region
  $region6: #{ibp_backbone_forward.19} parent=0 // pred_check
    _
  $region7: #{ibp_backbone_forward.19} parent=0 // pred_check_branch
    %13 = sbr.rel (0) target = $region9
  $region8: #{ibp_backbone_forward.19} parent=0 // pred_region
    _
  $region9: #{ibp_backbone_forward.19} parent=0 // pred_fallthru
    _
  // Predicated region
  $region10: #{ibp_backbone_forward.19} parent=0 // pred_check
    _
  $region11: #{ibp_backbone_forward.19} parent=0 // pred_check_branch
    %15 = sbr.rel (0) target = $region13
  $region12: #{ibp_backbone_forward.19} parent=0 // pred_region
    _
  $region13: #{ibp_backbone_forward.19} parent=0 // pred_fallthru
    _
  // Predicated region
  $region14: #{ibp_backbone_forward.19} parent=0 // pred_check
    _
  $region15: #{ibp_backbone_forward.19} parent=0 // pred_check_branch
    %17 = sbr.rel (0) target = $region17
  $region16: #{ibp_backbone_forward.19} parent=0 // pred_region
    _
  $region17: #{ibp_backbone_forward.19} parent=0 // pred_fallthru
    _
  // Predicated region
  $region18: #{ibp_backbone_forward.19} parent=0 // pred_check
    _
  $region19: #{ibp_backbone_forward.19} parent=0 // pred_check_branch
    %19 = sbr.rel (0) target = $region21
  $region20: #{ibp_backbone_forward.19} parent=0 // pred_region
    _
  $region21: #{ibp_backbone_forward.19} parent=0 // pred_fallthru
    _
  %v21 = vld [vmem:[%s0] sm:$0xf]
  %v22 = vld [vmem:[%s0 + $0x4] sm:$0xf]
  %v23 = vld [vmem:[%s0 + $0x8] sm:$0xf]
  %v24 = vld [vmem:[%s0 + $0xc] sm:$0xf]
  %v25 = vld [vmem:[%s0 + $0x10] sm:$0xf]
  %v26 = vld [vmem:[%s0 + $0x14] sm:$0xf]
  %v27 = vld [vmem:[%s0 + $0x18] sm:$0xf]
  %v28 = vld [vmem:[%s0 + $0x1c] sm:$0xf]
  %v29 = vld [vmem:[%s0 + $0x20] sm:$0xf]
  %v30 = vld [vmem:[%s0 + $0x24] sm:$0xf]
  %v31 = vld [vmem:[%s0 + $0x28] sm:$0xf]
  %v32 = vld [vmem:[%s0 + $0x2c] sm:$0xf]
  %v33 = vld [vmem:[%s0 + $0x30] sm:$0xf]
  %v34 = vld [vmem:[%s0 + $0x34] sm:$0xf]
  %v35 = vld [vmem:[%s0 + $0x38] sm:$0xf]
  %v36 = vld [vmem:[%s0 + $0x3c] sm:$0xf]
  %v37 = vld [vmem:[%s1] sm:$0xf]
  %v54 = vunpack.c.l.b16 %v21
  %v55 = vunpack.c.l.b16 %v22
  %v56 = vunpack.c.l.b16 %v23
  %v57 = vunpack.c.l.b16 %v24
  %v58 = vunpack.c.l.b16 %v25
  %v59 = vunpack.c.l.b16 %v26
  %v60 = vunpack.c.l.b16 %v27
  %v61 = vunpack.c.l.b16 %v28
  %v62 = vunpack.c.l.b16 %v29
  %v63 = vunpack.c.l.b16 %v30
  %v64 = vunpack.c.l.b16 %v31
  %v65 = vunpack.c.l.b16 %v32
  %v66 = vunpack.c.l.b16 %v33
  %v67 = vunpack.c.l.b16 %v34
  %v68 = vunpack.c.l.b16 %v35
  %v69 = vunpack.c.l.b16 %v36
  %v70 = vpack.c.b16 %v55, %v54
  %v71 = vpack.c.b16 %v57, %v56
  %v72 = vpack.c.b16 %v59, %v58
  %v73 = vpack.c.b16 %v61, %v60
  %v74 = vpack.c.b16 %v63, %v62
  %v75 = vpack.c.b16 %v65, %v64
  %v76 = vpack.c.b16 %v67, %v66
  %v77 = vpack.c.b16 %v69, %v68
  %vm78 = vcmask 64512
  %v80 = vsel %vm78, %v70, 0
  %v83 = vsel %vm78, %v71, 0
  %v86 = vsel %vm78, %v72, 0
  %v89 = vsel %vm78, %v73, 0
  %v92 = vsel %vm78, %v74, 0
  %v95 = vsel %vm78, %v75, 0
  %v98 = vsel %vm78, %v76, 0
  %v101 = vsel %vm78, %v77, 0
  %vm103 = vcmask 1043456
  %v105 = vsel %vm103, %v37, 0
  %107 = vmatprep.subr.bf16.mxu0 0
  %108 = vmatpush1.bf16.msra.mxu0 %v105
  %109 = vmatprep.subr.bf16.mxu0 0
  %110 = vmatpush1.bf16.msra.mxu0 0
  %111 = vmatprep.subr.bf16.mxu0 0
  %112 = vmatpush1.bf16.msra.mxu0 0
  %113 = vmatprep.subr.bf16.mxu0 0
  %114 = vmatpush1.bf16.msra.mxu0 0
  %115 = vmatprep.subr.bf16.mxu0 0
  %116 = vmatpush1.bf16.msra.mxu0 0
  %117 = vmatprep.subr.bf16.mxu0 0
  %118 = vmatpush1.bf16.msra.mxu0 0
  %119 = vmatprep.subr.bf16.mxu0 0
  %120 = vmatpush1.bf16.msra.mxu0 0
  %121 = vmatprep.subr.bf16.mxu0 0
  %122 = vmatpush1.bf16.msra.mxu0 0
  %123 = vmatprep.subr.bf16.mxu0 0
  %124 = vmatpush1.bf16.msra.mxu0 0
  %125 = vmatprep.subr.bf16.mxu0 0
  %126 = vmatpush1.bf16.msra.mxu0 0
  %127 = vmatprep.subr.bf16.mxu0 0
  %128 = vmatpush1.bf16.msra.mxu0 0
  %129 = vmatprep.subr.bf16.mxu0 0
  %130 = vmatpush1.bf16.msra.mxu0 0
  %131 = vmatprep.subr.bf16.mxu0 0
  %132 = vmatpush1.bf16.msra.mxu0 0
  %133 = vmatprep.subr.bf16.mxu0 0
  %134 = vmatpush1.bf16.msra.mxu0 0
  %135 = vmatprep.subr.bf16.mxu0 0
  %136 = vmatpush1.bf16.msra.mxu0 0
  %137 = vmatprep.subr.bf16.mxu0 0
  %138 = vmatpush1.bf16.msra.mxu0 0
  %139 = vmatprep.mubr.bf16.mxu0 0
  %140 = vmatmul.mubr.bf16.gmra.mrb[0].mxu0 %v80
  %v141 = vpop.f32.mrb[0].mxu0
  %v142 = vadd.f32 0.0, %v141
  %v143 = vpop.f32.mrb[0].mxu0
  %v144 = vpop.f32.mrb[0].mxu0
  %v145 = vadd.f32 0.0, %v144
  %v146 = vpop.f32.mrb[0].mxu0
  %147 = vmatprep.mubr.bf16.mxu0 0
  %148 = vmatmul.mubr.bf16.gmra.mrb[0].mxu0 %v83
  %v149 = vpop.f32.mrb[0].mxu0
  %v150 = vadd.f32 0.0, %v149
  %v151 = vpop.f32.mrb[0].mxu0
  %v152 = vpop.f32.mrb[0].mxu0
  %v153 = vadd.f32 0.0, %v152
  %v154 = vpop.f32.mrb[0].mxu0
  %155 = vmatprep.mubr.bf16.mxu0 0
  %156 = vmatmul.mubr.bf16.gmra.mrb[0].mxu0 %v86
  %v157 = vpop.f32.mrb[0].mxu0
  %v158 = vadd.f32 0.0, %v157
  %v159 = vpop.f32.mrb[0].mxu0
  %v160 = vpop.f32.mrb[0].mxu0
  %v161 = vadd.f32 0.0, %v160
  %v162 = vpop.f32.mrb[0].mxu0
  %163 = vmatprep.mubr.bf16.mxu0 0
  %164 = vmatmul.mubr.bf16.gmra.mrb[0].mxu0 %v89
  %v165 = vpop.f32.mrb[0].mxu0
  %v166 = vadd.f32 0.0, %v165
  %v167 = vpop.f32.mrb[0].mxu0
  %v168 = vpop.f32.mrb[0].mxu0
  %v169 = vadd.f32 0.0, %v168
  %v170 = vpop.f32.mrb[0].mxu0
  %171 = vmatprep.mubr.bf16.mxu0 0
  %172 = vmatmul.mubr.bf16.gmra.mrb[0].mxu0 %v92
  %v173 = vpop.f32.mrb[0].mxu0
  %v174 = vadd.f32 0.0, %v173
  %v175 = vpop.f32.mrb[0].mxu0
  %v176 = vpop.f32.mrb[0].mxu0
  %v177 = vadd.f32 0.0, %v176
  %v178 = vpop.f32.mrb[0].mxu0
  %179 = vmatprep.mubr.bf16.mxu0 0
  %180 = vmatmul.mubr.bf16.gmra.mrb[0].mxu0 %v95
  %v181 = vpop.f32.mrb[0].mxu0
  %v182 = vadd.f32 0.0, %v181
  %v183 = vpop.f32.mrb[0].mxu0
  %v184 = vpop.f32.mrb[0].mxu0
  %v185 = vadd.f32 0.0, %v184
  %v186 = vpop.f32.mrb[0].mxu0
  %187 = vmatprep.mubr.bf16.mxu0 0
  %188 = vmatmul.mubr.bf16.gmra.mrb[0].mxu0 %v98
  %v189 = vpop.f32.mrb[0].mxu0
  %v190 = vadd.f32 0.0, %v189
  %v191 = vpop.f32.mrb[0].mxu0
  %v192 = vpop.f32.mrb[0].mxu0
  %v193 = vadd.f32 0.0, %v192
  %v194 = vpop.f32.mrb[0].mxu0
  %195 = vmatprep.mubr.bf16.mxu0 0
  %196 = vmatmul.mubr.bf16.gmra.mrb[0].mxu0 %v101
  %v197 = vpop.f32.mrb[0].mxu0
  %v198 = vadd.f32 0.0, %v197
  %v199 = vpop.f32.mrb[0].mxu0
  %v200 = vpop.f32.mrb[0].mxu0
  %v201 = vadd.f32 0.0, %v200
  %v202 = vpop.f32.mrb[0].mxu0
  %203 = vdwg.mxu0
  %v204 = vld [vmem:[%s2] sm:$0x1]
  %v206 = vlaneseq
  %v207 = vshrl.u32 %v206, 7
  %v208 = vsub.s32 0, %v207
  %v209 = vrot.slane %v204, %v208
  %v211 = vmul.f32 %v142, %v209
  %v212 = vmul.f32 %v145, %v209
  %v213 = vmul.f32 %v150, %v209
  %v214 = vmul.f32 %v153, %v209
  %v215 = vmul.f32 %v158, %v209
  %v216 = vmul.f32 %v161, %v209
  %v217 = vmul.f32 %v166, %v209
  %v218 = vmul.f32 %v169, %v209
  %v219 = vmul.f32 %v174, %v209
  %v220 = vmul.f32 %v177, %v209
  %v221 = vmul.f32 %v182, %v209
  %v222 = vmul.f32 %v185, %v209
  %v223 = vmul.f32 %v190, %v209
  %v224 = vmul.f32 %v193, %v209
  %v225 = vmul.f32 %v198, %v209
  %v226 = vmul.f32 %v201, %v209
  %v227 = vld [vmem:[%s3] sm:$0x1]
  %v229 = vlaneseq
  %v230 = vshrl.u32 %v229, 7
  %v231 = vsub.s32 0, %v230
  %v232 = vrot.slane %v227, %v231
  %v234 = vadd.f32 %v211, %v232
  %v235 = vadd.f32 %v212, %v232
  %v236 = vadd.f32 %v213, %v232
  %v237 = vadd.f32 %v214, %v232
  %v238 = vadd.f32 %v215, %v232
  %v239 = vadd.f32 %v216, %v232
  %v240 = vadd.f32 %v217, %v232
  %v241 = vadd.f32 %v218, %v232
  %v242 = vadd.f32 %v219, %v232
  %v243 = vadd.f32 %v220, %v232
  %v244 = vadd.f32 %v221, %v232
  %v245 = vadd.f32 %v222, %v232
  %v246 = vadd.f32 %v223, %v232
  %v247 = vadd.f32 %v224, %v232
  %v248 = vadd.f32 %v225, %v232
  %v249 = vadd.f32 %v226, %v232
  %v250 = vld [vmem:[%s4] sm:$0xf]
  %v251 = vld [vmem:[%s4 + $0x4] sm:$0xf]
  %v252 = vld [vmem:[%s4 + $0x8] sm:$0xf]
  %v253 = vld [vmem:[%s4 + $0xc] sm:$0xf]
  %v254 = vld [vmem:[%s4 + $0x10] sm:$0xf]
  %v255 = vld [vmem:[%s4 + $0x14] sm:$0xf]
  %v256 = vld [vmem:[%s4 + $0x18] sm:$0xf]
  %v257 = vld [vmem:[%s4 + $0x1c] sm:$0xf]
  %v258 = vld [vmem:[%s4 + $0x20] sm:$0xf]
  %v259 = vld [vmem:[%s4 + $0x24] sm:$0xf]
  %v260 = vld [vmem:[%s4 + $0x28] sm:$0xf]
  %v261 = vld [vmem:[%s4 + $0x2c] sm:$0xf]
  %v262 = vld [vmem:[%s4 + $0x30] sm:$0xf]
  %v263 = vld [vmem:[%s4 + $0x34] sm:$0xf]
  %v264 = vld [vmem:[%s4 + $0x38] sm:$0xf]
  %v265 = vld [vmem:[%s4 + $0x3c] sm:$0xf]
  %v266 = vunpack.c.l.bf16 %v250
  %v267 = vunpack.c.l.bf16 %v251
  %v268 = vunpack.c.l.bf16 %v252
  %v269 = vunpack.c.l.bf16 %v253
  %v270 = vunpack.c.l.bf16 %v254
  %v271 = vunpack.c.l.bf16 %v255
  %v272 = vunpack.c.l.bf16 %v256
  %v273 = vunpack.c.l.bf16 %v257
  %v274 = vunpack.c.l.bf16 %v258
  %v275 = vunpack.c.l.bf16 %v259
  %v276 = vunpack.c.l.bf16 %v260
  %v277 = vunpack.c.l.bf16 %v261
  %v278 = vunpack.c.l.bf16 %v262
  %v279 = vunpack.c.l.bf16 %v263
  %v280 = vunpack.c.l.bf16 %v264
  %v281 = vunpack.c.l.bf16 %v265
  %v282 = vadd.f32 %v234, %v266
  %v283 = vadd.f32 %v235, %v267
  %v284 = vadd.f32 %v236, %v268
  %v285 = vadd.f32 %v237, %v269
  %v286 = vadd.f32 %v238, %v270
  %v287 = vadd.f32 %v239, %v271
  %v288 = vadd.f32 %v240, %v272
  %v289 = vadd.f32 %v241, %v273
  %v290 = vadd.f32 %v242, %v274
  %v291 = vadd.f32 %v243, %v275
  %v292 = vadd.f32 %v244, %v276
  %v293 = vadd.f32 %v245, %v277
  %v294 = vadd.f32 %v246, %v278
  %v295 = vadd.f32 %v247, %v279
  %v296 = vadd.f32 %v248, %v280
  %v297 = vadd.f32 %v249, %v281
  %v298 = vmax.f32 %v282, 0.0
  %v299 = vmax.f32 %v283, 0.0
  %v300 = vmax.f32 %v284, 0.0
  %v301 = vmax.f32 %v285, 0.0
  %v302 = vmax.f32 %v286, 0.0
  %v303 = vmax.f32 %v287, 0.0
  %v304 = vmax.f32 %v288, 0.0
  %v305 = vmax.f32 %v289, 0.0
  %v306 = vmax.f32 %v290, 0.0
  %v307 = vmax.f32 %v291, 0.0
  %v308 = vmax.f32 %v292, 0.0
  %v309 = vmax.f32 %v293, 0.0
  %v310 = vmax.f32 %v294, 0.0
  %v311 = vmax.f32 %v295, 0.0
  %v312 = vmax.f32 %v296, 0.0
  %v313 = vmax.f32 %v297, 0.0
  %v314 = vpack.c.bf16 %v299, %v298
  %v315 = vpack.c.bf16 %v301, %v300
  %v316 = vpack.c.bf16 %v303, %v302
  %v317 = vpack.c.bf16 %v305, %v304
  %v318 = vpack.c.bf16 %v307, %v306
  %v319 = vpack.c.bf16 %v309, %v308
  %v320 = vpack.c.bf16 %v311, %v310
  %v321 = vpack.c.bf16 %v313, %v312
  %v330 = vunpack.c.l.b16 %v314
  %v331 = vunpack.c.h.b16 %v314
  %v332 = vunpack.c.l.b16 %v315
  %v333 = vunpack.c.h.b16 %v315
  %v334 = vunpack.c.l.b16 %v316
  %v335 = vunpack.c.h.b16 %v316
  %v336 = vunpack.c.l.b16 %v317
  %v337 = vunpack.c.h.b16 %v317
  %v338 = vunpack.c.l.b16 %v318
  %v339 = vunpack.c.h.b16 %v318
  %v340 = vunpack.c.l.b16 %v319
  %v341 = vunpack.c.h.b16 %v319
  %v342 = vunpack.c.l.b16 %v320
  %v343 = vunpack.c.h.b16 %v320
  %v344 = vunpack.c.l.b16 %v321
  %v345 = vunpack.c.h.b16 %v321
  %v346 = vpack.c.b16 %v330, %v330
  %v347 = vpack.c.b16 %v331, %v331
  %v348 = vpack.c.b16 %v332, %v332
  %v349 = vpack.c.b16 %v333, %v333
  %v350 = vpack.c.b16 %v334, %v334
  %v351 = vpack.c.b16 %v335, %v335
  %v352 = vpack.c.b16 %v336, %v336
  %v353 = vpack.c.b16 %v337, %v337
  %v354 = vpack.c.b16 %v338, %v338
  %v355 = vpack.c.b16 %v339, %v339
  %v356 = vpack.c.b16 %v340, %v340
  %v357 = vpack.c.b16 %v341, %v341
  %v358 = vpack.c.b16 %v342, %v342
  %v359 = vpack.c.b16 %v343, %v343
  %v360 = vpack.c.b16 %v344, %v344
  %v361 = vpack.c.b16 %v345, %v345
  %vm378 = vcmask 125952
  %379 = vst.msk [vmem:[%s5] sm:$0xf] %vm378, %v346
  %380 = vst.msk [vmem:[%s5 + $0x4] sm:$0xf] %vm378, %v347
  %381 = vst.msk [vmem:[%s5 + $0x8] sm:$0xf] %vm378, %v348
  %382 = vst.msk [vmem:[%s5 + $0xc] sm:$0xf] %vm378, %v349
  %383 = vst.msk [vmem:[%s5 + $0x10] sm:$0xf] %vm378, %v350
  %384 = vst.msk [vmem:[%s5 + $0x14] sm:$0xf] %vm378, %v351
  %385 = vst.msk [vmem:[%s5 + $0x18] sm:$0xf] %vm378, %v352
  %386 = vst.msk [vmem:[%s5 + $0x1c] sm:$0xf] %vm378, %v353
  %387 = vst.msk [vmem:[%s5 + $0x20] sm:$0xf] %vm378, %v354
  %388 = vst.msk [vmem:[%s5 + $0x24] sm:$0xf] %vm378, %v355
  %389 = vst.msk [vmem:[%s5 + $0x28] sm:$0xf] %vm378, %v356
  %390 = vst.msk [vmem:[%s5 + $0x2c] sm:$0xf] %vm378, %v357
  %391 = vst.msk [vmem:[%s5 + $0x30] sm:$0xf] %vm378, %v358
  %392 = vst.msk [vmem:[%s5 + $0x34] sm:$0xf] %vm378, %v359
  %393 = vst.msk [vmem:[%s5 + $0x38] sm:$0xf] %vm378, %v360
  %394 = vst.msk [vmem:[%s5 + $0x3c] sm:$0xf] %vm378, %v361
  // Predicated region
  $region22: #{ibp_backbone_forward.19} parent=0 // pred_check
    _
  $region23: #{ibp_backbone_forward.19} parent=0 // pred_check_branch
    %396 = sbr.rel (0) target = $region25
  $region24: #{ibp_backbone_forward.19} parent=0 // pred_region
    _
  $region25: #{ibp_backbone_forward.19} parent=0 // pred_fallthru
    _
  // Predicated region
  $region26: #{ibp_backbone_forward.19} parent=0 // pred_check
    _
  $region27: #{ibp_backbone_forward.19} parent=0 // pred_check_branch
    %398 = sbr.rel (0) target = $region29
  $region28: #{ibp_backbone_forward.19} parent=0 // pred_region
    _
  $region29: #{ibp_backbone_forward.19} parent=0 // pred_fallthru
    _

// kernel: ibp_backbone_forward.21
$region0: #{ibp_backbone_forward.21}
  #allocation0 [shape = 'u32[]', space=smem, size = 0x4, offset = 0x4, fixed_abs, tag = 'smem constant byte address 0x4 - core index']
  #allocation1 [shape = 'u32[144,128]{1,0:T(1,128)}', space=vmem, size = 0x12000, scoped, tag = 'internal scratch']
  %s0 = inlined_call_operand.vmem [shape: bf16[32,16], index: 0, kind: input, shape index: {}]
  %s1 = inlined_call_operand.vmem [shape: bf16[16,8], index: 1, kind: input, shape index: {}]
  %s2 = inlined_call_operand.vmem [shape: f32[1,8], index: 2, kind: input, shape index: {}]
  %s3 = inlined_call_operand.vmem [shape: f32[1,8], index: 3, kind: input, shape index: {}]
  %s4 = inlined_call_operand.vmem [shape: bf16[32,8], index: 4, kind: output, shape index: {}]
  %s5 = sld [smem:[#allocation0]]
  $region26: #{ibp_backbone_forward.21} parent=0
    _
  %s7 = ssub.s32 1, %s5
  %s8 = scalar_select 0, %s7, %s5
  // Predicated region
  $region2: #{ibp_backbone_forward.21} parent=0 // pred_check
    _
  $region3: #{ibp_backbone_forward.21} parent=0 // pred_check_branch
    %10 = sbr.rel (0) target = $region5
  $region4: #{ibp_backbone_forward.21} parent=0 // pred_region
    _
  $region5: #{ibp_backbone_forward.21} parent=0 // pred_fallthru
    _
  // Predicated region
  $region6: #{ibp_backbone_forward.21} parent=0 // pred_check
    _
  $region7: #{ibp_backbone_forward.21} parent=0 // pred_check_branch
    %12 = sbr.rel (0) target = $region9
  $region8: #{ibp_backbone_forward.21} parent=0 // pred_region
    _
  $region9: #{ibp_backbone_forward.21} parent=0 // pred_fallthru
    _
  // Predicated region
  $region10: #{ibp_backbone_forward.21} parent=0 // pred_check
    _
  $region11: #{ibp_backbone_forward.21} parent=0 // pred_check_branch
    %14 = sbr.rel (0) target = $region13
  $region12: #{ibp_backbone_forward.21} parent=0 // pred_region
    _
  $region13: #{ibp_backbone_forward.21} parent=0 // pred_fallthru
    _
  // Predicated region
  $region14: #{ibp_backbone_forward.21} parent=0 // pred_check
    _
  $region15: #{ibp_backbone_forward.21} parent=0 // pred_check_branch
    %16 = sbr.rel (0) target = $region17
  $region16: #{ibp_backbone_forward.21} parent=0 // pred_region
    _
  $region17: #{ibp_backbone_forward.21} parent=0 // pred_fallthru
    _
  %v18 = vld [vmem:[%s0] sm:$0xf]
  %v19 = vld [vmem:[%s0 + $0x4] sm:$0xf]
  %v20 = vld [vmem:[%s0 + $0x8] sm:$0xf]
  %v21 = vld [vmem:[%s0 + $0xc] sm:$0xf]
  %v22 = vld [vmem:[%s1] sm:$0xf]
  %v23 = vld [vmem:[%s1 + $0x4] sm:$0xf]
  %v28 = vunpack.c.l.b16 %v18
  %v29 = vunpack.c.l.b16 %v19
  %v30 = vunpack.c.l.b16 %v20
  %v31 = vunpack.c.l.b16 %v21
  %v32 = vpack.c.b16 %v29, %v28
  %v33 = vpack.c.b16 %v31, %v30
  %v36 = vunpack.c.l.b16 %v22
  %v37 = vunpack.c.l.b16 %v23
  %v38 = vpack.c.b16 %v37, %v36
  %vm40 = vcmask 130048
  %v42 = vsel %vm40, %v32, 0
  %v45 = vsel %vm40, %v33, 0
  %47 = vmatprep.subr.bf16.mxu0 0
  %48 = vmatpush1.bf16.msra.mxu0 %v38
  %49 = vmatprep.subr.bf16.mxu0 0
  %50 = vmatpush1.bf16.msra.mxu0 0
  %51 = vmatprep.subr.bf16.mxu0 0
  %52 = vmatpush1.bf16.msra.mxu0 0
  %53 = vmatprep.subr.bf16.mxu0 0
  %54 = vmatpush1.bf16.msra.mxu0 0
  %55 = vmatprep.subr.bf16.mxu0 0
  %56 = vmatpush1.bf16.msra.mxu0 0
  %57 = vmatprep.subr.bf16.mxu0 0
  %58 = vmatpush1.bf16.msra.mxu0 0
  %59 = vmatprep.subr.bf16.mxu0 0
  %60 = vmatpush1.bf16.msra.mxu0 0
  %61 = vmatprep.subr.bf16.mxu0 0
  %62 = vmatpush1.bf16.msra.mxu0 0
  %63 = vmatprep.subr.bf16.mxu0 0
  %64 = vmatpush1.bf16.msra.mxu0 0
  %65 = vmatprep.subr.bf16.mxu0 0
  %66 = vmatpush1.bf16.msra.mxu0 0
  %67 = vmatprep.subr.bf16.mxu0 0
  %68 = vmatpush1.bf16.msra.mxu0 0
  %69 = vmatprep.subr.bf16.mxu0 0
  %70 = vmatpush1.bf16.msra.mxu0 0
  %71 = vmatprep.subr.bf16.mxu0 0
  %72 = vmatpush1.bf16.msra.mxu0 0
  %73 = vmatprep.subr.bf16.mxu0 0
  %74 = vmatpush1.bf16.msra.mxu0 0
  %75 = vmatprep.subr.bf16.mxu0 0
  %76 = vmatpush1.bf16.msra.mxu0 0
  %77 = vmatprep.subr.bf16.mxu0 0
  %78 = vmatpush1.bf16.msra.mxu0 0
  %79 = vmatprep.mubr.bf16.mxu0 0
  %80 = vmatmul.mubr.bf16.gmra.mrb[0].mxu0 %v42
  %v81 = vpop.f32.mrb[0].mxu0
  %v82 = vadd.f32 0.0, %v81
  %v83 = vpop.f32.mrb[0].mxu0
  %v84 = vpop.f32.mrb[0].mxu0
  %v85 = vadd.f32 0.0, %v84
  %v86 = vpop.f32.mrb[0].mxu0
  %87 = vmatprep.mubr.bf16.mxu0 0
  %88 = vmatmul.mubr.bf16.gmra.mrb[0].mxu0 %v45
  %v89 = vpop.f32.mrb[0].mxu0
  %v90 = vadd.f32 0.0, %v89
  %v91 = vpop.f32.mrb[0].mxu0
  %v92 = vpop.f32.mrb[0].mxu0
  %v93 = vadd.f32 0.0, %v92
  %v94 = vpop.f32.mrb[0].mxu0
  %95 = vdwg.mxu0
  %v96 = vld [vmem:[%s2] sm:$0x1]
  %v98 = vlaneseq
  %v99 = vshrl.u32 %v98, 7
  %v100 = vsub.s32 0, %v99
  %v101 = vrot.slane %v96, %v100
  %v103 = vmul.f32 %v82, %v101
  %v104 = vmul.f32 %v85, %v101
  %v105 = vmul.f32 %v90, %v101
  %v106 = vmul.f32 %v93, %v101
  %v107 = vld [vmem:[%s3] sm:$0x1]
  %v109 = vlaneseq
  %v110 = vshrl.u32 %v109, 7
  %v111 = vsub.s32 0, %v110
  %v112 = vrot.slane %v107, %v111
  %v114 = vadd.f32 %v103, %v112
  %v115 = vadd.f32 %v104, %v112
  %v116 = vadd.f32 %v105, %v112
  %v117 = vadd.f32 %v106, %v112
  %v118 = vmax.f32 %v114, 0.0
  %v119 = vmax.f32 %v115, 0.0
  %v120 = vmax.f32 %v116, 0.0
  %v121 = vmax.f32 %v117, 0.0
  %v122 = vpack.c.bf16 %v119, %v118
  %v123 = vpack.c.bf16 %v121, %v120
  %v126 = vunpack.c.l.b16 %v122
  %v127 = vunpack.c.h.b16 %v122
  %v128 = vunpack.c.l.b16 %v123
  %v129 = vunpack.c.h.b16 %v123
  %v130 = vpack.c.b16 %v126, %v126
  %v131 = vpack.c.b16 %v127, %v127
  %v132 = vpack.c.b16 %v128, %v128
  %v133 = vpack.c.b16 %v129, %v129
  %vm138 = vcmask 60416
  %139 = vst.msk [vmem:[%s4] sm:$0xf] %vm138, %v130
  %140 = vst.msk [vmem:[%s4 + $0x4] sm:$0xf] %vm138, %v131
  %141 = vst.msk [vmem:[%s4 + $0x8] sm:$0xf] %vm138, %v132
  %142 = vst.msk [vmem:[%s4 + $0xc] sm:$0xf] %vm138, %v133
  // Predicated region
  $region18: #{ibp_backbone_forward.21} parent=0 // pred_check
    _
  $region19: #{ibp_backbone_forward.21} parent=0 // pred_check_branch
    %144 = sbr.rel (0) target = $region21
  $region20: #{ibp_backbone_forward.21} parent=0 // pred_region
    _
  $region21: #{ibp_backbone_forward.21} parent=0 // pred_fallthru
    _
  // Predicated region
  $region22: #{ibp_backbone_forward.21} parent=0 // pred_check
    _
  $region23: #{ibp_backbone_forward.21} parent=0 // pred_check_branch
    %146 = sbr.rel (0) target = $region25
  $region24: #{ibp_backbone_forward.21} parent=0 // pred_region
    _
  $region25: #{ibp_backbone_forward.21} parent=0 // pred_fallthru
    _

// kernel: ibp_backbone_forward.22
$region0: #{ibp_backbone_forward.22}
  #allocation0 [shape = 'u32[]', space=smem, size = 0x4, offset = 0x4, fixed_abs, tag = 'smem constant byte address 0x4 - core index']
  #allocation1 [shape = 'u32[144,128]{1,0:T(1,128)}', space=vmem, size = 0x12000, scoped, tag = 'internal scratch']
  %s0 = inlined_call_operand.vmem [shape: bf16[32,72], index: 0, kind: input, shape index: {}]
  %s1 = inlined_call_operand.vmem [shape: bf16[72,8], index: 1, kind: input, shape index: {}]
  %s2 = inlined_call_operand.vmem [shape: f32[1,8], index: 2, kind: input, shape index: {}]
  %s3 = inlined_call_operand.vmem [shape: f32[1,8], index: 3, kind: input, shape index: {}]
  %s4 = inlined_call_operand.vmem [shape: bf16[32,8], index: 4, kind: output, shape index: {}]
  %s5 = sld [smem:[#allocation0]]
  $region26: #{ibp_backbone_forward.22} parent=0
    _
  %s7 = ssub.s32 1, %s5
  %s8 = scalar_select 0, %s7, %s5
  // Predicated region
  $region2: #{ibp_backbone_forward.22} parent=0 // pred_check
    _
  $region3: #{ibp_backbone_forward.22} parent=0 // pred_check_branch
    %10 = sbr.rel (0) target = $region5
  $region4: #{ibp_backbone_forward.22} parent=0 // pred_region
    _
  $region5: #{ibp_backbone_forward.22} parent=0 // pred_fallthru
    _
  // Predicated region
  $region6: #{ibp_backbone_forward.22} parent=0 // pred_check
    _
  $region7: #{ibp_backbone_forward.22} parent=0 // pred_check_branch
    %12 = sbr.rel (0) target = $region9
  $region8: #{ibp_backbone_forward.22} parent=0 // pred_region
    _
  $region9: #{ibp_backbone_forward.22} parent=0 // pred_fallthru
    _
  // Predicated region
  $region10: #{ibp_backbone_forward.22} parent=0 // pred_check
    _
  $region11: #{ibp_backbone_forward.22} parent=0 // pred_check_branch
    %14 = sbr.rel (0) target = $region13
  $region12: #{ibp_backbone_forward.22} parent=0 // pred_region
    _
  $region13: #{ibp_backbone_forward.22} parent=0 // pred_fallthru
    _
  // Predicated region
  $region14: #{ibp_backbone_forward.22} parent=0 // pred_check
    _
  $region15: #{ibp_backbone_forward.22} parent=0 // pred_check_branch
    %16 = sbr.rel (0) target = $region17
  $region16: #{ibp_backbone_forward.22} parent=0 // pred_region
    _
  $region17: #{ibp_backbone_forward.22} parent=0 // pred_fallthru
    _
  %v18 = vld [vmem:[%s0] sm:$0xf]
  %v19 = vld [vmem:[%s0 + $0x4] sm:$0xf]
  %v20 = vld [vmem:[%s0 + $0x8] sm:$0xf]
  %v21 = vld [vmem:[%s0 + $0xc] sm:$0xf]
  %v22 = vld [vmem:[%s1] sm:$0xf]
  %v23 = vld [vmem:[%s1 + $0x4] sm:$0xf]
  %v24 = vld [vmem:[%s1 + $0x8] sm:$0xf]
  %v25 = vld [vmem:[%s1 + $0xc] sm:$0xf]
  %v26 = vld [vmem:[%s1 + $0x10] sm:$0xf]
  %v27 = vld [vmem:[%s1 + $0x14] sm:$0xf]
  %v28 = vld [vmem:[%s1 + $0x18] sm:$0xf]
  %v29 = vld [vmem:[%s1 + $0x1c] sm:$0xf]
  %v30 = vld [vmem:[%s1 + $0x20] sm:$0xf]
  %v35 = vunpack.c.l.b16 %v18
  %v36 = vunpack.c.l.b16 %v19
  %v37 = vunpack.c.l.b16 %v20
  %v38 = vunpack.c.l.b16 %v21
  %v39 = vpack.c.b16 %v36, %v35
  %v40 = vpack.c.b16 %v38, %v37
  %v50 = vunpack.c.l.b16 %v22
  %v51 = vunpack.c.l.b16 %v23
  %v52 = vunpack.c.l.b16 %v24
  %v53 = vunpack.c.l.b16 %v25
  %v54 = vunpack.c.l.b16 %v26
  %v55 = vunpack.c.l.b16 %v27
  %v56 = vunpack.c.l.b16 %v28
  %v57 = vunpack.c.l.b16 %v29
  %v58 = vunpack.c.l.b16 %v30
  %v59 = vpack.c.b16 %v51, %v50
  %v60 = vpack.c.b16 %v53, %v52
  %v61 = vpack.c.b16 %v55, %v54
  %v62 = vpack.c.b16 %v57, %v56
  %v63 = vpack.c.b16 %v58, %v58
  %vm68 = vcmask 588800
  %v70 = vsel %vm68, %v39, 0
  %v73 = vsel %vm68, %v40, 0
  %vm75 = vcmask 1043456
  %v77 = vsel %vm75, %v63, 0
  %79 = vmatprep.subr.bf16.mxu0 0
  %80 = vmatpush1.bf16.msra.mxu0 %v59
  %81 = vmatprep.subr.bf16.mxu0 0
  %82 = vmatpush1.bf16.msra.mxu0 %v60
  %83 = vmatprep.subr.bf16.mxu0 0
  %84 = vmatpush1.bf16.msra.mxu0 %v61
  %85 = vmatprep.subr.bf16.mxu0 0
  %86 = vmatpush1.bf16.msra.mxu0 %v62
  %87 = vmatprep.subr.bf16.mxu0 0
  %88 = vmatpush1.bf16.msra.mxu0 %v77
  %89 = vmatprep.subr.bf16.mxu0 0
  %90 = vmatpush1.bf16.msra.mxu0 0
  %91 = vmatprep.subr.bf16.mxu0 0
  %92 = vmatpush1.bf16.msra.mxu0 0
  %93 = vmatprep.subr.bf16.mxu0 0
  %94 = vmatpush1.bf16.msra.mxu0 0
  %95 = vmatprep.subr.bf16.mxu0 0
  %96 = vmatpush1.bf16.msra.mxu0 0
  %97 = vmatprep.subr.bf16.mxu0 0
  %98 = vmatpush1.bf16.msra.mxu0 0
  %99 = vmatprep.subr.bf16.mxu0 0
  %100 = vmatpush1.bf16.msra.mxu0 0
  %101 = vmatprep.subr.bf16.mxu0 0
  %102 = vmatpush1.bf16.msra.mxu0 0
  %103 = vmatprep.subr.bf16.mxu0 0
  %104 = vmatpush1.bf16.msra.mxu0 0
  %105 = vmatprep.subr.bf16.mxu0 0
  %106 = vmatpush1.bf16.msra.mxu0 0
  %107 = vmatprep.subr.bf16.mxu0 0
  %108 = vmatpush1.bf16.msra.mxu0 0
  %109 = vmatprep.subr.bf16.mxu0 0
  %110 = vmatpush1.bf16.msra.mxu0 0
  %111 = vmatprep.mubr.bf16.mxu0 0
  %112 = vmatmul.mubr.bf16.gmra.mrb[0].mxu0 %v70
  %v113 = vpop.f32.mrb[0].mxu0
  %v114 = vadd.f32 0.0, %v113
  %v115 = vpop.f32.mrb[0].mxu0
  %v116 = vpop.f32.mrb[0].mxu0
  %v117 = vadd.f32 0.0, %v116
  %v118 = vpop.f32.mrb[0].mxu0
  %119 = vmatprep.mubr.bf16.mxu0 0
  %120 = vmatmul.mubr.bf16.gmra.mrb[0].mxu0 %v73
  %v121 = vpop.f32.mrb[0].mxu0
  %v122 = vadd.f32 0.0, %v121
  %v123 = vpop.f32.mrb[0].mxu0
  %v124 = vpop.f32.mrb[0].mxu0
  %v125 = vadd.f32 0.0, %v124
  %v126 = vpop.f32.mrb[0].mxu0
  %127 = vdwg.mxu0
  %v128 = vld [vmem:[%s2] sm:$0x1]
  %v130 = vlaneseq
  %v131 = vshrl.u32 %v130, 7
  %v132 = vsub.s32 0, %v131
  %v133 = vrot.slane %v128, %v132
  %v135 = vmul.f32 %v114, %v133
  %v136 = vmul.f32 %v117, %v133
  %v137 = vmul.f32 %v122, %v133
  %v138 = vmul.f32 %v125, %v133
  %v139 = vld [vmem:[%s3] sm:$0x1]
  %v141 = vlaneseq
  %v142 = vshrl.u32 %v141, 7
  %v143 = vsub.s32 0, %v142
  %v144 = vrot.slane %v139, %v143
  %v146 = vadd.f32 %v135, %v144
  %v147 = vadd.f32 %v136, %v144
  %v148 = vadd.f32 %v137, %v144
  %v149 = vadd.f32 %v138, %v144
  %v150 = vmax.f32 %v146, 0.0
  %v151 = vmax.f32 %v147, 0.0
  %v152 = vmax.f32 %v148, 0.0
  %v153 = vmax.f32 %v149, 0.0
  %v154 = vpack.c.bf16 %v151, %v150
  %v155 = vpack.c.bf16 %v153, %v152
  %v158 = vunpack.c.l.b16 %v154
  %v159 = vunpack.c.h.b16 %v154
  %v160 = vunpack.c.l.b16 %v155
  %v161 = vunpack.c.h.b16 %v155
  %v162 = vpack.c.b16 %v158, %v158
  %v163 = vpack.c.b16 %v159, %v159
  %v164 = vpack.c.b16 %v160, %v160
  %v165 = vpack.c.b16 %v161, %v161
  %vm170 = vcmask 60416
  %171 = vst.msk [vmem:[%s4] sm:$0xf] %vm170, %v162
  %172 = vst.msk [vmem:[%s4 + $0x4] sm:$0xf] %vm170, %v163
  %173 = vst.msk [vmem:[%s4 + $0x8] sm:$0xf] %vm170, %v164
  %174 = vst.msk [vmem:[%s4 + $0xc] sm:$0xf] %vm170, %v165
  // Predicated region
  $region18: #{ibp_backbone_forward.22} parent=0 // pred_check
    _
  $region19: #{ibp_backbone_forward.22} parent=0 // pred_check_branch
    %176 = sbr.rel (0) target = $region21
  $region20: #{ibp_backbone_forward.22} parent=0 // pred_region
    _
  $region21: #{ibp_backbone_forward.22} parent=0 // pred_fallthru
    _
  // Predicated region
  $region22: #{ibp_backbone_forward.22} parent=0 // pred_check
    _
  $region23: #{ibp_backbone_forward.22} parent=0 // pred_check_branch
    %178 = sbr.rel (0) target = $region25
  $region24: #{ibp_backbone_forward.22} parent=0 // pred_region
    _
  $region25: #{ibp_backbone_forward.22} parent=0 // pred_fallthru
    _

// kernel: ibp_backbone_forward.23
$region0: #{ibp_backbone_forward.23}
  #allocation0 [shape = 'u32[]', space=smem, size = 0x4, offset = 0x4, fixed_abs, tag = 'smem constant byte address 0x4 - core index']
  #allocation1 [shape = 'u32[144,128]{1,0:T(1,128)}', space=vmem, size = 0x12000, scoped, tag = 'internal scratch']
  %s0 = inlined_call_operand.vmem [shape: bf16[32,8], index: 0, kind: input, shape index: {}]
  %s1 = inlined_call_operand.vmem [shape: bf16[8,16], index: 1, kind: input, shape index: {}]
  %s2 = inlined_call_operand.vmem [shape: f32[1,16], index: 2, kind: input, shape index: {}]
  %s3 = inlined_call_operand.vmem [shape: f32[1,16], index: 3, kind: input, shape index: {}]
  %s4 = inlined_call_operand.vmem [shape: bf16[32,16], index: 4, kind: input, shape index: {}]
  %s5 = inlined_call_operand.vmem [shape: bf16[32,16], index: 5, kind: output, shape index: {}]
  %s6 = sld [smem:[#allocation0]]
  $region30: #{ibp_backbone_forward.23} parent=0
    _
  %s8 = ssub.s32 1, %s6
  %s9 = scalar_select 0, %s8, %s6
  // Predicated region
  $region2: #{ibp_backbone_forward.23} parent=0 // pred_check
    _
  $region3: #{ibp_backbone_forward.23} parent=0 // pred_check_branch
    %11 = sbr.rel (0) target = $region5
  $region4: #{ibp_backbone_forward.23} parent=0 // pred_region
    _
  $region5: #{ibp_backbone_forward.23} parent=0 // pred_fallthru
    _
  // Predicated region
  $region6: #{ibp_backbone_forward.23} parent=0 // pred_check
    _
  $region7: #{ibp_backbone_forward.23} parent=0 // pred_check_branch
    %13 = sbr.rel (0) target = $region9
  $region8: #{ibp_backbone_forward.23} parent=0 // pred_region
    _
  $region9: #{ibp_backbone_forward.23} parent=0 // pred_fallthru
    _
  // Predicated region
  $region10: #{ibp_backbone_forward.23} parent=0 // pred_check
    _
  $region11: #{ibp_backbone_forward.23} parent=0 // pred_check_branch
    %15 = sbr.rel (0) target = $region13
  $region12: #{ibp_backbone_forward.23} parent=0 // pred_region
    _
  $region13: #{ibp_backbone_forward.23} parent=0 // pred_fallthru
    _
  // Predicated region
  $region14: #{ibp_backbone_forward.23} parent=0 // pred_check
    _
  $region15: #{ibp_backbone_forward.23} parent=0 // pred_check_branch
    %17 = sbr.rel (0) target = $region17
  $region16: #{ibp_backbone_forward.23} parent=0 // pred_region
    _
  $region17: #{ibp_backbone_forward.23} parent=0 // pred_fallthru
    _
  // Predicated region
  $region18: #{ibp_backbone_forward.23} parent=0 // pred_check
    _
  $region19: #{ibp_backbone_forward.23} parent=0 // pred_check_branch
    %19 = sbr.rel (0) target = $region21
  $region20: #{ibp_backbone_forward.23} parent=0 // pred_region
    _
  $region21: #{ibp_backbone_forward.23} parent=0 // pred_fallthru
    _
  %v21 = vld [vmem:[%s0] sm:$0xf]
  %v22 = vld [vmem:[%s0 + $0x4] sm:$0xf]
  %v23 = vld [vmem:[%s0 + $0x8] sm:$0xf]
  %v24 = vld [vmem:[%s0 + $0xc] sm:$0xf]
  %v25 = vld [vmem:[%s1] sm:$0xf]
  %v30 = vunpack.c.l.b16 %v21
  %v31 = vunpack.c.l.b16 %v22
  %v32 = vunpack.c.l.b16 %v23
  %v33 = vunpack.c.l.b16 %v24
  %v34 = vpack.c.b16 %v31, %v30
  %v35 = vpack.c.b16 %v33, %v32
  %vm36 = vcmask 64512
  %v38 = vsel %vm36, %v34, 0
  %v41 = vsel %vm36, %v35, 0
  %vm43 = vcmask 1043456
  %v45 = vsel %vm43, %v25, 0
  %47 = vmatprep.subr.bf16.mxu0 0
  %48 = vmatpush1.bf16.msra.mxu0 %v45
  %49 = vmatprep.subr.bf16.mxu0 0
  %50 = vmatpush1.bf16.msra.mxu0 0
  %51 = vmatprep.subr.bf16.mxu0 0
  %52 = vmatpush1.bf16.msra.mxu0 0
  %53 = vmatprep.subr.bf16.mxu0 0
  %54 = vmatpush1.bf16.msra.mxu0 0
  %55 = vmatprep.subr.bf16.mxu0 0
  %56 = vmatpush1.bf16.msra.mxu0 0
  %57 = vmatprep.subr.bf16.mxu0 0
  %58 = vmatpush1.bf16.msra.mxu0 0
  %59 = vmatprep.subr.bf16.mxu0 0
  %60 = vmatpush1.bf16.msra.mxu0 0
  %61 = vmatprep.subr.bf16.mxu0 0
  %62 = vmatpush1.bf16.msra.mxu0 0
  %63 = vmatprep.subr.bf16.mxu0 0
  %64 = vmatpush1.bf16.msra.mxu0 0
  %65 = vmatprep.subr.bf16.mxu0 0
  %66 = vmatpush1.bf16.msra.mxu0 0
  %67 = vmatprep.subr.bf16.mxu0 0
  %68 = vmatpush1.bf16.msra.mxu0 0
  %69 = vmatprep.subr.bf16.mxu0 0
  %70 = vmatpush1.bf16.msra.mxu0 0
  %71 = vmatprep.subr.bf16.mxu0 0
  %72 = vmatpush1.bf16.msra.mxu0 0
  %73 = vmatprep.subr.bf16.mxu0 0
  %74 = vmatpush1.bf16.msra.mxu0 0
  %75 = vmatprep.subr.bf16.mxu0 0
  %76 = vmatpush1.bf16.msra.mxu0 0
  %77 = vmatprep.subr.bf16.mxu0 0
  %78 = vmatpush1.bf16.msra.mxu0 0
  %79 = vmatprep.mubr.bf16.mxu0 0
  %80 = vmatmul.mubr.bf16.gmra.mrb[0].mxu0 %v38
  %v81 = vpop.f32.mrb[0].mxu0
  %v82 = vadd.f32 0.0, %v81
  %v83 = vpop.f32.mrb[0].mxu0
  %v84 = vpop.f32.mrb[0].mxu0
  %v85 = vadd.f32 0.0, %v84
  %v86 = vpop.f32.mrb[0].mxu0
  %87 = vmatprep.mubr.bf16.mxu0 0
  %88 = vmatmul.mubr.bf16.gmra.mrb[0].mxu0 %v41
  %v89 = vpop.f32.mrb[0].mxu0
  %v90 = vadd.f32 0.0, %v89
  %v91 = vpop.f32.mrb[0].mxu0
  %v92 = vpop.f32.mrb[0].mxu0
  %v93 = vadd.f32 0.0, %v92
  %v94 = vpop.f32.mrb[0].mxu0
  %95 = vdwg.mxu0
  %v96 = vld [vmem:[%s2] sm:$0x1]
  %v98 = vlaneseq
  %v99 = vshrl.u32 %v98, 7
  %v100 = vsub.s32 0, %v99
  %v101 = vrot.slane %v96, %v100
  %v103 = vmul.f32 %v82, %v101
  %v104 = vmul.f32 %v85, %v101
  %v105 = vmul.f32 %v90, %v101
  %v106 = vmul.f32 %v93, %v101
  %v107 = vld [vmem:[%s3] sm:$0x1]
  %v109 = vlaneseq
  %v110 = vshrl.u32 %v109, 7
  %v111 = vsub.s32 0, %v110
  %v112 = vrot.slane %v107, %v111
  %v114 = vadd.f32 %v103, %v112
  %v115 = vadd.f32 %v104, %v112
  %v116 = vadd.f32 %v105, %v112
  %v117 = vadd.f32 %v106, %v112
  %v118 = vld [vmem:[%s4] sm:$0xf]
  %v119 = vld [vmem:[%s4 + $0x4] sm:$0xf]
  %v120 = vld [vmem:[%s4 + $0x8] sm:$0xf]
  %v121 = vld [vmem:[%s4 + $0xc] sm:$0xf]
  %v122 = vunpack.c.l.bf16 %v118
  %v123 = vunpack.c.l.bf16 %v119
  %v124 = vunpack.c.l.bf16 %v120
  %v125 = vunpack.c.l.bf16 %v121
  %v126 = vadd.f32 %v114, %v122
  %v127 = vadd.f32 %v115, %v123
  %v128 = vadd.f32 %v116, %v124
  %v129 = vadd.f32 %v117, %v125
  %v130 = vmax.f32 %v126, 0.0
  %v131 = vmax.f32 %v127, 0.0
  %v132 = vmax.f32 %v128, 0.0
  %v133 = vmax.f32 %v129, 0.0
  %v134 = vpack.c.bf16 %v131, %v130
  %v135 = vpack.c.bf16 %v133, %v132
  %v138 = vunpack.c.l.b16 %v134
  %v139 = vunpack.c.h.b16 %v134
  %v140 = vunpack.c.l.b16 %v135
  %v141 = vunpack.c.h.b16 %v135
  %v142 = vpack.c.b16 %v138, %v138
  %v143 = vpack.c.b16 %v139, %v139
  %v144 = vpack.c.b16 %v140, %v140
  %v145 = vpack.c.b16 %v141, %v141
  %vm150 = vcmask 125952
  %151 = vst.msk [vmem:[%s5] sm:$0xf] %vm150, %v142
  %152 = vst.msk [vmem:[%s5 + $0x4] sm:$0xf] %vm150, %v143
  %153 = vst.msk [vmem:[%s5 + $0x8] sm:$0xf] %vm150, %v144
  %154 = vst.msk [vmem:[%s5 + $0xc] sm:$0xf] %vm150, %v145
  // Predicated region
  $region22: #{ibp_backbone_forward.23} parent=0 // pred_check
    _
  $region23: #{ibp_backbone_forward.23} parent=0 // pred_check_branch
    %156 = sbr.rel (0) target = $region25
  $region24: #{ibp_backbone_forward.23} parent=0 // pred_region
    _
  $region25: #{ibp_backbone_forward.23} parent=0 // pred_fallthru
    _
  // Predicated region
  $region26: #{ibp_backbone_forward.23} parent=0 // pred_check
    _
  $region27: #{ibp_backbone_forward.23} parent=0 // pred_check_branch
    %158 = sbr.rel (0) target = $region29
  $region28: #{ibp_backbone_forward.23} parent=0 // pred_region
    _
  $region29: #{ibp_backbone_forward.23} parent=0 // pred_fallthru
    _

// kernel: ibp_backbone_forward.24
$region0: #{ibp_backbone_forward.24}
  #allocation0 [shape = 'u32[]', space=smem, size = 0x4, offset = 0x4, fixed_abs, tag = 'smem constant byte address 0x4 - core index']
  #allocation1 [shape = 'u32[144,128]{1,0:T(1,128)}', space=vmem, size = 0x12000, scoped, tag = 'internal scratch']
  %s0 = inlined_call_operand.vmem [shape: bf16[32,144], index: 0, kind: input, shape index: {}]
  %s1 = inlined_call_operand.vmem [shape: bf16[144,16], index: 1, kind: input, shape index: {}]
  %s2 = inlined_call_operand.vmem [shape: f32[1,16], index: 2, kind: input, shape index: {}]
  %s3 = inlined_call_operand.vmem [shape: f32[1,16], index: 3, kind: input, shape index: {}]
  %s4 = inlined_call_operand.vmem [shape: bf16[32,16], index: 4, kind: output, shape index: {}]
  %s5 = sld [smem:[#allocation0]]
  $region26: #{ibp_backbone_forward.24} parent=0
    _
  %s7 = ssub.s32 1, %s5
  %s8 = scalar_select 0, %s7, %s5
  // Predicated region
  $region2: #{ibp_backbone_forward.24} parent=0 // pred_check
    _
  $region3: #{ibp_backbone_forward.24} parent=0 // pred_check_branch
    %10 = sbr.rel (0) target = $region5
  $region4: #{ibp_backbone_forward.24} parent=0 // pred_region
    _
  $region5: #{ibp_backbone_forward.24} parent=0 // pred_fallthru
    _
  // Predicated region
  $region6: #{ibp_backbone_forward.24} parent=0 // pred_check
    _
  $region7: #{ibp_backbone_forward.24} parent=0 // pred_check_branch
    %12 = sbr.rel (0) target = $region9
  $region8: #{ibp_backbone_forward.24} parent=0 // pred_region
    _
  $region9: #{ibp_backbone_forward.24} parent=0 // pred_fallthru
    _
  // Predicated region
  $region10: #{ibp_backbone_forward.24} parent=0 // pred_check
    _
  $region11: #{ibp_backbone_forward.24} parent=0 // pred_check_branch
    %14 = sbr.rel (0) target = $region13
  $region12: #{ibp_backbone_forward.24} parent=0 // pred_region
    _
  $region13: #{ibp_backbone_forward.24} parent=0 // pred_fallthru
    _
  // Predicated region
  $region14: #{ibp_backbone_forward.24} parent=0 // pred_check
    _
  $region15: #{ibp_backbone_forward.24} parent=0 // pred_check_branch
    %16 = sbr.rel (0) target = $region17
  $region16: #{ibp_backbone_forward.24} parent=0 // pred_region
    _
  $region17: #{ibp_backbone_forward.24} parent=0 // pred_fallthru
    _
  %v18 = vld [vmem:[%s0] sm:$0xff]
  %v19 = vld [vmem:[%s0 + $0x8] sm:$0xff]
  %v20 = vld [vmem:[%s0 + $0x10] sm:$0xff]
  %v21 = vld [vmem:[%s0 + $0x18] sm:$0xff]
  %v22 = vld [vmem:[%s1] sm:$0xf]
  %v23 = vld [vmem:[%s1 + $0x4] sm:$0xf]
  %v24 = vld [vmem:[%s1 + $0x8] sm:$0xf]
  %v25 = vld [vmem:[%s1 + $0xc] sm:$0xf]
  %v26 = vld [vmem:[%s1 + $0x10] sm:$0xf]
  %v27 = vld [vmem:[%s1 + $0x14] sm:$0xf]
  %v28 = vld [vmem:[%s1 + $0x18] sm:$0xf]
  %v29 = vld [vmem:[%s1 + $0x1c] sm:$0xf]
  %v30 = vld [vmem:[%s1 + $0x20] sm:$0xf]
  %v31 = vld [vmem:[%s1 + $0x24] sm:$0xf]
  %v32 = vld [vmem:[%s1 + $0x28] sm:$0xf]
  %v33 = vld [vmem:[%s1 + $0x2c] sm:$0xf]
  %v34 = vld [vmem:[%s1 + $0x30] sm:$0xf]
  %v35 = vld [vmem:[%s1 + $0x34] sm:$0xf]
  %v36 = vld [vmem:[%s1 + $0x38] sm:$0xf]
  %v37 = vld [vmem:[%s1 + $0x3c] sm:$0xf]
  %v38 = vld [vmem:[%s1 + $0x40] sm:$0xf]
  %v39 = vld [vmem:[%s1 + $0x44] sm:$0xf]
  %v44 = vunpack.c.l.b16 %v18
  %v45 = vunpack.c.h.b16 %v18
  %v46 = vunpack.c.l.b16 %v19
  %v47 = vunpack.c.h.b16 %v19
  %v48 = vunpack.c.l.b16 %v20
  %v49 = vunpack.c.h.b16 %v20
  %v50 = vunpack.c.l.b16 %v21
  %v51 = vunpack.c.h.b16 %v21
  %v52 = vpack.c.b16 %v46, %v44
  %v53 = vpack.c.b16 %v47, %v45
  %v54 = vpack.c.b16 %v50, %v48
  %v55 = vpack.c.b16 %v51, %v49
  %v76 = vunpack.c.l.b16 %v22
  %v77 = vunpack.c.l.b16 %v23
  %v78 = vunpack.c.l.b16 %v24
  %v79 = vunpack.c.l.b16 %v25
  %v80 = vunpack.c.l.b16 %v26
  %v81 = vunpack.c.l.b16 %v27
  %v82 = vunpack.c.l.b16 %v28
  %v83 = vunpack.c.l.b16 %v29
  %v84 = vunpack.c.l.b16 %v30
  %v85 = vunpack.c.l.b16 %v31
  %v86 = vunpack.c.l.b16 %v32
  %v87 = vunpack.c.l.b16 %v33
  %v88 = vunpack.c.l.b16 %v34
  %v89 = vunpack.c.l.b16 %v35
  %v90 = vunpack.c.l.b16 %v36
  %v91 = vunpack.c.l.b16 %v37
  %v92 = vunpack.c.l.b16 %v38
  %v93 = vunpack.c.l.b16 %v39
  %v94 = vpack.c.b16 %v77, %v76
  %v95 = vpack.c.b16 %v79, %v78
  %v96 = vpack.c.b16 %v81, %v80
  %v97 = vpack.c.b16 %v83, %v82
  %v98 = vpack.c.b16 %v85, %v84
  %v99 = vpack.c.b16 %v87, %v86
  %v100 = vpack.c.b16 %v89, %v88
  %v101 = vpack.c.b16 %v91, %v90
  %v102 = vpack.c.b16 %v93, %v92
  %vm112 = vcmask 130048
  %v114 = vsel %vm112, %v53, 0
  %v117 = vsel %vm112, %v55, 0
  %119 = vmatprep.subr.bf16.mxu0 0
  %120 = vmatpush1.bf16.msra.mxu0 %v94
  %121 = vmatprep.subr.bf16.mxu0 0
  %122 = vmatpush1.bf16.msra.mxu0 %v95
  %123 = vmatprep.subr.bf16.mxu0 0
  %124 = vmatpush1.bf16.msra.mxu0 %v96
  %125 = vmatprep.subr.bf16.mxu0 0
  %126 = vmatpush1.bf16.msra.mxu0 %v97
  %127 = vmatprep.subr.bf16.mxu0 0
  %128 = vmatpush1.bf16.msra.mxu0 %v98
  %129 = vmatprep.subr.bf16.mxu0 0
  %130 = vmatpush1.bf16.msra.mxu0 %v99
  %131 = vmatprep.subr.bf16.mxu0 0
  %132 = vmatpush1.bf16.msra.mxu0 %v100
  %133 = vmatprep.subr.bf16.mxu0 0
  %134 = vmatpush1.bf16.msra.mxu0 %v101
  %135 = vmatprep.subr.bf16.mxu0 0
  %136 = vmatpush1.bf16.msra.mxu0 %v102
  %137 = vmatprep.subr.bf16.mxu0 0
  %138 = vmatpush1.bf16.msra.mxu0 0
  %139 = vmatprep.subr.bf16.mxu0 0
  %140 = vmatpush1.bf16.msra.mxu0 0
  %141 = vmatprep.subr.bf16.mxu0 0
  %142 = vmatpush1.bf16.msra.mxu0 0
  %143 = vmatprep.subr.bf16.mxu0 0
  %144 = vmatpush1.bf16.msra.mxu0 0
  %145 = vmatprep.subr.bf16.mxu0 0
  %146 = vmatpush1.bf16.msra.mxu0 0
  %147 = vmatprep.subr.bf16.mxu0 0
  %148 = vmatpush1.bf16.msra.mxu0 0
  %149 = vmatprep.subr.bf16.mxu0 0
  %150 = vmatpush1.bf16.msra.mxu0 0
  %151 = vmatprep.mubr.bf16.mxu0 %v114
  %152 = vmatmul.mubr.bf16.gmra.mrb[0].mxu0 %v52
  %v153 = vpop.f32.mrb[0].mxu0
  %v154 = vadd.f32 0.0, %v153
  %v155 = vpop.f32.mrb[0].mxu0
  %v156 = vpop.f32.mrb[0].mxu0
  %v157 = vadd.f32 0.0, %v156
  %v158 = vpop.f32.mrb[0].mxu0
  %159 = vmatprep.mubr.bf16.mxu0 %v117
  %160 = vmatmul.mubr.bf16.gmra.mrb[0].mxu0 %v54
  %v161 = vpop.f32.mrb[0].mxu0
  %v162 = vadd.f32 0.0, %v161
  %v163 = vpop.f32.mrb[0].mxu0
  %v164 = vpop.f32.mrb[0].mxu0
  %v165 = vadd.f32 0.0, %v164
  %v166 = vpop.f32.mrb[0].mxu0
  %167 = vdwg.mxu0
  %v168 = vld [vmem:[%s2] sm:$0x1]
  %v170 = vlaneseq
  %v171 = vshrl.u32 %v170, 7
  %v172 = vsub.s32 0, %v171
  %v173 = vrot.slane %v168, %v172
  %v175 = vmul.f32 %v154, %v173
  %v176 = vmul.f32 %v157, %v173
  %v177 = vmul.f32 %v162, %v173
  %v178 = vmul.f32 %v165, %v173
  %v179 = vld [vmem:[%s3] sm:$0x1]
  %v181 = vlaneseq
  %v182 = vshrl.u32 %v181, 7
  %v183 = vsub.s32 0, %v182
  %v184 = vrot.slane %v179, %v183
  %v186 = vadd.f32 %v175, %v184
  %v187 = vadd.f32 %v176, %v184
  %v188 = vadd.f32 %v177, %v184
  %v189 = vadd.f32 %v178, %v184
  %v190 = vmax.f32 %v186, 0.0
  %v191 = vmax.f32 %v187, 0.0
  %v192 = vmax.f32 %v188, 0.0
  %v193 = vmax.f32 %v189, 0.0
  %v194 = vpack.c.bf16 %v191, %v190
  %v195 = vpack.c.bf16 %v193, %v192
  %v198 = vunpack.c.l.b16 %v194
  %v199 = vunpack.c.h.b16 %v194
  %v200 = vunpack.c.l.b16 %v195
  %v201 = vunpack.c.h.b16 %v195
  %v202 = vpack.c.b16 %v198, %v198
  %v203 = vpack.c.b16 %v199, %v199
  %v204 = vpack.c.b16 %v200, %v200
  %v205 = vpack.c.b16 %v201, %v201
  %vm210 = vcmask 125952
  %211 = vst.msk [vmem:[%s4] sm:$0xf] %vm210, %v202
  %212 = vst.msk [vmem:[%s4 + $0x4] sm:$0xf] %vm210, %v203
  %213 = vst.msk [vmem:[%s4 + $0x8] sm:$0xf] %vm210, %v204
  %214 = vst.msk [vmem:[%s4 + $0xc] sm:$0xf] %vm210, %v205
  // Predicated region
  $region18: #{ibp_backbone_forward.24} parent=0 // pred_check
    _
  $region19: #{ibp_backbone_forward.24} parent=0 // pred_check_branch
    %216 = sbr.rel (0) target = $region21
  $region20: #{ibp_backbone_forward.24} parent=0 // pred_region
    _
  $region21: #{ibp_backbone_forward.24} parent=0 // pred_fallthru
    _
  // Predicated region
  $region22: #{ibp_backbone_forward.24} parent=0 // pred_check
    _
  $region23: #{ibp_backbone_forward.24} parent=0 // pred_check_branch
    %218 = sbr.rel (0) target = $region25
  $region24: #{ibp_backbone_forward.24} parent=0 // pred_region
    _
  $region25: #{ibp_backbone_forward.24} parent=0 // pred_fallthru
    _

</llo_original>
